<compile_context>
chip_gen: v6e
topology: v6e:2x2x1
jax: 0.10.0
libtpu: 0.0.40
codegen_flags: <defaults>
</compile_context>

<pallas_src>
import functools
import math

import jax
import jax.numpy as jnp
from jax.experimental import pallas as pl
from jax.experimental.pallas import tpu as pltpu

LN_EPS = 1e-5
LEAKY_SLOPE = 0.01

N_ENC = 9
ENC_IN = 60
# column offsets of the nine 60-wide encoder slices in the 556-wide input
# (t, q0001, q0002, q0003, u, v, ozone, CH4, N2O — PyTorch forward order)
ENC_IN_OFFS = (0, 60, 120, 180, 240, 300, 376, 436, 496)
CONST_OFF, CONST_W = 360, 16


def _round_up8(n):
    return ((n + 7) // 8) * 8


# ----------------------------------------------------------------------------
# In-kernel helpers (f32 math; matmul operand dtype follows the weight dtype).
# ----------------------------------------------------------------------------
def _layernorm(h, gamma, beta):
    # One-pass stats: the two reductions are independent (less XLU serialization).
    inv_n = 1.0 / h.shape[-1]
    mean = jnp.sum(h, axis=-1, keepdims=True) * inv_n
    mean_sq = jnp.sum(h * h, axis=-1, keepdims=True) * inv_n
    var = mean_sq - mean * mean
    return (h - mean) * jax.lax.rsqrt(var + LN_EPS) * gamma + beta


def _leaky_relu(h):
    return jnp.maximum(h, LEAKY_SLOPE * h)


def _dot(a, b):
    # Operand dtype = weight dtype (bf16 in fast mode); f32 MXU accumulation.
    return jnp.dot(a.astype(b.dtype), b, preferred_element_type=jnp.float32)


# ----------------------------------------------------------------------------
# The single fused kernel: 9 encoders + concat-free head-W1 accumulation + head.
# ----------------------------------------------------------------------------
def make_fused_kernel(n_hidden):
    assert n_hidden >= 1, "head must have at least one hidden layer"

    def kernel(xenc_ref, xc_ref, ew1_ref, ebgb1_ref, ew2_ref, ebgb2_ref,
               hw1s_ref, hw1c_ref, *rest):
        out_ref = rest[-1]
        head_rest = rest[:-1]   # hbgb1, (w_i, bgb_i) for layers 2..n, wf, bf

        # --- head layer-1 pre-activation, accumulated slot by slot ----------
        acc = _dot(xc_ref[...], hw1c_ref[...])               # (bm, hs0)

        # --- 9 encoders, Python-unrolled, feeding straight into `acc` -------
        for e in range(N_ENC):
            xi = xenc_ref[e]                                  # (bm, 60), lane-aligned

            bgb1 = ebgb1_ref[e]                               # (3, h1) f32
            h = _dot(xi, ew1_ref[e]) + bgb1[0:1, :]
            h = _leaky_relu(_layernorm(h, bgb1[1:2, :], bgb1[2:3, :]))

            bgb2 = ebgb2_ref[e]                               # (3, h2) f32
            h = _dot(h, ew2_ref[e]) + bgb2[0:1, :]
            h = _leaky_relu(_layernorm(h, bgb2[1:2, :], bgb2[2:3, :]))

            acc = acc + _dot(h, hw1s_ref[e])                  # rows of head-W1

        # --- head MLP --------------------------------------------------------
        hbgb1 = head_rest[0][...]                             # (3, hs0) f32
        h = acc + hbgb1[0:1, :]
        h = _leaky_relu(_layernorm(h, hbgb1[1:2, :], hbgb1[2:3, :]))

        idx = 1
        for _ in range(n_hidden - 1):
            w_ref, bgb_ref = head_rest[idx], head_rest[idx + 1]
            idx += 2
            bgb = bgb_ref[...]
            h = _dot(h, w_ref[...]) + bgb[0:1, :]
            h = _leaky_relu(_layernorm(h, bgb[1:2, :], bgb[2:3, :]))

        wf_ref, bf_ref = head_rest[idx], head_rest[idx + 1]
        out_ref[...] = _dot(h, wf_ref[...]) + bf_ref[...]

    return kernel


def fused_forward(x, packed_params, *, hidden_sizes, output_size, block_m=512):
    """x: (B, 556) f32 -> (B, output_size) f32, one fused pallas_call."""
    B = x.shape[0]

    # Lane-aligned inputs: (9, B, 60) encoder slices + (B, 16) const block.
    x_enc = jnp.stack([x[:, o:o + ENC_IN] for o in ENC_IN_OFFS], axis=0)
    x_const = x[:, CONST_OFF:CONST_OFF + CONST_W]

    # Batch tile: large (amortize per-step + MXU fill/drain), but keep >= 2 grid
    # steps when B allows so both v7x TensorCores get work.
    bm = min(block_m, _round_up8(B))
    if B > 8 and pl.cdiv(B, bm) < 2:
        bm = max(8, _round_up8(pl.cdiv(B, 2)))
    grid = (pl.cdiv(B, bm),)     # ragged last block handled/masked by Pallas

    kernel = make_fused_kernel(len(hidden_sizes))

    def resident_spec(arr):
        # Full-array block, constant block index -> stays VMEM-resident
        # across batch-grid steps (no re-DMA).
        return pl.BlockSpec(arr.shape, lambda i, _n=arr.ndim: (0,) * _n)

    in_specs = [
        pl.BlockSpec((N_ENC, bm, ENC_IN), lambda i: (0, i, 0)),
        pl.BlockSpec((bm, CONST_W), lambda i: (i, 0)),
    ] + [resident_spec(p) for p in packed_params]
    out_specs = pl.BlockSpec((bm, output_size), lambda i: (i, 0))

    return pl.pallas_call(
        kernel,
        out_shape=jax.ShapeDtypeStruct((B, output_size), jnp.float32),
        grid=grid,
        in_specs=in_specs,
        out_specs=out_specs,
        compiler_params=pltpu.CompilerParams(
            dimension_semantics=("parallel",)),
    )(x_enc, x_const, *packed_params)


@functools.partial(
    jax.jit, static_argnames=("hidden_sizes", "output_size", "block_m"))
def leap_model_forward(x, packed_params, *, hidden_sizes=(256, 256),
                       output_size=368, block_m=512):
    return fused_forward(x, packed_params, hidden_sizes=hidden_sizes,
                         output_size=output_size, block_m=block_m)


# ----------------------------------------------------------------------------
# Parameter construction (deterministic, PyTorch-style uniform fan-in init)
# plus packing into the kernel layout.
# ----------------------------------------------------------------------------
def _linear_init(key, fan_in, fan_out):
    kw, kb = jax.random.split(key)
    bound = 1.0 / math.sqrt(fan_in)
    w = jax.random.uniform(kw, (fan_in, fan_out), jnp.float32, -bound, bound)
    b = jax.random.uniform(kb, (fan_out,), jnp.float32, -bound, bound)
    return w, b


def build_params(key, *, enc_h=(120, 120), hidden_sizes=(256, 256),
                 output_size=368):
    """Canonical (unpacked) parameters, mirroring the PyTorch module."""
    h1, h2 = enc_h
    keys = jax.random.split(key, N_ENC * 2 + len(hidden_sizes) + 1)

    enc = []
    for e in range(N_ENC):
        w1, b1 = _linear_init(keys[2 * e], ENC_IN, h1)
        w2, b2 = _linear_init(keys[2 * e + 1], h1, h2)
        enc.append(((w1, b1, jnp.ones(h1, jnp.float32), jnp.zeros(h1, jnp.float32)),
                    (w2, b2, jnp.ones(h2, jnp.float32), jnp.zeros(h2, jnp.float32))))

    head = []
    prev = CONST_W + h2 * N_ENC
    kidx = 2 * N_ENC
    for hs in hidden_sizes:
        w, b = _linear_init(keys[kidx], prev, hs)
        kidx += 1
        head.append((w, b, jnp.ones(hs, jnp.float32), jnp.zeros(hs, jnp.float32)))
        prev = hs
    wf, bf = _linear_init(keys[kidx], prev, output_size)
    return enc, head, (wf, bf)


def pack_params(enc, head, final, matmul_dtype=jnp.bfloat16):
    """Stack encoder weights on a leading axis, pack (b, gamma, beta) into one
    (3, h) f32 array per layer, pre-split head-W1 into per-encoder slots +
    const16 rows, and cast all matmul weights to `matmul_dtype`."""
    md = matmul_dtype
    h2 = enc[0][1][0].shape[1]

    ew1 = jnp.stack([l[0][0] for l in enc]).astype(md)                 # (9, 60, h1)
    ebgb1 = jnp.stack([jnp.stack(l[0][1:4]) for l in enc])             # (9, 3, h1) f32
    ew2 = jnp.stack([l[1][0] for l in enc]).astype(md)                 # (9, h1, h2)
    ebgb2 = jnp.stack([jnp.stack(l[1][1:4]) for l in enc])             # (9, 3, h2) f32

    w1, b1, g1, be1 = head[0]
    slot_rows = []
    for e in range(N_ENC):
        fo = e * h2 + (CONST_W if e >= 6 else 0)   # const16 sits after encoder 5
        slot_rows.append(w1[fo:fo + h2, :])
    hw1_slots = jnp.stack(slot_rows).astype(md)                        # (9, h2, hs0)
    hw1_const = w1[6 * h2:6 * h2 + CONST_W, :].astype(md)              # (16, hs0)

    packed = [ew1, ebgb1, ew2, ebgb2, hw1_slots, hw1_const,
              jnp.stack([b1, g1, be1])]
    for (w, b, g, be) in head[1:]:
        packed += [w.astype(md), jnp.stack([b, g, be])]
    wf, bf = final
    packed += [wf.astype(md), bf.reshape(1, -1)]
    return tuple(packed)


# ----------------------------------------------------------------------------
# Pure-JAX f32 reference for verification (mirrors the PyTorch module).
# ----------------------------------------------------------------------------
def leap_model_reference(x, enc, head, final):
    def ln(h, g, b):
        mean = jnp.mean(h, axis=-1, keepdims=True)
        var = jnp.mean((h - mean) ** 2, axis=-1, keepdims=True)
        return (h - mean) * jax.lax.rsqrt(var + LN_EPS) * g + b

    def lrelu(h):
        return jnp.where(h >= 0, h, LEAKY_SLOPE * h)

    def mlp(layers, xi):
        h = xi
        for (w, b, g, be) in layers:
            h = lrelu(ln(h @ w + b, g, be))
        return h

    outs = [mlp(enc[e], x[:, o:o + ENC_IN]) for e, o in enumerate(ENC_IN_OFFS)]
    feat = jnp.concatenate(
        outs[:6] + [x[:, CONST_OFF:CONST_OFF + CONST_W]] + outs[6:], axis=1)

    h = feat
    for (w, b, g, be) in head:
        h = lrelu(ln(h @ w + b, g, be))
    wf, bf = final
    return h @ wf + bf


if __name__ == "__main__":
    B = 12                      # not a multiple of the tile -> exercises the ragged last block
    ENC_H = (120, 120)
    HIDDEN_SIZES = (256, 256)
    OUTPUT_SIZE = 368

    key = jax.random.PRNGKey(0)
    kx, kp = jax.random.split(key)
    x = jax.random.normal(kx, (B, 556), jnp.float32)

    enc, head, final = build_params(
        kp, enc_h=ENC_H, hidden_sizes=HIDDEN_SIZES, output_size=OUTPUT_SIZE)
    ref = leap_model_reference(x, enc, head, final)

    # --- f32 validation mode (tight tolerance vs the f32 reference) ---------
    packed_f32 = pack_params(enc, head, final, matmul_dtype=jnp.float32)
    out_f32 = jax.block_until_ready(
        leap_model_forward(x, packed_f32, hidden_sizes=HIDDEN_SIZES,
                           output_size=OUTPUT_SIZE))
    assert out_f32.shape == (B, OUTPUT_SIZE), out_f32.shape
    err_f32 = float(jnp.max(jnp.abs(out_f32 - ref)))
    assert jnp.allclose(out_f32, ref, atol=1e-4, rtol=1e-4), err_f32

    # --- bf16 fast mode (MXU-native operands, f32 accumulation) -------------
    packed_bf16 = pack_params(enc, head, final, matmul_dtype=jnp.bfloat16)
    out_bf16 = jax.block_until_ready(
        leap_model_forward(x, packed_bf16, hidden_sizes=HIDDEN_SIZES,
                           output_size=OUTPUT_SIZE))
    assert out_bf16.shape == (B, OUTPUT_SIZE), out_bf16.shape
    err_bf16 = float(jnp.max(jnp.abs(out_bf16 - ref)))
    assert jnp.allclose(out_bf16, ref, atol=5e-2, rtol=5e-2), err_bf16

    print("KERNEL_OK")
</pallas_src>

<mosaic_0001>
module attributes {stable_mosaic.version = 11 : i64} {
  func.func @kernel(%arg0: i32, %arg1: memref<9x8x60xf32, #tpu.memory_space<vmem>>, %arg2: memref<8x16xf32, #tpu.memory_space<vmem>>, %arg3: memref<9x60x120xf32, #tpu.memory_space<vmem>>, %arg4: memref<9x3x120xf32, #tpu.memory_space<vmem>>, %arg5: memref<9x120x120xf32, #tpu.memory_space<vmem>>, %arg6: memref<9x3x120xf32, #tpu.memory_space<vmem>>, %arg7: memref<9x120x256xf32, #tpu.memory_space<vmem>>, %arg8: memref<16x256xf32, #tpu.memory_space<vmem>>, %arg9: memref<3x256xf32, #tpu.memory_space<vmem>>, %arg10: memref<256x256xf32, #tpu.memory_space<vmem>>, %arg11: memref<3x256xf32, #tpu.memory_space<vmem>>, %arg12: memref<256x368xf32, #tpu.memory_space<vmem>>, %arg13: memref<1x368xf32, #tpu.memory_space<vmem>>, %arg14: memref<8x368xf32, #tpu.memory_space<vmem>>) attributes {dimension_semantics = [#tpu.dimension_semantics<parallel>], iteration_bounds = array<i64: 2>, scalar_prefetch = 0 : i64, scratch_operands = 0 : i64, tpu.core_type = #tpu.core_type<tc>, window_params = [{transform_indices = @transform_0, window_bounds = array<i64: 9, 8, 60>}, {transform_indices = @transform_1, window_bounds = array<i64: 8, 16>}, {pipeline_mode = #tpu.pipeline_mode<synchronous>, transform_indices = @transform_2, window_bounds = array<i64: 9, 60, 120>}, {pipeline_mode = #tpu.pipeline_mode<synchronous>, transform_indices = @transform_3, window_bounds = array<i64: 9, 3, 120>}, {pipeline_mode = #tpu.pipeline_mode<synchronous>, transform_indices = @transform_4, window_bounds = array<i64: 9, 120, 120>}, {pipeline_mode = #tpu.pipeline_mode<synchronous>, transform_indices = @transform_5, window_bounds = array<i64: 9, 3, 120>}, {pipeline_mode = #tpu.pipeline_mode<synchronous>, transform_indices = @transform_6, window_bounds = array<i64: 9, 120, 256>}, {pipeline_mode = #tpu.pipeline_mode<synchronous>, transform_indices = @transform_7, window_bounds = array<i64: 16, 256>}, {pipeline_mode = #tpu.pipeline_mode<synchronous>, transform_indices = @transform_8, window_bounds = array<i64: 3, 256>}, {pipeline_mode = #tpu.pipeline_mode<synchronous>, transform_indices = @transform_9, window_bounds = array<i64: 256, 256>}, {pipeline_mode = #tpu.pipeline_mode<synchronous>, transform_indices = @transform_10, window_bounds = array<i64: 3, 256>}, {pipeline_mode = #tpu.pipeline_mode<synchronous>, transform_indices = @transform_11, window_bounds = array<i64: 256, 368>}, {pipeline_mode = #tpu.pipeline_mode<synchronous>, transform_indices = @transform_12, window_bounds = array<i64: 1, 368>}, {transform_indices = @transform_13, window_bounds = array<i64: 8, 368>}]} {
    %c0 = arith.constant 0 : index
    %c0_0 = arith.constant 0 : index
    %0 = vector.load %arg2[%c0, %c0_0] : memref<8x16xf32, #tpu.memory_space<vmem>>, vector<8x16xf32>
    %c0_1 = arith.constant 0 : index
    %c0_2 = arith.constant 0 : index
    %1 = vector.load %arg8[%c0_1, %c0_2] : memref<16x256xf32, #tpu.memory_space<vmem>>, vector<16x256xf32>
    %cst = arith.constant dense<0.000000e+00> : vector<8x256xf32>
    %2 = tpu.matmul %0, %1, %cst {dimension_numbers = #tpu.dot_dimension_numbers<[1], [0], [0], [1], [0, 0, 1, 1], [], []>} : vector<8x16xf32>, vector<16x256xf32>, vector<8x256xf32> -> vector<8x256xf32>
    %c0_3 = arith.constant 0 : index
    %c0_4 = arith.constant 0 : index
    %c0_5 = arith.constant 0 : index
    %3 = vector.load %arg1[%c0_3, %c0_4, %c0_5] : memref<9x8x60xf32, #tpu.memory_space<vmem>>, vector<1x8x60xf32>
    %4 = vector.shape_cast %3 : vector<1x8x60xf32> to vector<8x60xf32>
    %c0_6 = arith.constant 0 : index
    %c0_7 = arith.constant 0 : index
    %c0_8 = arith.constant 0 : index
    %5 = vector.load %arg4[%c0_6, %c0_7, %c0_8] : memref<9x3x120xf32, #tpu.memory_space<vmem>>, vector<1x3x120xf32>
    %6 = vector.shape_cast %5 : vector<1x3x120xf32> to vector<3x120xf32>
    %c0_9 = arith.constant 0 : index
    %c0_10 = arith.constant 0 : index
    %c0_11 = arith.constant 0 : index
    %7 = vector.load %arg3[%c0_9, %c0_10, %c0_11] : memref<9x60x120xf32, #tpu.memory_space<vmem>>, vector<1x60x120xf32>
    %8 = vector.shape_cast %7 : vector<1x60x120xf32> to vector<60x120xf32>
    %cst_12 = arith.constant dense<0.000000e+00> : vector<8x120xf32>
    %9 = tpu.matmul %4, %8, %cst_12 {dimension_numbers = #tpu.dot_dimension_numbers<[1], [0], [0], [1], [0, 0, 1, 1], [], []>} : vector<8x60xf32>, vector<60x120xf32>, vector<8x120xf32> -> vector<8x120xf32>
    %10 = vector.extract_strided_slice %6 {offsets = [0, 0], sizes = [1, 120], strides = [1, 1]} : vector<3x120xf32> to vector<1x120xf32>
    %11 = vector.broadcast %10 : vector<1x120xf32> to vector<8x120xf32>
    %12 = arith.addf %9, %11 : vector<8x120xf32>
    %13 = vector.extract_strided_slice %6 {offsets = [1, 0], sizes = [1, 120], strides = [1, 1]} : vector<3x120xf32> to vector<1x120xf32>
    %14 = vector.extract_strided_slice %6 {offsets = [2, 0], sizes = [1, 120], strides = [1, 1]} : vector<3x120xf32> to vector<1x120xf32>
    %cst_13 = arith.constant dense<0.000000e+00> : vector<8xf32>
    %15 = vector.multi_reduction <add>, %12, %cst_13 [1] : vector<8x120xf32> to vector<8xf32>
    %16 = vector.shape_cast %15 : vector<8xf32> to vector<8x1xf32>
    %cst_14 = arith.constant 0.00833333377 : f32
    %17 = vector.broadcast %cst_14 : f32 to vector<8x1xf32>
    %18 = arith.mulf %16, %17 : vector<8x1xf32>
    %19 = arith.mulf %12, %12 : vector<8x120xf32>
    %cst_15 = arith.constant dense<0.000000e+00> : vector<8xf32>
    %20 = vector.multi_reduction <add>, %19, %cst_15 [1] : vector<8x120xf32> to vector<8xf32>
    %21 = vector.shape_cast %20 : vector<8xf32> to vector<8x1xf32>
    %cst_16 = arith.constant 0.00833333377 : f32
    %22 = vector.broadcast %cst_16 : f32 to vector<8x1xf32>
    %23 = arith.mulf %21, %22 : vector<8x1xf32>
    %24 = arith.mulf %18, %18 : vector<8x1xf32>
    %25 = arith.subf %23, %24 : vector<8x1xf32>
    %26 = vector.broadcast %18 : vector<8x1xf32> to vector<8x120xf32>
    %27 = arith.subf %12, %26 : vector<8x120xf32>
    %cst_17 = arith.constant 9.99999974E-6 : f32
    %28 = vector.broadcast %cst_17 : f32 to vector<8x1xf32>
    %29 = arith.addf %25, %28 : vector<8x1xf32>
    %30 = math.rsqrt %29 : vector<8x1xf32>
    %31 = vector.broadcast %30 : vector<8x1xf32> to vector<8x120xf32>
    %32 = arith.mulf %27, %31 : vector<8x120xf32>
    %33 = vector.broadcast %13 : vector<1x120xf32> to vector<8x120xf32>
    %34 = arith.mulf %32, %33 : vector<8x120xf32>
    %35 = vector.broadcast %14 : vector<1x120xf32> to vector<8x120xf32>
    %36 = arith.addf %34, %35 : vector<8x120xf32>
    %cst_18 = arith.constant 0.00999999977 : f32
    %37 = vector.broadcast %cst_18 : f32 to vector<8x120xf32>
    %38 = arith.mulf %37, %36 : vector<8x120xf32>
    %39 = arith.maximumf %36, %38 : vector<8x120xf32>
    %c0_19 = arith.constant 0 : index
    %c0_20 = arith.constant 0 : index
    %c0_21 = arith.constant 0 : index
    %40 = vector.load %arg6[%c0_19, %c0_20, %c0_21] : memref<9x3x120xf32, #tpu.memory_space<vmem>>, vector<1x3x120xf32>
    %41 = vector.shape_cast %40 : vector<1x3x120xf32> to vector<3x120xf32>
    %c0_22 = arith.constant 0 : index
    %c0_23 = arith.constant 0 : index
    %c0_24 = arith.constant 0 : index
    %42 = vector.load %arg5[%c0_22, %c0_23, %c0_24] : memref<9x120x120xf32, #tpu.memory_space<vmem>>, vector<1x120x120xf32>
    %43 = vector.shape_cast %42 : vector<1x120x120xf32> to vector<120x120xf32>
    %cst_25 = arith.constant dense<0.000000e+00> : vector<8x120xf32>
    %44 = tpu.matmul %39, %43, %cst_25 {dimension_numbers = #tpu.dot_dimension_numbers<[1], [0], [0], [1], [0, 0, 1, 1], [], []>} : vector<8x120xf32>, vector<120x120xf32>, vector<8x120xf32> -> vector<8x120xf32>
    %45 = vector.extract_strided_slice %41 {offsets = [0, 0], sizes = [1, 120], strides = [1, 1]} : vector<3x120xf32> to vector<1x120xf32>
    %46 = vector.broadcast %45 : vector<1x120xf32> to vector<8x120xf32>
    %47 = arith.addf %44, %46 : vector<8x120xf32>
    %48 = vector.extract_strided_slice %41 {offsets = [1, 0], sizes = [1, 120], strides = [1, 1]} : vector<3x120xf32> to vector<1x120xf32>
    %49 = vector.extract_strided_slice %41 {offsets = [2, 0], sizes = [1, 120], strides = [1, 1]} : vector<3x120xf32> to vector<1x120xf32>
    %cst_26 = arith.constant dense<0.000000e+00> : vector<8xf32>
    %50 = vector.multi_reduction <add>, %47, %cst_26 [1] : vector<8x120xf32> to vector<8xf32>
    %51 = vector.shape_cast %50 : vector<8xf32> to vector<8x1xf32>
    %cst_27 = arith.constant 0.00833333377 : f32
    %52 = vector.broadcast %cst_27 : f32 to vector<8x1xf32>
    %53 = arith.mulf %51, %52 : vector<8x1xf32>
    %54 = arith.mulf %47, %47 : vector<8x120xf32>
    %cst_28 = arith.constant dense<0.000000e+00> : vector<8xf32>
    %55 = vector.multi_reduction <add>, %54, %cst_28 [1] : vector<8x120xf32> to vector<8xf32>
    %56 = vector.shape_cast %55 : vector<8xf32> to vector<8x1xf32>
    %cst_29 = arith.constant 0.00833333377 : f32
    %57 = vector.broadcast %cst_29 : f32 to vector<8x1xf32>
    %58 = arith.mulf %56, %57 : vector<8x1xf32>
    %59 = arith.mulf %53, %53 : vector<8x1xf32>
    %60 = arith.subf %58, %59 : vector<8x1xf32>
    %61 = vector.broadcast %53 : vector<8x1xf32> to vector<8x120xf32>
    %62 = arith.subf %47, %61 : vector<8x120xf32>
    %cst_30 = arith.constant 9.99999974E-6 : f32
    %63 = vector.broadcast %cst_30 : f32 to vector<8x1xf32>
    %64 = arith.addf %60, %63 : vector<8x1xf32>
    %65 = math.rsqrt %64 : vector<8x1xf32>
    %66 = vector.broadcast %65 : vector<8x1xf32> to vector<8x120xf32>
    %67 = arith.mulf %62, %66 : vector<8x120xf32>
    %68 = vector.broadcast %48 : vector<1x120xf32> to vector<8x120xf32>
    %69 = arith.mulf %67, %68 : vector<8x120xf32>
    %70 = vector.broadcast %49 : vector<1x120xf32> to vector<8x120xf32>
    %71 = arith.addf %69, %70 : vector<8x120xf32>
    %cst_31 = arith.constant 0.00999999977 : f32
    %72 = vector.broadcast %cst_31 : f32 to vector<8x120xf32>
    %73 = arith.mulf %72, %71 : vector<8x120xf32>
    %74 = arith.maximumf %71, %73 : vector<8x120xf32>
    %c0_32 = arith.constant 0 : index
    %c0_33 = arith.constant 0 : index
    %c0_34 = arith.constant 0 : index
    %75 = vector.load %arg7[%c0_32, %c0_33, %c0_34] : memref<9x120x256xf32, #tpu.memory_space<vmem>>, vector<1x120x256xf32>
    %76 = vector.shape_cast %75 : vector<1x120x256xf32> to vector<120x256xf32>
    %cst_35 = arith.constant dense<0.000000e+00> : vector<8x256xf32>
    %77 = tpu.matmul %74, %76, %cst_35 {dimension_numbers = #tpu.dot_dimension_numbers<[1], [0], [0], [1], [0, 0, 1, 1], [], []>} : vector<8x120xf32>, vector<120x256xf32>, vector<8x256xf32> -> vector<8x256xf32>
    %78 = arith.addf %2, %77 : vector<8x256xf32>
    %c1 = arith.constant 1 : index
    %c0_36 = arith.constant 0 : index
    %c0_37 = arith.constant 0 : index
    %79 = vector.load %arg1[%c1, %c0_36, %c0_37] : memref<9x8x60xf32, #tpu.memory_space<vmem>>, vector<1x8x60xf32>
    %80 = vector.shape_cast %79 : vector<1x8x60xf32> to vector<8x60xf32>
    %c1_38 = arith.constant 1 : index
    %c0_39 = arith.constant 0 : index
    %c0_40 = arith.constant 0 : index
    %81 = vector.load %arg4[%c1_38, %c0_39, %c0_40] : memref<9x3x120xf32, #tpu.memory_space<vmem>>, vector<1x3x120xf32>
    %82 = vector.shape_cast %81 : vector<1x3x120xf32> to vector<3x120xf32>
    %c1_41 = arith.constant 1 : index
    %c0_42 = arith.constant 0 : index
    %c0_43 = arith.constant 0 : index
    %83 = vector.load %arg3[%c1_41, %c0_42, %c0_43] : memref<9x60x120xf32, #tpu.memory_space<vmem>>, vector<1x60x120xf32>
    %84 = vector.shape_cast %83 : vector<1x60x120xf32> to vector<60x120xf32>
    %cst_44 = arith.constant dense<0.000000e+00> : vector<8x120xf32>
    %85 = tpu.matmul %80, %84, %cst_44 {dimension_numbers = #tpu.dot_dimension_numbers<[1], [0], [0], [1], [0, 0, 1, 1], [], []>} : vector<8x60xf32>, vector<60x120xf32>, vector<8x120xf32> -> vector<8x120xf32>
    %86 = vector.extract_strided_slice %82 {offsets = [0, 0], sizes = [1, 120], strides = [1, 1]} : vector<3x120xf32> to vector<1x120xf32>
    %87 = vector.broadcast %86 : vector<1x120xf32> to vector<8x120xf32>
    %88 = arith.addf %85, %87 : vector<8x120xf32>
    %89 = vector.extract_strided_slice %82 {offsets = [1, 0], sizes = [1, 120], strides = [1, 1]} : vector<3x120xf32> to vector<1x120xf32>
    %90 = vector.extract_strided_slice %82 {offsets = [2, 0], sizes = [1, 120], strides = [1, 1]} : vector<3x120xf32> to vector<1x120xf32>
    %cst_45 = arith.constant dense<0.000000e+00> : vector<8xf32>
    %91 = vector.multi_reduction <add>, %88, %cst_45 [1] : vector<8x120xf32> to vector<8xf32>
    %92 = vector.shape_cast %91 : vector<8xf32> to vector<8x1xf32>
    %cst_46 = arith.constant 0.00833333377 : f32
    %93 = vector.broadcast %cst_46 : f32 to vector<8x1xf32>
    %94 = arith.mulf %92, %93 : vector<8x1xf32>
    %95 = arith.mulf %88, %88 : vector<8x120xf32>
    %cst_47 = arith.constant dense<0.000000e+00> : vector<8xf32>
    %96 = vector.multi_reduction <add>, %95, %cst_47 [1] : vector<8x120xf32> to vector<8xf32>
    %97 = vector.shape_cast %96 : vector<8xf32> to vector<8x1xf32>
    %cst_48 = arith.constant 0.00833333377 : f32
    %98 = vector.broadcast %cst_48 : f32 to vector<8x1xf32>
    %99 = arith.mulf %97, %98 : vector<8x1xf32>
    %100 = arith.mulf %94, %94 : vector<8x1xf32>
    %101 = arith.subf %99, %100 : vector<8x1xf32>
    %102 = vector.broadcast %94 : vector<8x1xf32> to vector<8x120xf32>
    %103 = arith.subf %88, %102 : vector<8x120xf32>
    %cst_49 = arith.constant 9.99999974E-6 : f32
    %104 = vector.broadcast %cst_49 : f32 to vector<8x1xf32>
    %105 = arith.addf %101, %104 : vector<8x1xf32>
    %106 = math.rsqrt %105 : vector<8x1xf32>
    %107 = vector.broadcast %106 : vector<8x1xf32> to vector<8x120xf32>
    %108 = arith.mulf %103, %107 : vector<8x120xf32>
    %109 = vector.broadcast %89 : vector<1x120xf32> to vector<8x120xf32>
    %110 = arith.mulf %108, %109 : vector<8x120xf32>
    %111 = vector.broadcast %90 : vector<1x120xf32> to vector<8x120xf32>
    %112 = arith.addf %110, %111 : vector<8x120xf32>
    %cst_50 = arith.constant 0.00999999977 : f32
    %113 = vector.broadcast %cst_50 : f32 to vector<8x120xf32>
    %114 = arith.mulf %113, %112 : vector<8x120xf32>
    %115 = arith.maximumf %112, %114 : vector<8x120xf32>
    %c1_51 = arith.constant 1 : index
    %c0_52 = arith.constant 0 : index
    %c0_53 = arith.constant 0 : index
    %116 = vector.load %arg6[%c1_51, %c0_52, %c0_53] : memref<9x3x120xf32, #tpu.memory_space<vmem>>, vector<1x3x120xf32>
    %117 = vector.shape_cast %116 : vector<1x3x120xf32> to vector<3x120xf32>
    %c1_54 = arith.constant 1 : index
    %c0_55 = arith.constant 0 : index
    %c0_56 = arith.constant 0 : index
    %118 = vector.load %arg5[%c1_54, %c0_55, %c0_56] : memref<9x120x120xf32, #tpu.memory_space<vmem>>, vector<1x120x120xf32>
    %119 = vector.shape_cast %118 : vector<1x120x120xf32> to vector<120x120xf32>
    %cst_57 = arith.constant dense<0.000000e+00> : vector<8x120xf32>
    %120 = tpu.matmul %115, %119, %cst_57 {dimension_numbers = #tpu.dot_dimension_numbers<[1], [0], [0], [1], [0, 0, 1, 1], [], []>} : vector<8x120xf32>, vector<120x120xf32>, vector<8x120xf32> -> vector<8x120xf32>
    %121 = vector.extract_strided_slice %117 {offsets = [0, 0], sizes = [1, 120], strides = [1, 1]} : vector<3x120xf32> to vector<1x120xf32>
    %122 = vector.broadcast %121 : vector<1x120xf32> to vector<8x120xf32>
    %123 = arith.addf %120, %122 : vector<8x120xf32>
    %124 = vector.extract_strided_slice %117 {offsets = [1, 0], sizes = [1, 120], strides = [1, 1]} : vector<3x120xf32> to vector<1x120xf32>
    %125 = vector.extract_strided_slice %117 {offsets = [2, 0], sizes = [1, 120], strides = [1, 1]} : vector<3x120xf32> to vector<1x120xf32>
    %cst_58 = arith.constant dense<0.000000e+00> : vector<8xf32>
    %126 = vector.multi_reduction <add>, %123, %cst_58 [1] : vector<8x120xf32> to vector<8xf32>
    %127 = vector.shape_cast %126 : vector<8xf32> to vector<8x1xf32>
    %cst_59 = arith.constant 0.00833333377 : f32
    %128 = vector.broadcast %cst_59 : f32 to vector<8x1xf32>
    %129 = arith.mulf %127, %128 : vector<8x1xf32>
    %130 = arith.mulf %123, %123 : vector<8x120xf32>
    %cst_60 = arith.constant dense<0.000000e+00> : vector<8xf32>
    %131 = vector.multi_reduction <add>, %130, %cst_60 [1] : vector<8x120xf32> to vector<8xf32>
    %132 = vector.shape_cast %131 : vector<8xf32> to vector<8x1xf32>
    %cst_61 = arith.constant 0.00833333377 : f32
    %133 = vector.broadcast %cst_61 : f32 to vector<8x1xf32>
    %134 = arith.mulf %132, %133 : vector<8x1xf32>
    %135 = arith.mulf %129, %129 : vector<8x1xf32>
    %136 = arith.subf %134, %135 : vector<8x1xf32>
    %137 = vector.broadcast %129 : vector<8x1xf32> to vector<8x120xf32>
    %138 = arith.subf %123, %137 : vector<8x120xf32>
    %cst_62 = arith.constant 9.99999974E-6 : f32
    %139 = vector.broadcast %cst_62 : f32 to vector<8x1xf32>
    %140 = arith.addf %136, %139 : vector<8x1xf32>
    %141 = math.rsqrt %140 : vector<8x1xf32>
    %142 = vector.broadcast %141 : vector<8x1xf32> to vector<8x120xf32>
    %143 = arith.mulf %138, %142 : vector<8x120xf32>
    %144 = vector.broadcast %124 : vector<1x120xf32> to vector<8x120xf32>
    %145 = arith.mulf %143, %144 : vector<8x120xf32>
    %146 = vector.broadcast %125 : vector<1x120xf32> to vector<8x120xf32>
    %147 = arith.addf %145, %146 : vector<8x120xf32>
    %cst_63 = arith.constant 0.00999999977 : f32
    %148 = vector.broadcast %cst_63 : f32 to vector<8x120xf32>
    %149 = arith.mulf %148, %147 : vector<8x120xf32>
    %150 = arith.maximumf %147, %149 : vector<8x120xf32>
    %c1_64 = arith.constant 1 : index
    %c0_65 = arith.constant 0 : index
    %c0_66 = arith.constant 0 : index
    %151 = vector.load %arg7[%c1_64, %c0_65, %c0_66] : memref<9x120x256xf32, #tpu.memory_space<vmem>>, vector<1x120x256xf32>
    %152 = vector.shape_cast %151 : vector<1x120x256xf32> to vector<120x256xf32>
    %cst_67 = arith.constant dense<0.000000e+00> : vector<8x256xf32>
    %153 = tpu.matmul %150, %152, %cst_67 {dimension_numbers = #tpu.dot_dimension_numbers<[1], [0], [0], [1], [0, 0, 1, 1], [], []>} : vector<8x120xf32>, vector<120x256xf32>, vector<8x256xf32> -> vector<8x256xf32>
    %154 = arith.addf %78, %153 : vector<8x256xf32>
    %c2 = arith.constant 2 : index
    %c0_68 = arith.constant 0 : index
    %c0_69 = arith.constant 0 : index
    %155 = vector.load %arg1[%c2, %c0_68, %c0_69] : memref<9x8x60xf32, #tpu.memory_space<vmem>>, vector<1x8x60xf32>
    %156 = vector.shape_cast %155 : vector<1x8x60xf32> to vector<8x60xf32>
    %c2_70 = arith.constant 2 : index
    %c0_71 = arith.constant 0 : index
    %c0_72 = arith.constant 0 : index
    %157 = vector.load %arg4[%c2_70, %c0_71, %c0_72] : memref<9x3x120xf32, #tpu.memory_space<vmem>>, vector<1x3x120xf32>
    %158 = vector.shape_cast %157 : vector<1x3x120xf32> to vector<3x120xf32>
    %c2_73 = arith.constant 2 : index
    %c0_74 = arith.constant 0 : index
    %c0_75 = arith.constant 0 : index
    %159 = vector.load %arg3[%c2_73, %c0_74, %c0_75] : memref<9x60x120xf32, #tpu.memory_space<vmem>>, vector<1x60x120xf32>
    %160 = vector.shape_cast %159 : vector<1x60x120xf32> to vector<60x120xf32>
    %cst_76 = arith.constant dense<0.000000e+00> : vector<8x120xf32>
    %161 = tpu.matmul %156, %160, %cst_76 {dimension_numbers = #tpu.dot_dimension_numbers<[1], [0], [0], [1], [0, 0, 1, 1], [], []>} : vector<8x60xf32>, vector<60x120xf32>, vector<8x120xf32> -> vector<8x120xf32>
    %162 = vector.extract_strided_slice %158 {offsets = [0, 0], sizes = [1, 120], strides = [1, 1]} : vector<3x120xf32> to vector<1x120xf32>
    %163 = vector.broadcast %162 : vector<1x120xf32> to vector<8x120xf32>
    %164 = arith.addf %161, %163 : vector<8x120xf32>
    %165 = vector.extract_strided_slice %158 {offsets = [1, 0], sizes = [1, 120], strides = [1, 1]} : vector<3x120xf32> to vector<1x120xf32>
    %166 = vector.extract_strided_slice %158 {offsets = [2, 0], sizes = [1, 120], strides = [1, 1]} : vector<3x120xf32> to vector<1x120xf32>
    %cst_77 = arith.constant dense<0.000000e+00> : vector<8xf32>
    %167 = vector.multi_reduction <add>, %164, %cst_77 [1] : vector<8x120xf32> to vector<8xf32>
    %168 = vector.shape_cast %167 : vector<8xf32> to vector<8x1xf32>
    %cst_78 = arith.constant 0.00833333377 : f32
    %169 = vector.broadcast %cst_78 : f32 to vector<8x1xf32>
    %170 = arith.mulf %168, %169 : vector<8x1xf32>
    %171 = arith.mulf %164, %164 : vector<8x120xf32>
    %cst_79 = arith.constant dense<0.000000e+00> : vector<8xf32>
    %172 = vector.multi_reduction <add>, %171, %cst_79 [1] : vector<8x120xf32> to vector<8xf32>
    %173 = vector.shape_cast %172 : vector<8xf32> to vector<8x1xf32>
    %cst_80 = arith.constant 0.00833333377 : f32
    %174 = vector.broadcast %cst_80 : f32 to vector<8x1xf32>
    %175 = arith.mulf %173, %174 : vector<8x1xf32>
    %176 = arith.mulf %170, %170 : vector<8x1xf32>
    %177 = arith.subf %175, %176 : vector<8x1xf32>
    %178 = vector.broadcast %170 : vector<8x1xf32> to vector<8x120xf32>
    %179 = arith.subf %164, %178 : vector<8x120xf32>
    %cst_81 = arith.constant 9.99999974E-6 : f32
    %180 = vector.broadcast %cst_81 : f32 to vector<8x1xf32>
    %181 = arith.addf %177, %180 : vector<8x1xf32>
    %182 = math.rsqrt %181 : vector<8x1xf32>
    %183 = vector.broadcast %182 : vector<8x1xf32> to vector<8x120xf32>
    %184 = arith.mulf %179, %183 : vector<8x120xf32>
    %185 = vector.broadcast %165 : vector<1x120xf32> to vector<8x120xf32>
    %186 = arith.mulf %184, %185 : vector<8x120xf32>
    %187 = vector.broadcast %166 : vector<1x120xf32> to vector<8x120xf32>
    %188 = arith.addf %186, %187 : vector<8x120xf32>
    %cst_82 = arith.constant 0.00999999977 : f32
    %189 = vector.broadcast %cst_82 : f32 to vector<8x120xf32>
    %190 = arith.mulf %189, %188 : vector<8x120xf32>
    %191 = arith.maximumf %188, %190 : vector<8x120xf32>
    %c2_83 = arith.constant 2 : index
    %c0_84 = arith.constant 0 : index
    %c0_85 = arith.constant 0 : index
    %192 = vector.load %arg6[%c2_83, %c0_84, %c0_85] : memref<9x3x120xf32, #tpu.memory_space<vmem>>, vector<1x3x120xf32>
    %193 = vector.shape_cast %192 : vector<1x3x120xf32> to vector<3x120xf32>
    %c2_86 = arith.constant 2 : index
    %c0_87 = arith.constant 0 : index
    %c0_88 = arith.constant 0 : index
    %194 = vector.load %arg5[%c2_86, %c0_87, %c0_88] : memref<9x120x120xf32, #tpu.memory_space<vmem>>, vector<1x120x120xf32>
    %195 = vector.shape_cast %194 : vector<1x120x120xf32> to vector<120x120xf32>
    %cst_89 = arith.constant dense<0.000000e+00> : vector<8x120xf32>
    %196 = tpu.matmul %191, %195, %cst_89 {dimension_numbers = #tpu.dot_dimension_numbers<[1], [0], [0], [1], [0, 0, 1, 1], [], []>} : vector<8x120xf32>, vector<120x120xf32>, vector<8x120xf32> -> vector<8x120xf32>
    %197 = vector.extract_strided_slice %193 {offsets = [0, 0], sizes = [1, 120], strides = [1, 1]} : vector<3x120xf32> to vector<1x120xf32>
    %198 = vector.broadcast %197 : vector<1x120xf32> to vector<8x120xf32>
    %199 = arith.addf %196, %198 : vector<8x120xf32>
    %200 = vector.extract_strided_slice %193 {offsets = [1, 0], sizes = [1, 120], strides = [1, 1]} : vector<3x120xf32> to vector<1x120xf32>
    %201 = vector.extract_strided_slice %193 {offsets = [2, 0], sizes = [1, 120], strides = [1, 1]} : vector<3x120xf32> to vector<1x120xf32>
    %cst_90 = arith.constant dense<0.000000e+00> : vector<8xf32>
    %202 = vector.multi_reduction <add>, %199, %cst_90 [1] : vector<8x120xf32> to vector<8xf32>
    %203 = vector.shape_cast %202 : vector<8xf32> to vector<8x1xf32>
    %cst_91 = arith.constant 0.00833333377 : f32
    %204 = vector.broadcast %cst_91 : f32 to vector<8x1xf32>
    %205 = arith.mulf %203, %204 : vector<8x1xf32>
    %206 = arith.mulf %199, %199 : vector<8x120xf32>
    %cst_92 = arith.constant dense<0.000000e+00> : vector<8xf32>
    %207 = vector.multi_reduction <add>, %206, %cst_92 [1] : vector<8x120xf32> to vector<8xf32>
    %208 = vector.shape_cast %207 : vector<8xf32> to vector<8x1xf32>
    %cst_93 = arith.constant 0.00833333377 : f32
    %209 = vector.broadcast %cst_93 : f32 to vector<8x1xf32>
    %210 = arith.mulf %208, %209 : vector<8x1xf32>
    %211 = arith.mulf %205, %205 : vector<8x1xf32>
    %212 = arith.subf %210, %211 : vector<8x1xf32>
    %213 = vector.broadcast %205 : vector<8x1xf32> to vector<8x120xf32>
    %214 = arith.subf %199, %213 : vector<8x120xf32>
    %cst_94 = arith.constant 9.99999974E-6 : f32
    %215 = vector.broadcast %cst_94 : f32 to vector<8x1xf32>
    %216 = arith.addf %212, %215 : vector<8x1xf32>
    %217 = math.rsqrt %216 : vector<8x1xf32>
    %218 = vector.broadcast %217 : vector<8x1xf32> to vector<8x120xf32>
    %219 = arith.mulf %214, %218 : vector<8x120xf32>
    %220 = vector.broadcast %200 : vector<1x120xf32> to vector<8x120xf32>
    %221 = arith.mulf %219, %220 : vector<8x120xf32>
    %222 = vector.broadcast %201 : vector<1x120xf32> to vector<8x120xf32>
    %223 = arith.addf %221, %222 : vector<8x120xf32>
    %cst_95 = arith.constant 0.00999999977 : f32
    %224 = vector.broadcast %cst_95 : f32 to vector<8x120xf32>
    %225 = arith.mulf %224, %223 : vector<8x120xf32>
    %226 = arith.maximumf %223, %225 : vector<8x120xf32>
    %c2_96 = arith.constant 2 : index
    %c0_97 = arith.constant 0 : index
    %c0_98 = arith.constant 0 : index
    %227 = vector.load %arg7[%c2_96, %c0_97, %c0_98] : memref<9x120x256xf32, #tpu.memory_space<vmem>>, vector<1x120x256xf32>
    %228 = vector.shape_cast %227 : vector<1x120x256xf32> to vector<120x256xf32>
    %cst_99 = arith.constant dense<0.000000e+00> : vector<8x256xf32>
    %229 = tpu.matmul %226, %228, %cst_99 {dimension_numbers = #tpu.dot_dimension_numbers<[1], [0], [0], [1], [0, 0, 1, 1], [], []>} : vector<8x120xf32>, vector<120x256xf32>, vector<8x256xf32> -> vector<8x256xf32>
    %230 = arith.addf %154, %229 : vector<8x256xf32>
    %c3 = arith.constant 3 : index
    %c0_100 = arith.constant 0 : index
    %c0_101 = arith.constant 0 : index
    %231 = vector.load %arg1[%c3, %c0_100, %c0_101] : memref<9x8x60xf32, #tpu.memory_space<vmem>>, vector<1x8x60xf32>
    %232 = vector.shape_cast %231 : vector<1x8x60xf32> to vector<8x60xf32>
    %c3_102 = arith.constant 3 : index
    %c0_103 = arith.constant 0 : index
    %c0_104 = arith.constant 0 : index
    %233 = vector.load %arg4[%c3_102, %c0_103, %c0_104] : memref<9x3x120xf32, #tpu.memory_space<vmem>>, vector<1x3x120xf32>
    %234 = vector.shape_cast %233 : vector<1x3x120xf32> to vector<3x120xf32>
    %c3_105 = arith.constant 3 : index
    %c0_106 = arith.constant 0 : index
    %c0_107 = arith.constant 0 : index
    %235 = vector.load %arg3[%c3_105, %c0_106, %c0_107] : memref<9x60x120xf32, #tpu.memory_space<vmem>>, vector<1x60x120xf32>
    %236 = vector.shape_cast %235 : vector<1x60x120xf32> to vector<60x120xf32>
    %cst_108 = arith.constant dense<0.000000e+00> : vector<8x120xf32>
    %237 = tpu.matmul %232, %236, %cst_108 {dimension_numbers = #tpu.dot_dimension_numbers<[1], [0], [0], [1], [0, 0, 1, 1], [], []>} : vector<8x60xf32>, vector<60x120xf32>, vector<8x120xf32> -> vector<8x120xf32>
    %238 = vector.extract_strided_slice %234 {offsets = [0, 0], sizes = [1, 120], strides = [1, 1]} : vector<3x120xf32> to vector<1x120xf32>
    %239 = vector.broadcast %238 : vector<1x120xf32> to vector<8x120xf32>
    %240 = arith.addf %237, %239 : vector<8x120xf32>
    %241 = vector.extract_strided_slice %234 {offsets = [1, 0], sizes = [1, 120], strides = [1, 1]} : vector<3x120xf32> to vector<1x120xf32>
    %242 = vector.extract_strided_slice %234 {offsets = [2, 0], sizes = [1, 120], strides = [1, 1]} : vector<3x120xf32> to vector<1x120xf32>
    %cst_109 = arith.constant dense<0.000000e+00> : vector<8xf32>
    %243 = vector.multi_reduction <add>, %240, %cst_109 [1] : vector<8x120xf32> to vector<8xf32>
    %244 = vector.shape_cast %243 : vector<8xf32> to vector<8x1xf32>
    %cst_110 = arith.constant 0.00833333377 : f32
    %245 = vector.broadcast %cst_110 : f32 to vector<8x1xf32>
    %246 = arith.mulf %244, %245 : vector<8x1xf32>
    %247 = arith.mulf %240, %240 : vector<8x120xf32>
    %cst_111 = arith.constant dense<0.000000e+00> : vector<8xf32>
    %248 = vector.multi_reduction <add>, %247, %cst_111 [1] : vector<8x120xf32> to vector<8xf32>
    %249 = vector.shape_cast %248 : vector<8xf32> to vector<8x1xf32>
    %cst_112 = arith.constant 0.00833333377 : f32
    %250 = vector.broadcast %cst_112 : f32 to vector<8x1xf32>
    %251 = arith.mulf %249, %250 : vector<8x1xf32>
    %252 = arith.mulf %246, %246 : vector<8x1xf32>
    %253 = arith.subf %251, %252 : vector<8x1xf32>
    %254 = vector.broadcast %246 : vector<8x1xf32> to vector<8x120xf32>
    %255 = arith.subf %240, %254 : vector<8x120xf32>
    %cst_113 = arith.constant 9.99999974E-6 : f32
    %256 = vector.broadcast %cst_113 : f32 to vector<8x1xf32>
    %257 = arith.addf %253, %256 : vector<8x1xf32>
    %258 = math.rsqrt %257 : vector<8x1xf32>
    %259 = vector.broadcast %258 : vector<8x1xf32> to vector<8x120xf32>
    %260 = arith.mulf %255, %259 : vector<8x120xf32>
    %261 = vector.broadcast %241 : vector<1x120xf32> to vector<8x120xf32>
    %262 = arith.mulf %260, %261 : vector<8x120xf32>
    %263 = vector.broadcast %242 : vector<1x120xf32> to vector<8x120xf32>
    %264 = arith.addf %262, %263 : vector<8x120xf32>
    %cst_114 = arith.constant 0.00999999977 : f32
    %265 = vector.broadcast %cst_114 : f32 to vector<8x120xf32>
    %266 = arith.mulf %265, %264 : vector<8x120xf32>
    %267 = arith.maximumf %264, %266 : vector<8x120xf32>
    %c3_115 = arith.constant 3 : index
    %c0_116 = arith.constant 0 : index
    %c0_117 = arith.constant 0 : index
    %268 = vector.load %arg6[%c3_115, %c0_116, %c0_117] : memref<9x3x120xf32, #tpu.memory_space<vmem>>, vector<1x3x120xf32>
    %269 = vector.shape_cast %268 : vector<1x3x120xf32> to vector<3x120xf32>
    %c3_118 = arith.constant 3 : index
    %c0_119 = arith.constant 0 : index
    %c0_120 = arith.constant 0 : index
    %270 = vector.load %arg5[%c3_118, %c0_119, %c0_120] : memref<9x120x120xf32, #tpu.memory_space<vmem>>, vector<1x120x120xf32>
    %271 = vector.shape_cast %270 : vector<1x120x120xf32> to vector<120x120xf32>
    %cst_121 = arith.constant dense<0.000000e+00> : vector<8x120xf32>
    %272 = tpu.matmul %267, %271, %cst_121 {dimension_numbers = #tpu.dot_dimension_numbers<[1], [0], [0], [1], [0, 0, 1, 1], [], []>} : vector<8x120xf32>, vector<120x120xf32>, vector<8x120xf32> -> vector<8x120xf32>
    %273 = vector.extract_strided_slice %269 {offsets = [0, 0], sizes = [1, 120], strides = [1, 1]} : vector<3x120xf32> to vector<1x120xf32>
    %274 = vector.broadcast %273 : vector<1x120xf32> to vector<8x120xf32>
    %275 = arith.addf %272, %274 : vector<8x120xf32>
    %276 = vector.extract_strided_slice %269 {offsets = [1, 0], sizes = [1, 120], strides = [1, 1]} : vector<3x120xf32> to vector<1x120xf32>
    %277 = vector.extract_strided_slice %269 {offsets = [2, 0], sizes = [1, 120], strides = [1, 1]} : vector<3x120xf32> to vector<1x120xf32>
    %cst_122 = arith.constant dense<0.000000e+00> : vector<8xf32>
    %278 = vector.multi_reduction <add>, %275, %cst_122 [1] : vector<8x120xf32> to vector<8xf32>
    %279 = vector.shape_cast %278 : vector<8xf32> to vector<8x1xf32>
    %cst_123 = arith.constant 0.00833333377 : f32
    %280 = vector.broadcast %cst_123 : f32 to vector<8x1xf32>
    %281 = arith.mulf %279, %280 : vector<8x1xf32>
    %282 = arith.mulf %275, %275 : vector<8x120xf32>
    %cst_124 = arith.constant dense<0.000000e+00> : vector<8xf32>
    %283 = vector.multi_reduction <add>, %282, %cst_124 [1] : vector<8x120xf32> to vector<8xf32>
    %284 = vector.shape_cast %283 : vector<8xf32> to vector<8x1xf32>
    %cst_125 = arith.constant 0.00833333377 : f32
    %285 = vector.broadcast %cst_125 : f32 to vector<8x1xf32>
    %286 = arith.mulf %284, %285 : vector<8x1xf32>
    %287 = arith.mulf %281, %281 : vector<8x1xf32>
    %288 = arith.subf %286, %287 : vector<8x1xf32>
    %289 = vector.broadcast %281 : vector<8x1xf32> to vector<8x120xf32>
    %290 = arith.subf %275, %289 : vector<8x120xf32>
    %cst_126 = arith.constant 9.99999974E-6 : f32
    %291 = vector.broadcast %cst_126 : f32 to vector<8x1xf32>
    %292 = arith.addf %288, %291 : vector<8x1xf32>
    %293 = math.rsqrt %292 : vector<8x1xf32>
    %294 = vector.broadcast %293 : vector<8x1xf32> to vector<8x120xf32>
    %295 = arith.mulf %290, %294 : vector<8x120xf32>
    %296 = vector.broadcast %276 : vector<1x120xf32> to vector<8x120xf32>
    %297 = arith.mulf %295, %296 : vector<8x120xf32>
    %298 = vector.broadcast %277 : vector<1x120xf32> to vector<8x120xf32>
    %299 = arith.addf %297, %298 : vector<8x120xf32>
    %cst_127 = arith.constant 0.00999999977 : f32
    %300 = vector.broadcast %cst_127 : f32 to vector<8x120xf32>
    %301 = arith.mulf %300, %299 : vector<8x120xf32>
    %302 = arith.maximumf %299, %301 : vector<8x120xf32>
    %c3_128 = arith.constant 3 : index
    %c0_129 = arith.constant 0 : index
    %c0_130 = arith.constant 0 : index
    %303 = vector.load %arg7[%c3_128, %c0_129, %c0_130] : memref<9x120x256xf32, #tpu.memory_space<vmem>>, vector<1x120x256xf32>
    %304 = vector.shape_cast %303 : vector<1x120x256xf32> to vector<120x256xf32>
    %cst_131 = arith.constant dense<0.000000e+00> : vector<8x256xf32>
    %305 = tpu.matmul %302, %304, %cst_131 {dimension_numbers = #tpu.dot_dimension_numbers<[1], [0], [0], [1], [0, 0, 1, 1], [], []>} : vector<8x120xf32>, vector<120x256xf32>, vector<8x256xf32> -> vector<8x256xf32>
    %306 = arith.addf %230, %305 : vector<8x256xf32>
    %c4 = arith.constant 4 : index
    %c0_132 = arith.constant 0 : index
    %c0_133 = arith.constant 0 : index
    %307 = vector.load %arg1[%c4, %c0_132, %c0_133] : memref<9x8x60xf32, #tpu.memory_space<vmem>>, vector<1x8x60xf32>
    %308 = vector.shape_cast %307 : vector<1x8x60xf32> to vector<8x60xf32>
    %c4_134 = arith.constant 4 : index
    %c0_135 = arith.constant 0 : index
    %c0_136 = arith.constant 0 : index
    %309 = vector.load %arg4[%c4_134, %c0_135, %c0_136] : memref<9x3x120xf32, #tpu.memory_space<vmem>>, vector<1x3x120xf32>
    %310 = vector.shape_cast %309 : vector<1x3x120xf32> to vector<3x120xf32>
    %c4_137 = arith.constant 4 : index
    %c0_138 = arith.constant 0 : index
    %c0_139 = arith.constant 0 : index
    %311 = vector.load %arg3[%c4_137, %c0_138, %c0_139] : memref<9x60x120xf32, #tpu.memory_space<vmem>>, vector<1x60x120xf32>
    %312 = vector.shape_cast %311 : vector<1x60x120xf32> to vector<60x120xf32>
    %cst_140 = arith.constant dense<0.000000e+00> : vector<8x120xf32>
    %313 = tpu.matmul %308, %312, %cst_140 {dimension_numbers = #tpu.dot_dimension_numbers<[1], [0], [0], [1], [0, 0, 1, 1], [], []>} : vector<8x60xf32>, vector<60x120xf32>, vector<8x120xf32> -> vector<8x120xf32>
    %314 = vector.extract_strided_slice %310 {offsets = [0, 0], sizes = [1, 120], strides = [1, 1]} : vector<3x120xf32> to vector<1x120xf32>
    %315 = vector.broadcast %314 : vector<1x120xf32> to vector<8x120xf32>
    %316 = arith.addf %313, %315 : vector<8x120xf32>
    %317 = vector.extract_strided_slice %310 {offsets = [1, 0], sizes = [1, 120], strides = [1, 1]} : vector<3x120xf32> to vector<1x120xf32>
    %318 = vector.extract_strided_slice %310 {offsets = [2, 0], sizes = [1, 120], strides = [1, 1]} : vector<3x120xf32> to vector<1x120xf32>
    %cst_141 = arith.constant dense<0.000000e+00> : vector<8xf32>
    %319 = vector.multi_reduction <add>, %316, %cst_141 [1] : vector<8x120xf32> to vector<8xf32>
    %320 = vector.shape_cast %319 : vector<8xf32> to vector<8x1xf32>
    %cst_142 = arith.constant 0.00833333377 : f32
    %321 = vector.broadcast %cst_142 : f32 to vector<8x1xf32>
    %322 = arith.mulf %320, %321 : vector<8x1xf32>
    %323 = arith.mulf %316, %316 : vector<8x120xf32>
    %cst_143 = arith.constant dense<0.000000e+00> : vector<8xf32>
    %324 = vector.multi_reduction <add>, %323, %cst_143 [1] : vector<8x120xf32> to vector<8xf32>
    %325 = vector.shape_cast %324 : vector<8xf32> to vector<8x1xf32>
    %cst_144 = arith.constant 0.00833333377 : f32
    %326 = vector.broadcast %cst_144 : f32 to vector<8x1xf32>
    %327 = arith.mulf %325, %326 : vector<8x1xf32>
    %328 = arith.mulf %322, %322 : vector<8x1xf32>
    %329 = arith.subf %327, %328 : vector<8x1xf32>
    %330 = vector.broadcast %322 : vector<8x1xf32> to vector<8x120xf32>
    %331 = arith.subf %316, %330 : vector<8x120xf32>
    %cst_145 = arith.constant 9.99999974E-6 : f32
    %332 = vector.broadcast %cst_145 : f32 to vector<8x1xf32>
    %333 = arith.addf %329, %332 : vector<8x1xf32>
    %334 = math.rsqrt %333 : vector<8x1xf32>
    %335 = vector.broadcast %334 : vector<8x1xf32> to vector<8x120xf32>
    %336 = arith.mulf %331, %335 : vector<8x120xf32>
    %337 = vector.broadcast %317 : vector<1x120xf32> to vector<8x120xf32>
    %338 = arith.mulf %336, %337 : vector<8x120xf32>
    %339 = vector.broadcast %318 : vector<1x120xf32> to vector<8x120xf32>
    %340 = arith.addf %338, %339 : vector<8x120xf32>
    %cst_146 = arith.constant 0.00999999977 : f32
    %341 = vector.broadcast %cst_146 : f32 to vector<8x120xf32>
    %342 = arith.mulf %341, %340 : vector<8x120xf32>
    %343 = arith.maximumf %340, %342 : vector<8x120xf32>
    %c4_147 = arith.constant 4 : index
    %c0_148 = arith.constant 0 : index
    %c0_149 = arith.constant 0 : index
    %344 = vector.load %arg6[%c4_147, %c0_148, %c0_149] : memref<9x3x120xf32, #tpu.memory_space<vmem>>, vector<1x3x120xf32>
    %345 = vector.shape_cast %344 : vector<1x3x120xf32> to vector<3x120xf32>
    %c4_150 = arith.constant 4 : index
    %c0_151 = arith.constant 0 : index
    %c0_152 = arith.constant 0 : index
    %346 = vector.load %arg5[%c4_150, %c0_151, %c0_152] : memref<9x120x120xf32, #tpu.memory_space<vmem>>, vector<1x120x120xf32>
    %347 = vector.shape_cast %346 : vector<1x120x120xf32> to vector<120x120xf32>
    %cst_153 = arith.constant dense<0.000000e+00> : vector<8x120xf32>
    %348 = tpu.matmul %343, %347, %cst_153 {dimension_numbers = #tpu.dot_dimension_numbers<[1], [0], [0], [1], [0, 0, 1, 1], [], []>} : vector<8x120xf32>, vector<120x120xf32>, vector<8x120xf32> -> vector<8x120xf32>
    %349 = vector.extract_strided_slice %345 {offsets = [0, 0], sizes = [1, 120], strides = [1, 1]} : vector<3x120xf32> to vector<1x120xf32>
    %350 = vector.broadcast %349 : vector<1x120xf32> to vector<8x120xf32>
    %351 = arith.addf %348, %350 : vector<8x120xf32>
    %352 = vector.extract_strided_slice %345 {offsets = [1, 0], sizes = [1, 120], strides = [1, 1]} : vector<3x120xf32> to vector<1x120xf32>
    %353 = vector.extract_strided_slice %345 {offsets = [2, 0], sizes = [1, 120], strides = [1, 1]} : vector<3x120xf32> to vector<1x120xf32>
    %cst_154 = arith.constant dense<0.000000e+00> : vector<8xf32>
    %354 = vector.multi_reduction <add>, %351, %cst_154 [1] : vector<8x120xf32> to vector<8xf32>
    %355 = vector.shape_cast %354 : vector<8xf32> to vector<8x1xf32>
    %cst_155 = arith.constant 0.00833333377 : f32
    %356 = vector.broadcast %cst_155 : f32 to vector<8x1xf32>
    %357 = arith.mulf %355, %356 : vector<8x1xf32>
    %358 = arith.mulf %351, %351 : vector<8x120xf32>
    %cst_156 = arith.constant dense<0.000000e+00> : vector<8xf32>
    %359 = vector.multi_reduction <add>, %358, %cst_156 [1] : vector<8x120xf32> to vector<8xf32>
    %360 = vector.shape_cast %359 : vector<8xf32> to vector<8x1xf32>
    %cst_157 = arith.constant 0.00833333377 : f32
    %361 = vector.broadcast %cst_157 : f32 to vector<8x1xf32>
    %362 = arith.mulf %360, %361 : vector<8x1xf32>
    %363 = arith.mulf %357, %357 : vector<8x1xf32>
    %364 = arith.subf %362, %363 : vector<8x1xf32>
    %365 = vector.broadcast %357 : vector<8x1xf32> to vector<8x120xf32>
    %366 = arith.subf %351, %365 : vector<8x120xf32>
    %cst_158 = arith.constant 9.99999974E-6 : f32
    %367 = vector.broadcast %cst_158 : f32 to vector<8x1xf32>
    %368 = arith.addf %364, %367 : vector<8x1xf32>
    %369 = math.rsqrt %368 : vector<8x1xf32>
    %370 = vector.broadcast %369 : vector<8x1xf32> to vector<8x120xf32>
    %371 = arith.mulf %366, %370 : vector<8x120xf32>
    %372 = vector.broadcast %352 : vector<1x120xf32> to vector<8x120xf32>
    %373 = arith.mulf %371, %372 : vector<8x120xf32>
    %374 = vector.broadcast %353 : vector<1x120xf32> to vector<8x120xf32>
    %375 = arith.addf %373, %374 : vector<8x120xf32>
    %cst_159 = arith.constant 0.00999999977 : f32
    %376 = vector.broadcast %cst_159 : f32 to vector<8x120xf32>
    %377 = arith.mulf %376, %375 : vector<8x120xf32>
    %378 = arith.maximumf %375, %377 : vector<8x120xf32>
    %c4_160 = arith.constant 4 : index
    %c0_161 = arith.constant 0 : index
    %c0_162 = arith.constant 0 : index
    %379 = vector.load %arg7[%c4_160, %c0_161, %c0_162] : memref<9x120x256xf32, #tpu.memory_space<vmem>>, vector<1x120x256xf32>
    %380 = vector.shape_cast %379 : vector<1x120x256xf32> to vector<120x256xf32>
    %cst_163 = arith.constant dense<0.000000e+00> : vector<8x256xf32>
    %381 = tpu.matmul %378, %380, %cst_163 {dimension_numbers = #tpu.dot_dimension_numbers<[1], [0], [0], [1], [0, 0, 1, 1], [], []>} : vector<8x120xf32>, vector<120x256xf32>, vector<8x256xf32> -> vector<8x256xf32>
    %382 = arith.addf %306, %381 : vector<8x256xf32>
    %c5 = arith.constant 5 : index
    %c0_164 = arith.constant 0 : index
    %c0_165 = arith.constant 0 : index
    %383 = vector.load %arg1[%c5, %c0_164, %c0_165] : memref<9x8x60xf32, #tpu.memory_space<vmem>>, vector<1x8x60xf32>
    %384 = vector.shape_cast %383 : vector<1x8x60xf32> to vector<8x60xf32>
    %c5_166 = arith.constant 5 : index
    %c0_167 = arith.constant 0 : index
    %c0_168 = arith.constant 0 : index
    %385 = vector.load %arg4[%c5_166, %c0_167, %c0_168] : memref<9x3x120xf32, #tpu.memory_space<vmem>>, vector<1x3x120xf32>
    %386 = vector.shape_cast %385 : vector<1x3x120xf32> to vector<3x120xf32>
    %c5_169 = arith.constant 5 : index
    %c0_170 = arith.constant 0 : index
    %c0_171 = arith.constant 0 : index
    %387 = vector.load %arg3[%c5_169, %c0_170, %c0_171] : memref<9x60x120xf32, #tpu.memory_space<vmem>>, vector<1x60x120xf32>
    %388 = vector.shape_cast %387 : vector<1x60x120xf32> to vector<60x120xf32>
    %cst_172 = arith.constant dense<0.000000e+00> : vector<8x120xf32>
    %389 = tpu.matmul %384, %388, %cst_172 {dimension_numbers = #tpu.dot_dimension_numbers<[1], [0], [0], [1], [0, 0, 1, 1], [], []>} : vector<8x60xf32>, vector<60x120xf32>, vector<8x120xf32> -> vector<8x120xf32>
    %390 = vector.extract_strided_slice %386 {offsets = [0, 0], sizes = [1, 120], strides = [1, 1]} : vector<3x120xf32> to vector<1x120xf32>
    %391 = vector.broadcast %390 : vector<1x120xf32> to vector<8x120xf32>
    %392 = arith.addf %389, %391 : vector<8x120xf32>
    %393 = vector.extract_strided_slice %386 {offsets = [1, 0], sizes = [1, 120], strides = [1, 1]} : vector<3x120xf32> to vector<1x120xf32>
    %394 = vector.extract_strided_slice %386 {offsets = [2, 0], sizes = [1, 120], strides = [1, 1]} : vector<3x120xf32> to vector<1x120xf32>
    %cst_173 = arith.constant dense<0.000000e+00> : vector<8xf32>
    %395 = vector.multi_reduction <add>, %392, %cst_173 [1] : vector<8x120xf32> to vector<8xf32>
    %396 = vector.shape_cast %395 : vector<8xf32> to vector<8x1xf32>
    %cst_174 = arith.constant 0.00833333377 : f32
    %397 = vector.broadcast %cst_174 : f32 to vector<8x1xf32>
    %398 = arith.mulf %396, %397 : vector<8x1xf32>
    %399 = arith.mulf %392, %392 : vector<8x120xf32>
    %cst_175 = arith.constant dense<0.000000e+00> : vector<8xf32>
    %400 = vector.multi_reduction <add>, %399, %cst_175 [1] : vector<8x120xf32> to vector<8xf32>
    %401 = vector.shape_cast %400 : vector<8xf32> to vector<8x1xf32>
    %cst_176 = arith.constant 0.00833333377 : f32
    %402 = vector.broadcast %cst_176 : f32 to vector<8x1xf32>
    %403 = arith.mulf %401, %402 : vector<8x1xf32>
    %404 = arith.mulf %398, %398 : vector<8x1xf32>
    %405 = arith.subf %403, %404 : vector<8x1xf32>
    %406 = vector.broadcast %398 : vector<8x1xf32> to vector<8x120xf32>
    %407 = arith.subf %392, %406 : vector<8x120xf32>
    %cst_177 = arith.constant 9.99999974E-6 : f32
    %408 = vector.broadcast %cst_177 : f32 to vector<8x1xf32>
    %409 = arith.addf %405, %408 : vector<8x1xf32>
    %410 = math.rsqrt %409 : vector<8x1xf32>
    %411 = vector.broadcast %410 : vector<8x1xf32> to vector<8x120xf32>
    %412 = arith.mulf %407, %411 : vector<8x120xf32>
    %413 = vector.broadcast %393 : vector<1x120xf32> to vector<8x120xf32>
    %414 = arith.mulf %412, %413 : vector<8x120xf32>
    %415 = vector.broadcast %394 : vector<1x120xf32> to vector<8x120xf32>
    %416 = arith.addf %414, %415 : vector<8x120xf32>
    %cst_178 = arith.constant 0.00999999977 : f32
    %417 = vector.broadcast %cst_178 : f32 to vector<8x120xf32>
    %418 = arith.mulf %417, %416 : vector<8x120xf32>
    %419 = arith.maximumf %416, %418 : vector<8x120xf32>
    %c5_179 = arith.constant 5 : index
    %c0_180 = arith.constant 0 : index
    %c0_181 = arith.constant 0 : index
    %420 = vector.load %arg6[%c5_179, %c0_180, %c0_181] : memref<9x3x120xf32, #tpu.memory_space<vmem>>, vector<1x3x120xf32>
    %421 = vector.shape_cast %420 : vector<1x3x120xf32> to vector<3x120xf32>
    %c5_182 = arith.constant 5 : index
    %c0_183 = arith.constant 0 : index
    %c0_184 = arith.constant 0 : index
    %422 = vector.load %arg5[%c5_182, %c0_183, %c0_184] : memref<9x120x120xf32, #tpu.memory_space<vmem>>, vector<1x120x120xf32>
    %423 = vector.shape_cast %422 : vector<1x120x120xf32> to vector<120x120xf32>
    %cst_185 = arith.constant dense<0.000000e+00> : vector<8x120xf32>
    %424 = tpu.matmul %419, %423, %cst_185 {dimension_numbers = #tpu.dot_dimension_numbers<[1], [0], [0], [1], [0, 0, 1, 1], [], []>} : vector<8x120xf32>, vector<120x120xf32>, vector<8x120xf32> -> vector<8x120xf32>
    %425 = vector.extract_strided_slice %421 {offsets = [0, 0], sizes = [1, 120], strides = [1, 1]} : vector<3x120xf32> to vector<1x120xf32>
    %426 = vector.broadcast %425 : vector<1x120xf32> to vector<8x120xf32>
    %427 = arith.addf %424, %426 : vector<8x120xf32>
    %428 = vector.extract_strided_slice %421 {offsets = [1, 0], sizes = [1, 120], strides = [1, 1]} : vector<3x120xf32> to vector<1x120xf32>
    %429 = vector.extract_strided_slice %421 {offsets = [2, 0], sizes = [1, 120], strides = [1, 1]} : vector<3x120xf32> to vector<1x120xf32>
    %cst_186 = arith.constant dense<0.000000e+00> : vector<8xf32>
    %430 = vector.multi_reduction <add>, %427, %cst_186 [1] : vector<8x120xf32> to vector<8xf32>
    %431 = vector.shape_cast %430 : vector<8xf32> to vector<8x1xf32>
    %cst_187 = arith.constant 0.00833333377 : f32
    %432 = vector.broadcast %cst_187 : f32 to vector<8x1xf32>
    %433 = arith.mulf %431, %432 : vector<8x1xf32>
    %434 = arith.mulf %427, %427 : vector<8x120xf32>
    %cst_188 = arith.constant dense<0.000000e+00> : vector<8xf32>
    %435 = vector.multi_reduction <add>, %434, %cst_188 [1] : vector<8x120xf32> to vector<8xf32>
    %436 = vector.shape_cast %435 : vector<8xf32> to vector<8x1xf32>
    %cst_189 = arith.constant 0.00833333377 : f32
    %437 = vector.broadcast %cst_189 : f32 to vector<8x1xf32>
    %438 = arith.mulf %436, %437 : vector<8x1xf32>
    %439 = arith.mulf %433, %433 : vector<8x1xf32>
    %440 = arith.subf %438, %439 : vector<8x1xf32>
    %441 = vector.broadcast %433 : vector<8x1xf32> to vector<8x120xf32>
    %442 = arith.subf %427, %441 : vector<8x120xf32>
    %cst_190 = arith.constant 9.99999974E-6 : f32
    %443 = vector.broadcast %cst_190 : f32 to vector<8x1xf32>
    %444 = arith.addf %440, %443 : vector<8x1xf32>
    %445 = math.rsqrt %444 : vector<8x1xf32>
    %446 = vector.broadcast %445 : vector<8x1xf32> to vector<8x120xf32>
    %447 = arith.mulf %442, %446 : vector<8x120xf32>
    %448 = vector.broadcast %428 : vector<1x120xf32> to vector<8x120xf32>
    %449 = arith.mulf %447, %448 : vector<8x120xf32>
    %450 = vector.broadcast %429 : vector<1x120xf32> to vector<8x120xf32>
    %451 = arith.addf %449, %450 : vector<8x120xf32>
    %cst_191 = arith.constant 0.00999999977 : f32
    %452 = vector.broadcast %cst_191 : f32 to vector<8x120xf32>
    %453 = arith.mulf %452, %451 : vector<8x120xf32>
    %454 = arith.maximumf %451, %453 : vector<8x120xf32>
    %c5_192 = arith.constant 5 : index
    %c0_193 = arith.constant 0 : index
    %c0_194 = arith.constant 0 : index
    %455 = vector.load %arg7[%c5_192, %c0_193, %c0_194] : memref<9x120x256xf32, #tpu.memory_space<vmem>>, vector<1x120x256xf32>
    %456 = vector.shape_cast %455 : vector<1x120x256xf32> to vector<120x256xf32>
    %cst_195 = arith.constant dense<0.000000e+00> : vector<8x256xf32>
    %457 = tpu.matmul %454, %456, %cst_195 {dimension_numbers = #tpu.dot_dimension_numbers<[1], [0], [0], [1], [0, 0, 1, 1], [], []>} : vector<8x120xf32>, vector<120x256xf32>, vector<8x256xf32> -> vector<8x256xf32>
    %458 = arith.addf %382, %457 : vector<8x256xf32>
    %c6 = arith.constant 6 : index
    %c0_196 = arith.constant 0 : index
    %c0_197 = arith.constant 0 : index
    %459 = vector.load %arg1[%c6, %c0_196, %c0_197] : memref<9x8x60xf32, #tpu.memory_space<vmem>>, vector<1x8x60xf32>
    %460 = vector.shape_cast %459 : vector<1x8x60xf32> to vector<8x60xf32>
    %c6_198 = arith.constant 6 : index
    %c0_199 = arith.constant 0 : index
    %c0_200 = arith.constant 0 : index
    %461 = vector.load %arg4[%c6_198, %c0_199, %c0_200] : memref<9x3x120xf32, #tpu.memory_space<vmem>>, vector<1x3x120xf32>
    %462 = vector.shape_cast %461 : vector<1x3x120xf32> to vector<3x120xf32>
    %c6_201 = arith.constant 6 : index
    %c0_202 = arith.constant 0 : index
    %c0_203 = arith.constant 0 : index
    %463 = vector.load %arg3[%c6_201, %c0_202, %c0_203] : memref<9x60x120xf32, #tpu.memory_space<vmem>>, vector<1x60x120xf32>
    %464 = vector.shape_cast %463 : vector<1x60x120xf32> to vector<60x120xf32>
    %cst_204 = arith.constant dense<0.000000e+00> : vector<8x120xf32>
    %465 = tpu.matmul %460, %464, %cst_204 {dimension_numbers = #tpu.dot_dimension_numbers<[1], [0], [0], [1], [0, 0, 1, 1], [], []>} : vector<8x60xf32>, vector<60x120xf32>, vector<8x120xf32> -> vector<8x120xf32>
    %466 = vector.extract_strided_slice %462 {offsets = [0, 0], sizes = [1, 120], strides = [1, 1]} : vector<3x120xf32> to vector<1x120xf32>
    %467 = vector.broadcast %466 : vector<1x120xf32> to vector<8x120xf32>
    %468 = arith.addf %465, %467 : vector<8x120xf32>
    %469 = vector.extract_strided_slice %462 {offsets = [1, 0], sizes = [1, 120], strides = [1, 1]} : vector<3x120xf32> to vector<1x120xf32>
    %470 = vector.extract_strided_slice %462 {offsets = [2, 0], sizes = [1, 120], strides = [1, 1]} : vector<3x120xf32> to vector<1x120xf32>
    %cst_205 = arith.constant dense<0.000000e+00> : vector<8xf32>
    %471 = vector.multi_reduction <add>, %468, %cst_205 [1] : vector<8x120xf32> to vector<8xf32>
    %472 = vector.shape_cast %471 : vector<8xf32> to vector<8x1xf32>
    %cst_206 = arith.constant 0.00833333377 : f32
    %473 = vector.broadcast %cst_206 : f32 to vector<8x1xf32>
    %474 = arith.mulf %472, %473 : vector<8x1xf32>
    %475 = arith.mulf %468, %468 : vector<8x120xf32>
    %cst_207 = arith.constant dense<0.000000e+00> : vector<8xf32>
    %476 = vector.multi_reduction <add>, %475, %cst_207 [1] : vector<8x120xf32> to vector<8xf32>
    %477 = vector.shape_cast %476 : vector<8xf32> to vector<8x1xf32>
    %cst_208 = arith.constant 0.00833333377 : f32
    %478 = vector.broadcast %cst_208 : f32 to vector<8x1xf32>
    %479 = arith.mulf %477, %478 : vector<8x1xf32>
    %480 = arith.mulf %474, %474 : vector<8x1xf32>
    %481 = arith.subf %479, %480 : vector<8x1xf32>
    %482 = vector.broadcast %474 : vector<8x1xf32> to vector<8x120xf32>
    %483 = arith.subf %468, %482 : vector<8x120xf32>
    %cst_209 = arith.constant 9.99999974E-6 : f32
    %484 = vector.broadcast %cst_209 : f32 to vector<8x1xf32>
    %485 = arith.addf %481, %484 : vector<8x1xf32>
    %486 = math.rsqrt %485 : vector<8x1xf32>
    %487 = vector.broadcast %486 : vector<8x1xf32> to vector<8x120xf32>
    %488 = arith.mulf %483, %487 : vector<8x120xf32>
    %489 = vector.broadcast %469 : vector<1x120xf32> to vector<8x120xf32>
    %490 = arith.mulf %488, %489 : vector<8x120xf32>
    %491 = vector.broadcast %470 : vector<1x120xf32> to vector<8x120xf32>
    %492 = arith.addf %490, %491 : vector<8x120xf32>
    %cst_210 = arith.constant 0.00999999977 : f32
    %493 = vector.broadcast %cst_210 : f32 to vector<8x120xf32>
    %494 = arith.mulf %493, %492 : vector<8x120xf32>
    %495 = arith.maximumf %492, %494 : vector<8x120xf32>
    %c6_211 = arith.constant 6 : index
    %c0_212 = arith.constant 0 : index
    %c0_213 = arith.constant 0 : index
    %496 = vector.load %arg6[%c6_211, %c0_212, %c0_213] : memref<9x3x120xf32, #tpu.memory_space<vmem>>, vector<1x3x120xf32>
    %497 = vector.shape_cast %496 : vector<1x3x120xf32> to vector<3x120xf32>
    %c6_214 = arith.constant 6 : index
    %c0_215 = arith.constant 0 : index
    %c0_216 = arith.constant 0 : index
    %498 = vector.load %arg5[%c6_214, %c0_215, %c0_216] : memref<9x120x120xf32, #tpu.memory_space<vmem>>, vector<1x120x120xf32>
    %499 = vector.shape_cast %498 : vector<1x120x120xf32> to vector<120x120xf32>
    %cst_217 = arith.constant dense<0.000000e+00> : vector<8x120xf32>
    %500 = tpu.matmul %495, %499, %cst_217 {dimension_numbers = #tpu.dot_dimension_numbers<[1], [0], [0], [1], [0, 0, 1, 1], [], []>} : vector<8x120xf32>, vector<120x120xf32>, vector<8x120xf32> -> vector<8x120xf32>
    %501 = vector.extract_strided_slice %497 {offsets = [0, 0], sizes = [1, 120], strides = [1, 1]} : vector<3x120xf32> to vector<1x120xf32>
    %502 = vector.broadcast %501 : vector<1x120xf32> to vector<8x120xf32>
    %503 = arith.addf %500, %502 : vector<8x120xf32>
    %504 = vector.extract_strided_slice %497 {offsets = [1, 0], sizes = [1, 120], strides = [1, 1]} : vector<3x120xf32> to vector<1x120xf32>
    %505 = vector.extract_strided_slice %497 {offsets = [2, 0], sizes = [1, 120], strides = [1, 1]} : vector<3x120xf32> to vector<1x120xf32>
    %cst_218 = arith.constant dense<0.000000e+00> : vector<8xf32>
    %506 = vector.multi_reduction <add>, %503, %cst_218 [1] : vector<8x120xf32> to vector<8xf32>
    %507 = vector.shape_cast %506 : vector<8xf32> to vector<8x1xf32>
    %cst_219 = arith.constant 0.00833333377 : f32
    %508 = vector.broadcast %cst_219 : f32 to vector<8x1xf32>
    %509 = arith.mulf %507, %508 : vector<8x1xf32>
    %510 = arith.mulf %503, %503 : vector<8x120xf32>
    %cst_220 = arith.constant dense<0.000000e+00> : vector<8xf32>
    %511 = vector.multi_reduction <add>, %510, %cst_220 [1] : vector<8x120xf32> to vector<8xf32>
    %512 = vector.shape_cast %511 : vector<8xf32> to vector<8x1xf32>
    %cst_221 = arith.constant 0.00833333377 : f32
    %513 = vector.broadcast %cst_221 : f32 to vector<8x1xf32>
    %514 = arith.mulf %512, %513 : vector<8x1xf32>
    %515 = arith.mulf %509, %509 : vector<8x1xf32>
    %516 = arith.subf %514, %515 : vector<8x1xf32>
    %517 = vector.broadcast %509 : vector<8x1xf32> to vector<8x120xf32>
    %518 = arith.subf %503, %517 : vector<8x120xf32>
    %cst_222 = arith.constant 9.99999974E-6 : f32
    %519 = vector.broadcast %cst_222 : f32 to vector<8x1xf32>
    %520 = arith.addf %516, %519 : vector<8x1xf32>
    %521 = math.rsqrt %520 : vector<8x1xf32>
    %522 = vector.broadcast %521 : vector<8x1xf32> to vector<8x120xf32>
    %523 = arith.mulf %518, %522 : vector<8x120xf32>
    %524 = vector.broadcast %504 : vector<1x120xf32> to vector<8x120xf32>
    %525 = arith.mulf %523, %524 : vector<8x120xf32>
    %526 = vector.broadcast %505 : vector<1x120xf32> to vector<8x120xf32>
    %527 = arith.addf %525, %526 : vector<8x120xf32>
    %cst_223 = arith.constant 0.00999999977 : f32
    %528 = vector.broadcast %cst_223 : f32 to vector<8x120xf32>
    %529 = arith.mulf %528, %527 : vector<8x120xf32>
    %530 = arith.maximumf %527, %529 : vector<8x120xf32>
    %c6_224 = arith.constant 6 : index
    %c0_225 = arith.constant 0 : index
    %c0_226 = arith.constant 0 : index
    %531 = vector.load %arg7[%c6_224, %c0_225, %c0_226] : memref<9x120x256xf32, #tpu.memory_space<vmem>>, vector<1x120x256xf32>
    %532 = vector.shape_cast %531 : vector<1x120x256xf32> to vector<120x256xf32>
    %cst_227 = arith.constant dense<0.000000e+00> : vector<8x256xf32>
    %533 = tpu.matmul %530, %532, %cst_227 {dimension_numbers = #tpu.dot_dimension_numbers<[1], [0], [0], [1], [0, 0, 1, 1], [], []>} : vector<8x120xf32>, vector<120x256xf32>, vector<8x256xf32> -> vector<8x256xf32>
    %534 = arith.addf %458, %533 : vector<8x256xf32>
    %c7 = arith.constant 7 : index
    %c0_228 = arith.constant 0 : index
    %c0_229 = arith.constant 0 : index
    %535 = vector.load %arg1[%c7, %c0_228, %c0_229] : memref<9x8x60xf32, #tpu.memory_space<vmem>>, vector<1x8x60xf32>
    %536 = vector.shape_cast %535 : vector<1x8x60xf32> to vector<8x60xf32>
    %c7_230 = arith.constant 7 : index
    %c0_231 = arith.constant 0 : index
    %c0_232 = arith.constant 0 : index
    %537 = vector.load %arg4[%c7_230, %c0_231, %c0_232] : memref<9x3x120xf32, #tpu.memory_space<vmem>>, vector<1x3x120xf32>
    %538 = vector.shape_cast %537 : vector<1x3x120xf32> to vector<3x120xf32>
    %c7_233 = arith.constant 7 : index
    %c0_234 = arith.constant 0 : index
    %c0_235 = arith.constant 0 : index
    %539 = vector.load %arg3[%c7_233, %c0_234, %c0_235] : memref<9x60x120xf32, #tpu.memory_space<vmem>>, vector<1x60x120xf32>
    %540 = vector.shape_cast %539 : vector<1x60x120xf32> to vector<60x120xf32>
    %cst_236 = arith.constant dense<0.000000e+00> : vector<8x120xf32>
    %541 = tpu.matmul %536, %540, %cst_236 {dimension_numbers = #tpu.dot_dimension_numbers<[1], [0], [0], [1], [0, 0, 1, 1], [], []>} : vector<8x60xf32>, vector<60x120xf32>, vector<8x120xf32> -> vector<8x120xf32>
    %542 = vector.extract_strided_slice %538 {offsets = [0, 0], sizes = [1, 120], strides = [1, 1]} : vector<3x120xf32> to vector<1x120xf32>
    %543 = vector.broadcast %542 : vector<1x120xf32> to vector<8x120xf32>
    %544 = arith.addf %541, %543 : vector<8x120xf32>
    %545 = vector.extract_strided_slice %538 {offsets = [1, 0], sizes = [1, 120], strides = [1, 1]} : vector<3x120xf32> to vector<1x120xf32>
    %546 = vector.extract_strided_slice %538 {offsets = [2, 0], sizes = [1, 120], strides = [1, 1]} : vector<3x120xf32> to vector<1x120xf32>
    %cst_237 = arith.constant dense<0.000000e+00> : vector<8xf32>
    %547 = vector.multi_reduction <add>, %544, %cst_237 [1] : vector<8x120xf32> to vector<8xf32>
    %548 = vector.shape_cast %547 : vector<8xf32> to vector<8x1xf32>
    %cst_238 = arith.constant 0.00833333377 : f32
    %549 = vector.broadcast %cst_238 : f32 to vector<8x1xf32>
    %550 = arith.mulf %548, %549 : vector<8x1xf32>
    %551 = arith.mulf %544, %544 : vector<8x120xf32>
    %cst_239 = arith.constant dense<0.000000e+00> : vector<8xf32>
    %552 = vector.multi_reduction <add>, %551, %cst_239 [1] : vector<8x120xf32> to vector<8xf32>
    %553 = vector.shape_cast %552 : vector<8xf32> to vector<8x1xf32>
    %cst_240 = arith.constant 0.00833333377 : f32
    %554 = vector.broadcast %cst_240 : f32 to vector<8x1xf32>
    %555 = arith.mulf %553, %554 : vector<8x1xf32>
    %556 = arith.mulf %550, %550 : vector<8x1xf32>
    %557 = arith.subf %555, %556 : vector<8x1xf32>
    %558 = vector.broadcast %550 : vector<8x1xf32> to vector<8x120xf32>
    %559 = arith.subf %544, %558 : vector<8x120xf32>
    %cst_241 = arith.constant 9.99999974E-6 : f32
    %560 = vector.broadcast %cst_241 : f32 to vector<8x1xf32>
    %561 = arith.addf %557, %560 : vector<8x1xf32>
    %562 = math.rsqrt %561 : vector<8x1xf32>
    %563 = vector.broadcast %562 : vector<8x1xf32> to vector<8x120xf32>
    %564 = arith.mulf %559, %563 : vector<8x120xf32>
    %565 = vector.broadcast %545 : vector<1x120xf32> to vector<8x120xf32>
    %566 = arith.mulf %564, %565 : vector<8x120xf32>
    %567 = vector.broadcast %546 : vector<1x120xf32> to vector<8x120xf32>
    %568 = arith.addf %566, %567 : vector<8x120xf32>
    %cst_242 = arith.constant 0.00999999977 : f32
    %569 = vector.broadcast %cst_242 : f32 to vector<8x120xf32>
    %570 = arith.mulf %569, %568 : vector<8x120xf32>
    %571 = arith.maximumf %568, %570 : vector<8x120xf32>
    %c7_243 = arith.constant 7 : index
    %c0_244 = arith.constant 0 : index
    %c0_245 = arith.constant 0 : index
    %572 = vector.load %arg6[%c7_243, %c0_244, %c0_245] : memref<9x3x120xf32, #tpu.memory_space<vmem>>, vector<1x3x120xf32>
    %573 = vector.shape_cast %572 : vector<1x3x120xf32> to vector<3x120xf32>
    %c7_246 = arith.constant 7 : index
    %c0_247 = arith.constant 0 : index
    %c0_248 = arith.constant 0 : index
    %574 = vector.load %arg5[%c7_246, %c0_247, %c0_248] : memref<9x120x120xf32, #tpu.memory_space<vmem>>, vector<1x120x120xf32>
    %575 = vector.shape_cast %574 : vector<1x120x120xf32> to vector<120x120xf32>
    %cst_249 = arith.constant dense<0.000000e+00> : vector<8x120xf32>
    %576 = tpu.matmul %571, %575, %cst_249 {dimension_numbers = #tpu.dot_dimension_numbers<[1], [0], [0], [1], [0, 0, 1, 1], [], []>} : vector<8x120xf32>, vector<120x120xf32>, vector<8x120xf32> -> vector<8x120xf32>
    %577 = vector.extract_strided_slice %573 {offsets = [0, 0], sizes = [1, 120], strides = [1, 1]} : vector<3x120xf32> to vector<1x120xf32>
    %578 = vector.broadcast %577 : vector<1x120xf32> to vector<8x120xf32>
    %579 = arith.addf %576, %578 : vector<8x120xf32>
    %580 = vector.extract_strided_slice %573 {offsets = [1, 0], sizes = [1, 120], strides = [1, 1]} : vector<3x120xf32> to vector<1x120xf32>
    %581 = vector.extract_strided_slice %573 {offsets = [2, 0], sizes = [1, 120], strides = [1, 1]} : vector<3x120xf32> to vector<1x120xf32>
    %cst_250 = arith.constant dense<0.000000e+00> : vector<8xf32>
    %582 = vector.multi_reduction <add>, %579, %cst_250 [1] : vector<8x120xf32> to vector<8xf32>
    %583 = vector.shape_cast %582 : vector<8xf32> to vector<8x1xf32>
    %cst_251 = arith.constant 0.00833333377 : f32
    %584 = vector.broadcast %cst_251 : f32 to vector<8x1xf32>
    %585 = arith.mulf %583, %584 : vector<8x1xf32>
    %586 = arith.mulf %579, %579 : vector<8x120xf32>
    %cst_252 = arith.constant dense<0.000000e+00> : vector<8xf32>
    %587 = vector.multi_reduction <add>, %586, %cst_252 [1] : vector<8x120xf32> to vector<8xf32>
    %588 = vector.shape_cast %587 : vector<8xf32> to vector<8x1xf32>
    %cst_253 = arith.constant 0.00833333377 : f32
    %589 = vector.broadcast %cst_253 : f32 to vector<8x1xf32>
    %590 = arith.mulf %588, %589 : vector<8x1xf32>
    %591 = arith.mulf %585, %585 : vector<8x1xf32>
    %592 = arith.subf %590, %591 : vector<8x1xf32>
    %593 = vector.broadcast %585 : vector<8x1xf32> to vector<8x120xf32>
    %594 = arith.subf %579, %593 : vector<8x120xf32>
    %cst_254 = arith.constant 9.99999974E-6 : f32
    %595 = vector.broadcast %cst_254 : f32 to vector<8x1xf32>
    %596 = arith.addf %592, %595 : vector<8x1xf32>
    %597 = math.rsqrt %596 : vector<8x1xf32>
    %598 = vector.broadcast %597 : vector<8x1xf32> to vector<8x120xf32>
    %599 = arith.mulf %594, %598 : vector<8x120xf32>
    %600 = vector.broadcast %580 : vector<1x120xf32> to vector<8x120xf32>
    %601 = arith.mulf %599, %600 : vector<8x120xf32>
    %602 = vector.broadcast %581 : vector<1x120xf32> to vector<8x120xf32>
    %603 = arith.addf %601, %602 : vector<8x120xf32>
    %cst_255 = arith.constant 0.00999999977 : f32
    %604 = vector.broadcast %cst_255 : f32 to vector<8x120xf32>
    %605 = arith.mulf %604, %603 : vector<8x120xf32>
    %606 = arith.maximumf %603, %605 : vector<8x120xf32>
    %c7_256 = arith.constant 7 : index
    %c0_257 = arith.constant 0 : index
    %c0_258 = arith.constant 0 : index
    %607 = vector.load %arg7[%c7_256, %c0_257, %c0_258] : memref<9x120x256xf32, #tpu.memory_space<vmem>>, vector<1x120x256xf32>
    %608 = vector.shape_cast %607 : vector<1x120x256xf32> to vector<120x256xf32>
    %cst_259 = arith.constant dense<0.000000e+00> : vector<8x256xf32>
    %609 = tpu.matmul %606, %608, %cst_259 {dimension_numbers = #tpu.dot_dimension_numbers<[1], [0], [0], [1], [0, 0, 1, 1], [], []>} : vector<8x120xf32>, vector<120x256xf32>, vector<8x256xf32> -> vector<8x256xf32>
    %610 = arith.addf %534, %609 : vector<8x256xf32>
    %c8 = arith.constant 8 : index
    %c0_260 = arith.constant 0 : index
    %c0_261 = arith.constant 0 : index
    %611 = vector.load %arg1[%c8, %c0_260, %c0_261] : memref<9x8x60xf32, #tpu.memory_space<vmem>>, vector<1x8x60xf32>
    %612 = vector.shape_cast %611 : vector<1x8x60xf32> to vector<8x60xf32>
    %c8_262 = arith.constant 8 : index
    %c0_263 = arith.constant 0 : index
    %c0_264 = arith.constant 0 : index
    %613 = vector.load %arg4[%c8_262, %c0_263, %c0_264] : memref<9x3x120xf32, #tpu.memory_space<vmem>>, vector<1x3x120xf32>
    %614 = vector.shape_cast %613 : vector<1x3x120xf32> to vector<3x120xf32>
    %c8_265 = arith.constant 8 : index
    %c0_266 = arith.constant 0 : index
    %c0_267 = arith.constant 0 : index
    %615 = vector.load %arg3[%c8_265, %c0_266, %c0_267] : memref<9x60x120xf32, #tpu.memory_space<vmem>>, vector<1x60x120xf32>
    %616 = vector.shape_cast %615 : vector<1x60x120xf32> to vector<60x120xf32>
    %cst_268 = arith.constant dense<0.000000e+00> : vector<8x120xf32>
    %617 = tpu.matmul %612, %616, %cst_268 {dimension_numbers = #tpu.dot_dimension_numbers<[1], [0], [0], [1], [0, 0, 1, 1], [], []>} : vector<8x60xf32>, vector<60x120xf32>, vector<8x120xf32> -> vector<8x120xf32>
    %618 = vector.extract_strided_slice %614 {offsets = [0, 0], sizes = [1, 120], strides = [1, 1]} : vector<3x120xf32> to vector<1x120xf32>
    %619 = vector.broadcast %618 : vector<1x120xf32> to vector<8x120xf32>
    %620 = arith.addf %617, %619 : vector<8x120xf32>
    %621 = vector.extract_strided_slice %614 {offsets = [1, 0], sizes = [1, 120], strides = [1, 1]} : vector<3x120xf32> to vector<1x120xf32>
    %622 = vector.extract_strided_slice %614 {offsets = [2, 0], sizes = [1, 120], strides = [1, 1]} : vector<3x120xf32> to vector<1x120xf32>
    %cst_269 = arith.constant dense<0.000000e+00> : vector<8xf32>
    %623 = vector.multi_reduction <add>, %620, %cst_269 [1] : vector<8x120xf32> to vector<8xf32>
    %624 = vector.shape_cast %623 : vector<8xf32> to vector<8x1xf32>
    %cst_270 = arith.constant 0.00833333377 : f32
    %625 = vector.broadcast %cst_270 : f32 to vector<8x1xf32>
    %626 = arith.mulf %624, %625 : vector<8x1xf32>
    %627 = arith.mulf %620, %620 : vector<8x120xf32>
    %cst_271 = arith.constant dense<0.000000e+00> : vector<8xf32>
    %628 = vector.multi_reduction <add>, %627, %cst_271 [1] : vector<8x120xf32> to vector<8xf32>
    %629 = vector.shape_cast %628 : vector<8xf32> to vector<8x1xf32>
    %cst_272 = arith.constant 0.00833333377 : f32
    %630 = vector.broadcast %cst_272 : f32 to vector<8x1xf32>
    %631 = arith.mulf %629, %630 : vector<8x1xf32>
    %632 = arith.mulf %626, %626 : vector<8x1xf32>
    %633 = arith.subf %631, %632 : vector<8x1xf32>
    %634 = vector.broadcast %626 : vector<8x1xf32> to vector<8x120xf32>
    %635 = arith.subf %620, %634 : vector<8x120xf32>
    %cst_273 = arith.constant 9.99999974E-6 : f32
    %636 = vector.broadcast %cst_273 : f32 to vector<8x1xf32>
    %637 = arith.addf %633, %636 : vector<8x1xf32>
    %638 = math.rsqrt %637 : vector<8x1xf32>
    %639 = vector.broadcast %638 : vector<8x1xf32> to vector<8x120xf32>
    %640 = arith.mulf %635, %639 : vector<8x120xf32>
    %641 = vector.broadcast %621 : vector<1x120xf32> to vector<8x120xf32>
    %642 = arith.mulf %640, %641 : vector<8x120xf32>
    %643 = vector.broadcast %622 : vector<1x120xf32> to vector<8x120xf32>
    %644 = arith.addf %642, %643 : vector<8x120xf32>
    %cst_274 = arith.constant 0.00999999977 : f32
    %645 = vector.broadcast %cst_274 : f32 to vector<8x120xf32>
    %646 = arith.mulf %645, %644 : vector<8x120xf32>
    %647 = arith.maximumf %644, %646 : vector<8x120xf32>
    %c8_275 = arith.constant 8 : index
    %c0_276 = arith.constant 0 : index
    %c0_277 = arith.constant 0 : index
    %648 = vector.load %arg6[%c8_275, %c0_276, %c0_277] : memref<9x3x120xf32, #tpu.memory_space<vmem>>, vector<1x3x120xf32>
    %649 = vector.shape_cast %648 : vector<1x3x120xf32> to vector<3x120xf32>
    %c8_278 = arith.constant 8 : index
    %c0_279 = arith.constant 0 : index
    %c0_280 = arith.constant 0 : index
    %650 = vector.load %arg5[%c8_278, %c0_279, %c0_280] : memref<9x120x120xf32, #tpu.memory_space<vmem>>, vector<1x120x120xf32>
    %651 = vector.shape_cast %650 : vector<1x120x120xf32> to vector<120x120xf32>
    %cst_281 = arith.constant dense<0.000000e+00> : vector<8x120xf32>
    %652 = tpu.matmul %647, %651, %cst_281 {dimension_numbers = #tpu.dot_dimension_numbers<[1], [0], [0], [1], [0, 0, 1, 1], [], []>} : vector<8x120xf32>, vector<120x120xf32>, vector<8x120xf32> -> vector<8x120xf32>
    %653 = vector.extract_strided_slice %649 {offsets = [0, 0], sizes = [1, 120], strides = [1, 1]} : vector<3x120xf32> to vector<1x120xf32>
    %654 = vector.broadcast %653 : vector<1x120xf32> to vector<8x120xf32>
    %655 = arith.addf %652, %654 : vector<8x120xf32>
    %656 = vector.extract_strided_slice %649 {offsets = [1, 0], sizes = [1, 120], strides = [1, 1]} : vector<3x120xf32> to vector<1x120xf32>
    %657 = vector.extract_strided_slice %649 {offsets = [2, 0], sizes = [1, 120], strides = [1, 1]} : vector<3x120xf32> to vector<1x120xf32>
    %cst_282 = arith.constant dense<0.000000e+00> : vector<8xf32>
    %658 = vector.multi_reduction <add>, %655, %cst_282 [1] : vector<8x120xf32> to vector<8xf32>
    %659 = vector.shape_cast %658 : vector<8xf32> to vector<8x1xf32>
    %cst_283 = arith.constant 0.00833333377 : f32
    %660 = vector.broadcast %cst_283 : f32 to vector<8x1xf32>
    %661 = arith.mulf %659, %660 : vector<8x1xf32>
    %662 = arith.mulf %655, %655 : vector<8x120xf32>
    %cst_284 = arith.constant dense<0.000000e+00> : vector<8xf32>
    %663 = vector.multi_reduction <add>, %662, %cst_284 [1] : vector<8x120xf32> to vector<8xf32>
    %664 = vector.shape_cast %663 : vector<8xf32> to vector<8x1xf32>
    %cst_285 = arith.constant 0.00833333377 : f32
    %665 = vector.broadcast %cst_285 : f32 to vector<8x1xf32>
    %666 = arith.mulf %664, %665 : vector<8x1xf32>
    %667 = arith.mulf %661, %661 : vector<8x1xf32>
    %668 = arith.subf %666, %667 : vector<8x1xf32>
    %669 = vector.broadcast %661 : vector<8x1xf32> to vector<8x120xf32>
    %670 = arith.subf %655, %669 : vector<8x120xf32>
    %cst_286 = arith.constant 9.99999974E-6 : f32
    %671 = vector.broadcast %cst_286 : f32 to vector<8x1xf32>
    %672 = arith.addf %668, %671 : vector<8x1xf32>
    %673 = math.rsqrt %672 : vector<8x1xf32>
    %674 = vector.broadcast %673 : vector<8x1xf32> to vector<8x120xf32>
    %675 = arith.mulf %670, %674 : vector<8x120xf32>
    %676 = vector.broadcast %656 : vector<1x120xf32> to vector<8x120xf32>
    %677 = arith.mulf %675, %676 : vector<8x120xf32>
    %678 = vector.broadcast %657 : vector<1x120xf32> to vector<8x120xf32>
    %679 = arith.addf %677, %678 : vector<8x120xf32>
    %cst_287 = arith.constant 0.00999999977 : f32
    %680 = vector.broadcast %cst_287 : f32 to vector<8x120xf32>
    %681 = arith.mulf %680, %679 : vector<8x120xf32>
    %682 = arith.maximumf %679, %681 : vector<8x120xf32>
    %c8_288 = arith.constant 8 : index
    %c0_289 = arith.constant 0 : index
    %c0_290 = arith.constant 0 : index
    %683 = vector.load %arg7[%c8_288, %c0_289, %c0_290] : memref<9x120x256xf32, #tpu.memory_space<vmem>>, vector<1x120x256xf32>
    %684 = vector.shape_cast %683 : vector<1x120x256xf32> to vector<120x256xf32>
    %cst_291 = arith.constant dense<0.000000e+00> : vector<8x256xf32>
    %685 = tpu.matmul %682, %684, %cst_291 {dimension_numbers = #tpu.dot_dimension_numbers<[1], [0], [0], [1], [0, 0, 1, 1], [], []>} : vector<8x120xf32>, vector<120x256xf32>, vector<8x256xf32> -> vector<8x256xf32>
    %686 = arith.addf %610, %685 : vector<8x256xf32>
    %c0_292 = arith.constant 0 : index
    %c0_293 = arith.constant 0 : index
    %687 = vector.load %arg9[%c0_292, %c0_293] : memref<3x256xf32, #tpu.memory_space<vmem>>, vector<3x256xf32>
    %688 = vector.extract_strided_slice %687 {offsets = [0, 0], sizes = [1, 256], strides = [1, 1]} : vector<3x256xf32> to vector<1x256xf32>
    %689 = vector.broadcast %688 : vector<1x256xf32> to vector<8x256xf32>
    %690 = arith.addf %686, %689 : vector<8x256xf32>
    %691 = vector.extract_strided_slice %687 {offsets = [1, 0], sizes = [1, 256], strides = [1, 1]} : vector<3x256xf32> to vector<1x256xf32>
    %692 = vector.extract_strided_slice %687 {offsets = [2, 0], sizes = [1, 256], strides = [1, 1]} : vector<3x256xf32> to vector<1x256xf32>
    %cst_294 = arith.constant dense<0.000000e+00> : vector<8xf32>
    %693 = vector.multi_reduction <add>, %690, %cst_294 [1] : vector<8x256xf32> to vector<8xf32>
    %694 = vector.shape_cast %693 : vector<8xf32> to vector<8x1xf32>
    %cst_295 = arith.constant 3.906250e-03 : f32
    %695 = vector.broadcast %cst_295 : f32 to vector<8x1xf32>
    %696 = arith.mulf %694, %695 : vector<8x1xf32>
    %697 = arith.mulf %690, %690 : vector<8x256xf32>
    %cst_296 = arith.constant dense<0.000000e+00> : vector<8xf32>
    %698 = vector.multi_reduction <add>, %697, %cst_296 [1] : vector<8x256xf32> to vector<8xf32>
    %699 = vector.shape_cast %698 : vector<8xf32> to vector<8x1xf32>
    %cst_297 = arith.constant 3.906250e-03 : f32
    %700 = vector.broadcast %cst_297 : f32 to vector<8x1xf32>
    %701 = arith.mulf %699, %700 : vector<8x1xf32>
    %702 = arith.mulf %696, %696 : vector<8x1xf32>
    %703 = arith.subf %701, %702 : vector<8x1xf32>
    %704 = vector.broadcast %696 : vector<8x1xf32> to vector<8x256xf32>
    %705 = arith.subf %690, %704 : vector<8x256xf32>
    %cst_298 = arith.constant 9.99999974E-6 : f32
    %706 = vector.broadcast %cst_298 : f32 to vector<8x1xf32>
    %707 = arith.addf %703, %706 : vector<8x1xf32>
    %708 = math.rsqrt %707 : vector<8x1xf32>
    %709 = vector.broadcast %708 : vector<8x1xf32> to vector<8x256xf32>
    %710 = arith.mulf %705, %709 : vector<8x256xf32>
    %711 = vector.broadcast %691 : vector<1x256xf32> to vector<8x256xf32>
    %712 = arith.mulf %710, %711 : vector<8x256xf32>
    %713 = vector.broadcast %692 : vector<1x256xf32> to vector<8x256xf32>
    %714 = arith.addf %712, %713 : vector<8x256xf32>
    %cst_299 = arith.constant 0.00999999977 : f32
    %715 = vector.broadcast %cst_299 : f32 to vector<8x256xf32>
    %716 = arith.mulf %715, %714 : vector<8x256xf32>
    %717 = arith.maximumf %714, %716 : vector<8x256xf32>
    %c0_300 = arith.constant 0 : index
    %c0_301 = arith.constant 0 : index
    %718 = vector.load %arg11[%c0_300, %c0_301] : memref<3x256xf32, #tpu.memory_space<vmem>>, vector<3x256xf32>
    %c0_302 = arith.constant 0 : index
    %c0_303 = arith.constant 0 : index
    %719 = vector.load %arg10[%c0_302, %c0_303] : memref<256x256xf32, #tpu.memory_space<vmem>>, vector<256x256xf32>
    %cst_304 = arith.constant dense<0.000000e+00> : vector<8x256xf32>
    %720 = tpu.matmul %717, %719, %cst_304 {dimension_numbers = #tpu.dot_dimension_numbers<[1], [0], [0], [1], [0, 0, 1, 1], [], []>} : vector<8x256xf32>, vector<256x256xf32>, vector<8x256xf32> -> vector<8x256xf32>
    %721 = vector.extract_strided_slice %718 {offsets = [0, 0], sizes = [1, 256], strides = [1, 1]} : vector<3x256xf32> to vector<1x256xf32>
    %722 = vector.broadcast %721 : vector<1x256xf32> to vector<8x256xf32>
    %723 = arith.addf %720, %722 : vector<8x256xf32>
    %724 = vector.extract_strided_slice %718 {offsets = [1, 0], sizes = [1, 256], strides = [1, 1]} : vector<3x256xf32> to vector<1x256xf32>
    %725 = vector.extract_strided_slice %718 {offsets = [2, 0], sizes = [1, 256], strides = [1, 1]} : vector<3x256xf32> to vector<1x256xf32>
    %cst_305 = arith.constant dense<0.000000e+00> : vector<8xf32>
    %726 = vector.multi_reduction <add>, %723, %cst_305 [1] : vector<8x256xf32> to vector<8xf32>
    %727 = vector.shape_cast %726 : vector<8xf32> to vector<8x1xf32>
    %cst_306 = arith.constant 3.906250e-03 : f32
    %728 = vector.broadcast %cst_306 : f32 to vector<8x1xf32>
    %729 = arith.mulf %727, %728 : vector<8x1xf32>
    %730 = arith.mulf %723, %723 : vector<8x256xf32>
    %cst_307 = arith.constant dense<0.000000e+00> : vector<8xf32>
    %731 = vector.multi_reduction <add>, %730, %cst_307 [1] : vector<8x256xf32> to vector<8xf32>
    %732 = vector.shape_cast %731 : vector<8xf32> to vector<8x1xf32>
    %cst_308 = arith.constant 3.906250e-03 : f32
    %733 = vector.broadcast %cst_308 : f32 to vector<8x1xf32>
    %734 = arith.mulf %732, %733 : vector<8x1xf32>
    %735 = arith.mulf %729, %729 : vector<8x1xf32>
    %736 = arith.subf %734, %735 : vector<8x1xf32>
    %737 = vector.broadcast %729 : vector<8x1xf32> to vector<8x256xf32>
    %738 = arith.subf %723, %737 : vector<8x256xf32>
    %cst_309 = arith.constant 9.99999974E-6 : f32
    %739 = vector.broadcast %cst_309 : f32 to vector<8x1xf32>
    %740 = arith.addf %736, %739 : vector<8x1xf32>
    %741 = math.rsqrt %740 : vector<8x1xf32>
    %742 = vector.broadcast %741 : vector<8x1xf32> to vector<8x256xf32>
    %743 = arith.mulf %738, %742 : vector<8x256xf32>
    %744 = vector.broadcast %724 : vector<1x256xf32> to vector<8x256xf32>
    %745 = arith.mulf %743, %744 : vector<8x256xf32>
    %746 = vector.broadcast %725 : vector<1x256xf32> to vector<8x256xf32>
    %747 = arith.addf %745, %746 : vector<8x256xf32>
    %cst_310 = arith.constant 0.00999999977 : f32
    %748 = vector.broadcast %cst_310 : f32 to vector<8x256xf32>
    %749 = arith.mulf %748, %747 : vector<8x256xf32>
    %750 = arith.maximumf %747, %749 : vector<8x256xf32>
    %c0_311 = arith.constant 0 : index
    %c0_312 = arith.constant 0 : index
    %751 = vector.load %arg12[%c0_311, %c0_312] : memref<256x368xf32, #tpu.memory_space<vmem>>, vector<256x368xf32>
    %cst_313 = arith.constant dense<0.000000e+00> : vector<8x368xf32>
    %752 = tpu.matmul %750, %751, %cst_313 {dimension_numbers = #tpu.dot_dimension_numbers<[1], [0], [0], [1], [0, 0, 1, 1], [], []>} : vector<8x256xf32>, vector<256x368xf32>, vector<8x368xf32> -> vector<8x368xf32>
    %c0_314 = arith.constant 0 : index
    %c0_315 = arith.constant 0 : index
    %753 = vector.load %arg13[%c0_314, %c0_315] : memref<1x368xf32, #tpu.memory_space<vmem>>, vector<1x368xf32>
    %754 = vector.broadcast %753 : vector<1x368xf32> to vector<8x368xf32>
    %755 = arith.addf %752, %754 : vector<8x368xf32>
    %c0_316 = arith.constant 0 : index
    %c0_317 = arith.constant 0 : index
    %756 = vector.load %arg14[%c0_316, %c0_317] : memref<8x368xf32, #tpu.memory_space<vmem>>, vector<8x368xf32>
    tpu.vector_store %arg14[%c0_316, %c0_317], %755 {strides = array<i32>} : memref<8x368xf32, #tpu.memory_space<vmem>>, vector<8x368xf32>,
    return
  }
  func.func @transform_0(%arg0: i32) -> (i32, i32, i32) {
    %c0_i32 = arith.constant 0 : i32
    %c0_i32_0 = arith.constant 0 : i32
    %c0_i32_1 = arith.constant 0 : i32
    return %c0_i32, %arg0, %c0_i32_0 : i32, i32, i32
  }
  func.func @transform_1(%arg0: i32) -> (i32, i32) {
    %c0_i32 = arith.constant 0 : i32
    %c0_i32_0 = arith.constant 0 : i32
    return %arg0, %c0_i32 : i32, i32
  }
  func.func @transform_2(%arg0: i32) -> (i32, i32, i32) {
    %c0_i32 = arith.constant 0 : i32
    %c0_i32_0 = arith.constant 0 : i32
    %c0_i32_1 = arith.constant 0 : i32
    %c0_i32_2 = arith.constant 0 : i32
    return %c0_i32, %c0_i32_0, %c0_i32_1 : i32, i32, i32
  }
  func.func @transform_3(%arg0: i32) -> (i32, i32, i32) {
    %c0_i32 = arith.constant 0 : i32
    %c0_i32_0 = arith.constant 0 : i32
    %c0_i32_1 = arith.constant 0 : i32
    %c0_i32_2 = arith.constant 0 : i32
    return %c0_i32, %c0_i32_0, %c0_i32_1 : i32, i32, i32
  }
  func.func @transform_4(%arg0: i32) -> (i32, i32, i32) {
    %c0_i32 = arith.constant 0 : i32
    %c0_i32_0 = arith.constant 0 : i32
    %c0_i32_1 = arith.constant 0 : i32
    %c0_i32_2 = arith.constant 0 : i32
    return %c0_i32, %c0_i32_0, %c0_i32_1 : i32, i32, i32
  }
  func.func @transform_5(%arg0: i32) -> (i32, i32, i32) {
    %c0_i32 = arith.constant 0 : i32
    %c0_i32_0 = arith.constant 0 : i32
    %c0_i32_1 = arith.constant 0 : i32
    %c0_i32_2 = arith.constant 0 : i32
    return %c0_i32, %c0_i32_0, %c0_i32_1 : i32, i32, i32
  }
  func.func @transform_6(%arg0: i32) -> (i32, i32, i32) {
    %c0_i32 = arith.constant 0 : i32
    %c0_i32_0 = arith.constant 0 : i32
    %c0_i32_1 = arith.constant 0 : i32
    %c0_i32_2 = arith.constant 0 : i32
    return %c0_i32, %c0_i32_0, %c0_i32_1 : i32, i32, i32
  }
  func.func @transform_7(%arg0: i32) -> (i32, i32) {
    %c0_i32 = arith.constant 0 : i32
    %c0_i32_0 = arith.constant 0 : i32
    %c0_i32_1 = arith.constant 0 : i32
    return %c0_i32, %c0_i32_0 : i32, i32
  }
  func.func @transform_8(%arg0: i32) -> (i32, i32) {
    %c0_i32 = arith.constant 0 : i32
    %c0_i32_0 = arith.constant 0 : i32
    %c0_i32_1 = arith.constant 0 : i32
    return %c0_i32, %c0_i32_0 : i32, i32
  }
  func.func @transform_9(%arg0: i32) -> (i32, i32) {
    %c0_i32 = arith.constant 0 : i32
    %c0_i32_0 = arith.constant 0 : i32
    %c0_i32_1 = arith.constant 0 : i32
    return %c0_i32, %c0_i32_0 : i32, i32
  }
  func.func @transform_10(%arg0: i32) -> (i32, i32) {
    %c0_i32 = arith.constant 0 : i32
    %c0_i32_0 = arith.constant 0 : i32
    %c0_i32_1 = arith.constant 0 : i32
    return %c0_i32, %c0_i32_0 : i32, i32
  }
  func.func @transform_11(%arg0: i32) -> (i32, i32) {
    %c0_i32 = arith.constant 0 : i32
    %c0_i32_0 = arith.constant 0 : i32
    %c0_i32_1 = arith.constant 0 : i32
    return %c0_i32, %c0_i32_0 : i32, i32
  }
  func.func @transform_12(%arg0: i32) -> (i32, i32) {
    %c0_i32 = arith.constant 0 : i32
    %c0_i32_0 = arith.constant 0 : i32
    %c0_i32_1 = arith.constant 0 : i32
    return %c0_i32, %c0_i32_0 : i32, i32
  }
  func.func @transform_13(%arg0: i32) -> (i32, i32) {
    %c0_i32 = arith.constant 0 : i32
    %c0_i32_0 = arith.constant 0 : i32
    return %arg0, %c0_i32 : i32, i32
  }
}

</mosaic_0001>

<llo_original>
// kernel: leap_model_forward.1
$region0: #{leap_model_forward.1}
  #allocation0 [shape = 'u32[]', space=smem, size = 0x4, offset = 0x4, fixed_abs, tag = 'smem constant byte address 0x4 - core index']
  #allocation1 [shape = 'u32[144,128]{1,0:T(1,128)}', space=vmem, size = 0x12000, scoped, tag = 'internal scratch']
  %s0 = inlined_call_operand.vmem [shape: f32[9,12,60], index: 0, kind: input, shape index: {}]
  %s1 = inlined_call_operand.vmem [shape: f32[12,16], index: 1, kind: input, shape index: {}]
  %s2 = inlined_call_operand.vmem [shape: f32[9,60,120], index: 2, kind: input, shape index: {}]
  %s3 = inlined_call_operand.hbm [shape: f32[9,3,120], index: 3, kind: input, shape index: {}]
  %s4 = inlined_call_operand.vmem [shape: f32[9,120,120], index: 4, kind: input, shape index: {}]
  %s5 = inlined_call_operand.hbm [shape: f32[9,3,120], index: 5, kind: input, shape index: {}]
  %s6 = inlined_call_operand.hbm [shape: f32[9,120,256], index: 6, kind: input, shape index: {}]
  %s7 = inlined_call_operand.hbm [shape: f32[16,256], index: 7, kind: input, shape index: {}]
  %s8 = inlined_call_operand.hbm [shape: f32[3,256], index: 8, kind: input, shape index: {}]
  %s9 = inlined_call_operand.hbm [shape: f32[256,256], index: 9, kind: input, shape index: {}]
  %s10 = inlined_call_operand.hbm [shape: f32[3,256], index: 10, kind: input, shape index: {}]
  %s11 = inlined_call_operand.vmem [shape: f32[256,368], index: 11, kind: input, shape index: {}]
  %s12 = inlined_call_operand.hbm [shape: f32[1,368], index: 12, kind: input, shape index: {}]
  %s13 = inlined_call_operand.hbm [shape: f32[12,368], index: 13, kind: output, shape index: {}]
  %s14 = sld [smem:[#allocation0]]
  $region155: #{leap_model_forward.1} parent=0
    _
  %s16 = ssub.s32 1, %s14
  %s17 = scalar_select 0, %s16, %s14
  $region1: #{leap_model_forward.1} parent=0
    #allocation2 [shape = 'u8[73728]{0}', space=vmem, size = 0x12000, scoped, tag = 'input window, operand 0']
    #allocation3 [shape = 'u8[18432]{0}', space=vmem, size = 0x4800, scoped, tag = 'input window, operand 3, single buffered']
    #allocation4 [shape = 's32[2]{0}', space=sflag, size = 0x8, scoped, tag = 'scoped memory for leap_model_forward.1']
    #allocation5 [shape = 's32[2]{0}', space=sflag, size = 0x8, scoped, tag = 'scoped memory for leap_model_forward.1']
    #allocation6 [shape = 'u8[18432]{0}', space=vmem, size = 0x4800, scoped, tag = 'input window, operand 5, single buffered']
    #allocation7 [shape = 's32[1]{0}', space=sflag, size = 0x4, scoped, tag = 'scoped memory for leap_model_forward.1']
    #allocation8 [shape = 'u8[1105920]{0}', space=vmem, size = 0x10e000, scoped, tag = 'input window, operand 6, single buffered']
    #allocation9 [shape = 'u8[16384]{0}', space=vmem, size = 0x4000, scoped, tag = 'input window, operand 7, single buffered']
    #allocation10 [shape = 's32[1]{0}', space=sflag, size = 0x4, scoped, tag = 'scoped memory for leap_model_forward.1']
    #allocation11 [shape = 'u8[4096]{0}', space=vmem, size = 0x1000, scoped, tag = 'input window, operand 8, single buffered']
    #allocation12 [shape = 'u8[262144]{0}', space=vmem, size = 0x40000, scoped, tag = 'input window, operand 9, single buffered']
    #allocation13 [shape = 's32[1]{0}', space=sflag, size = 0x4, scoped, tag = 'scoped memory for leap_model_forward.1']
    #allocation14 [shape = 'u8[4096]{0}', space=vmem, size = 0x1000, scoped, tag = 'input window, operand 10, single buffered']
    #allocation15 [shape = 'u8[1536]{0}', space=vmem, size = 0x800, scoped, tag = 'input window, operand 12, single buffered']
    #allocation16 [shape = 's32[1]{0}', space=sflag, size = 0x4, scoped, tag = 'scoped memory for leap_model_forward.1']
    #allocation17 [shape = 'u8[24576]{0}', space=vmem, size = 0x6000, scoped, tag = 'output window, operand 0']
    %18 = vsyncpa [#allocation4], 0
    %19 = vsyncpa [#allocation7], 0
    %20 = vsyncpa [#allocation10], 0
    %21 = vsyncpa [#allocation13], 0
    %22 = vsyncpa [#allocation16], 0
    %23 = vsyncpa [#allocation5], 0
    %s24 = scalar_lea.sflag [#allocation5], 1
    %25 = vsyncpa %s24, 0
    loop: start=0, step=1, limit=4
    $region2: #{leap_model_forward.1} parent=1 // loop_pre_header
      _
    $region3: #{leap_model_forward.1} parent=1 // loop_header
      %s27 = sphi 0, %s31
      %p28 = scmp.ge.s32.totalorder %s27, 4
      %s37 = sphi 0, %s39
      %s40 = sphi 0, %s37
      %s41 = sphi 0, %s40
      %s57 = sphi 0, %s41
      %s63 = sphi 0, %s65
      %s66 = sphi 0, %s63
      %s67 = sphi 0, %s66
      %s83 = sphi 0, %s67
      %s87 = sphi 0, %s87
      %s89 = sphi 0, %s87
      %s90 = sphi 0, %s89
      %s104 = sphi 0, %s90
      %s108 = sphi 0, %s108
      %s110 = sphi 0, %s108
      %s111 = sphi 0, %s110
      %s125 = sphi 0, %s111
      %s129 = sphi 0, %s129
      %s131 = sphi 0, %s129
      %s132 = sphi 0, %s131
      %s146 = sphi 0, %s132
      %s150 = sphi 0, %s150
      %s152 = sphi 0, %s150
      %s153 = sphi 0, %s152
      %s167 = sphi 0, %s153
      %s171 = sphi 0, %s171
      %s173 = sphi 0, %s171
      %s174 = sphi 0, %s173
      %s188 = sphi 0, %s174
      %s192 = sphi 0, %s192
      %s194 = sphi 0, %s192
      %s195 = sphi 0, %s194
      %s209 = sphi 0, %s195
      %s213 = sphi 0, %s213
      %s215 = sphi 0, %s213
      %s216 = sphi 0, %s215
      %s230 = sphi 0, %s216
      %s234 = sphi 0, %s234
      %s236 = sphi 0, %s234
      %s237 = sphi 0, %s236
      %s251 = sphi 0, %s237
      %s255 = sphi 0, %s255
      %s257 = sphi 0, %s255
      %s258 = sphi 0, %s257
      %s272 = sphi 0, %s258
      %s276 = sphi 0, %s276
      %s278 = sphi 0, %s276
      %s279 = sphi 0, %s278
      %s293 = sphi 0, %s279
      %s297 = sphi 0, %s297
      %s299 = sphi 0, %s297
      %s300 = sphi 0, %s299
      %s314 = sphi 0, %s300
      %s320 = sphi 0, %s322
      %s323 = sphi 0, %s320
      %s324 = sphi 0, %s323
      %s340 = sphi 0, %s324
    $region4: #{leap_model_forward.1} parent=1 // loop_header_branch
      %30 = sbr.rel (%p28) target = $region8
    $region5: #{leap_model_forward.1} parent=1 // loop_body
      %s32 = ssub.s32 %s27, 1
      %s33 = ssub.s32 %s27, 2
      %s34 = sadd.s32 %s27, 1
      %s35 = ssub.s32 %s27, %s34
      %p36 = scmp.eq.s32.totalorder %s35, 0
      %s38 = sadd.s32 %s37, 1
      %s39 = scalar_select %p36, %s37, %s38
      %p42 = pneg %p36
      %p43 = scmp.eq.s32.totalorder %s27, 1
      %p44 = por %p42, %p43
      %p45 = scmp.ne.s32.totalorder %s37, %s40
      %p46 = scmp.eq.s32.totalorder %s27, 0
      %p47 = por %p45, %p46
      %p48 = scmp.ne.s32.totalorder %s37, %s40
      %p49 = scmp.eq.s32.totalorder %s32, 1
      %p50 = por %p48, %p49
      %p51 = scmp.ne.s32.totalorder %s40, %s41
      %p52 = scmp.eq.s32.totalorder %s32, 0
      %p53 = por %p51, %p52
      %p54 = scmp.ne.s32.totalorder %s40, %s41
      %p55 = scmp.eq.s32.totalorder %s33, 1
      %p56 = por %p54, %p55
      %p58 = scmp.ne.s32.totalorder %s41, %s57
      %p59 = scmp.eq.s32.totalorder %s33, 0
      %p60 = por %p58, %p59
      %s61 = ssub.s32 %s27, %s34
      %p62 = scmp.eq.s32.totalorder %s61, 0
      %s64 = sadd.s32 %s63, 1
      %s65 = scalar_select %p62, %s63, %s64
      %p68 = pneg %p62
      %p69 = scmp.eq.s32.totalorder %s27, 1
      %p70 = por %p68, %p69
      %p71 = scmp.ne.s32.totalorder %s63, %s66
      %p72 = scmp.eq.s32.totalorder %s27, 0
      %p73 = por %p71, %p72
      %p74 = scmp.ne.s32.totalorder %s63, %s66
      %p75 = scmp.eq.s32.totalorder %s32, 1
      %p76 = por %p74, %p75
      %p77 = scmp.ne.s32.totalorder %s66, %s67
      %p78 = scmp.eq.s32.totalorder %s32, 0
      %p79 = por %p77, %p78
      %p80 = scmp.ne.s32.totalorder %s66, %s67
      %p81 = scmp.eq.s32.totalorder %s33, 1
      %p82 = por %p80, %p81
      %p84 = scmp.ne.s32.totalorder %s67, %s83
      %p85 = scmp.eq.s32.totalorder %s33, 0
      %p86 = por %p84, %p85
      %s88 = sadd.s32 %s87, 1
      %p91 = scmp.eq.s32.totalorder %s27, 1
      %p92 = scmp.ne.s32.totalorder %s87, %s89
      %p93 = scmp.eq.s32.totalorder %s27, 0
      %p94 = por %p92, %p93
      %p95 = scmp.ne.s32.totalorder %s87, %s89
      %p96 = scmp.eq.s32.totalorder %s32, 1
      %p97 = por %p95, %p96
      %p98 = scmp.ne.s32.totalorder %s89, %s90
      %p99 = scmp.eq.s32.totalorder %s32, 0
      %p100 = por %p98, %p99
      %p101 = scmp.ne.s32.totalorder %s89, %s90
      %p102 = scmp.eq.s32.totalorder %s33, 1
      %p103 = por %p101, %p102
      %p105 = scmp.ne.s32.totalorder %s90, %s104
      %p106 = scmp.eq.s32.totalorder %s33, 0
      %p107 = por %p105, %p106
      %s109 = sadd.s32 %s108, 1
      %p112 = scmp.eq.s32.totalorder %s27, 1
      %p113 = scmp.ne.s32.totalorder %s108, %s110
      %p114 = scmp.eq.s32.totalorder %s27, 0
      %p115 = por %p113, %p114
      %p116 = scmp.ne.s32.totalorder %s108, %s110
      %p117 = scmp.eq.s32.totalorder %s32, 1
      %p118 = por %p116, %p117
      %p119 = scmp.ne.s32.totalorder %s110, %s111
      %p120 = scmp.eq.s32.totalorder %s32, 0
      %p121 = por %p119, %p120
      %p122 = scmp.ne.s32.totalorder %s110, %s111
      %p123 = scmp.eq.s32.totalorder %s33, 1
      %p124 = por %p122, %p123
      %p126 = scmp.ne.s32.totalorder %s111, %s125
      %p127 = scmp.eq.s32.totalorder %s33, 0
      %p128 = por %p126, %p127
      %s130 = sadd.s32 %s129, 1
      %p133 = scmp.eq.s32.totalorder %s27, 1
      %p134 = scmp.ne.s32.totalorder %s129, %s131
      %p135 = scmp.eq.s32.totalorder %s27, 0
      %p136 = por %p134, %p135
      %p137 = scmp.ne.s32.totalorder %s129, %s131
      %p138 = scmp.eq.s32.totalorder %s32, 1
      %p139 = por %p137, %p138
      %p140 = scmp.ne.s32.totalorder %s131, %s132
      %p141 = scmp.eq.s32.totalorder %s32, 0
      %p142 = por %p140, %p141
      %p143 = scmp.ne.s32.totalorder %s131, %s132
      %p144 = scmp.eq.s32.totalorder %s33, 1
      %p145 = por %p143, %p144
      %p147 = scmp.ne.s32.totalorder %s132, %s146
      %p148 = scmp.eq.s32.totalorder %s33, 0
      %p149 = por %p147, %p148
      %s151 = sadd.s32 %s150, 1
      %p154 = scmp.eq.s32.totalorder %s27, 1
      %p155 = scmp.ne.s32.totalorder %s150, %s152
      %p156 = scmp.eq.s32.totalorder %s27, 0
      %p157 = por %p155, %p156
      %p158 = scmp.ne.s32.totalorder %s150, %s152
      %p159 = scmp.eq.s32.totalorder %s32, 1
      %p160 = por %p158, %p159
      %p161 = scmp.ne.s32.totalorder %s152, %s153
      %p162 = scmp.eq.s32.totalorder %s32, 0
      %p163 = por %p161, %p162
      %p164 = scmp.ne.s32.totalorder %s152, %s153
      %p165 = scmp.eq.s32.totalorder %s33, 1
      %p166 = por %p164, %p165
      %p168 = scmp.ne.s32.totalorder %s153, %s167
      %p169 = scmp.eq.s32.totalorder %s33, 0
      %p170 = por %p168, %p169
      %s172 = sadd.s32 %s171, 1
      %p175 = scmp.eq.s32.totalorder %s27, 1
      %p176 = scmp.ne.s32.totalorder %s171, %s173
      %p177 = scmp.eq.s32.totalorder %s27, 0
      %p178 = por %p176, %p177
      %p179 = scmp.ne.s32.totalorder %s171, %s173
      %p180 = scmp.eq.s32.totalorder %s32, 1
      %p181 = por %p179, %p180
      %p182 = scmp.ne.s32.totalorder %s173, %s174
      %p183 = scmp.eq.s32.totalorder %s32, 0
      %p184 = por %p182, %p183
      %p185 = scmp.ne.s32.totalorder %s173, %s174
      %p186 = scmp.eq.s32.totalorder %s33, 1
      %p187 = por %p185, %p186
      %p189 = scmp.ne.s32.totalorder %s174, %s188
      %p190 = scmp.eq.s32.totalorder %s33, 0
      %p191 = por %p189, %p190
      %s193 = sadd.s32 %s192, 1
      %p196 = scmp.eq.s32.totalorder %s27, 1
      %p197 = scmp.ne.s32.totalorder %s192, %s194
      %p198 = scmp.eq.s32.totalorder %s27, 0
      %p199 = por %p197, %p198
      %p200 = scmp.ne.s32.totalorder %s192, %s194
      %p201 = scmp.eq.s32.totalorder %s32, 1
      %p202 = por %p200, %p201
      %p203 = scmp.ne.s32.totalorder %s194, %s195
      %p204 = scmp.eq.s32.totalorder %s32, 0
      %p205 = por %p203, %p204
      %p206 = scmp.ne.s32.totalorder %s194, %s195
      %p207 = scmp.eq.s32.totalorder %s33, 1
      %p208 = por %p206, %p207
      %p210 = scmp.ne.s32.totalorder %s195, %s209
      %p211 = scmp.eq.s32.totalorder %s33, 0
      %p212 = por %p210, %p211
      %s214 = sadd.s32 %s213, 1
      %p217 = scmp.eq.s32.totalorder %s27, 1
      %p218 = scmp.ne.s32.totalorder %s213, %s215
      %p219 = scmp.eq.s32.totalorder %s27, 0
      %p220 = por %p218, %p219
      %p221 = scmp.ne.s32.totalorder %s213, %s215
      %p222 = scmp.eq.s32.totalorder %s32, 1
      %p223 = por %p221, %p222
      %p224 = scmp.ne.s32.totalorder %s215, %s216
      %p225 = scmp.eq.s32.totalorder %s32, 0
      %p226 = por %p224, %p225
      %p227 = scmp.ne.s32.totalorder %s215, %s216
      %p228 = scmp.eq.s32.totalorder %s33, 1
      %p229 = por %p227, %p228
      %p231 = scmp.ne.s32.totalorder %s216, %s230
      %p232 = scmp.eq.s32.totalorder %s33, 0
      %p233 = por %p231, %p232
      %s235 = sadd.s32 %s234, 1
      %p238 = scmp.eq.s32.totalorder %s27, 1
      %p239 = scmp.ne.s32.totalorder %s234, %s236
      %p240 = scmp.eq.s32.totalorder %s27, 0
      %p241 = por %p239, %p240
      %p242 = scmp.ne.s32.totalorder %s234, %s236
      %p243 = scmp.eq.s32.totalorder %s32, 1
      %p244 = por %p242, %p243
      %p245 = scmp.ne.s32.totalorder %s236, %s237
      %p246 = scmp.eq.s32.totalorder %s32, 0
      %p247 = por %p245, %p246
      %p248 = scmp.ne.s32.totalorder %s236, %s237
      %p249 = scmp.eq.s32.totalorder %s33, 1
      %p250 = por %p248, %p249
      %p252 = scmp.ne.s32.totalorder %s237, %s251
      %p253 = scmp.eq.s32.totalorder %s33, 0
      %p254 = por %p252, %p253
      %s256 = sadd.s32 %s255, 1
      %p259 = scmp.eq.s32.totalorder %s27, 1
      %p260 = scmp.ne.s32.totalorder %s255, %s257
      %p261 = scmp.eq.s32.totalorder %s27, 0
      %p262 = por %p260, %p261
      %p263 = scmp.ne.s32.totalorder %s255, %s257
      %p264 = scmp.eq.s32.totalorder %s32, 1
      %p265 = por %p263, %p264
      %p266 = scmp.ne.s32.totalorder %s257, %s258
      %p267 = scmp.eq.s32.totalorder %s32, 0
      %p268 = por %p266, %p267
      %p269 = scmp.ne.s32.totalorder %s257, %s258
      %p270 = scmp.eq.s32.totalorder %s33, 1
      %p271 = por %p269, %p270
      %p273 = scmp.ne.s32.totalorder %s258, %s272
      %p274 = scmp.eq.s32.totalorder %s33, 0
      %p275 = por %p273, %p274
      %s277 = sadd.s32 %s276, 1
      %p280 = scmp.eq.s32.totalorder %s27, 1
      %p281 = scmp.ne.s32.totalorder %s276, %s278
      %p282 = scmp.eq.s32.totalorder %s27, 0
      %p283 = por %p281, %p282
      %p284 = scmp.ne.s32.totalorder %s276, %s278
      %p285 = scmp.eq.s32.totalorder %s32, 1
      %p286 = por %p284, %p285
      %p287 = scmp.ne.s32.totalorder %s278, %s279
      %p288 = scmp.eq.s32.totalorder %s32, 0
      %p289 = por %p287, %p288
      %p290 = scmp.ne.s32.totalorder %s278, %s279
      %p291 = scmp.eq.s32.totalorder %s33, 1
      %p292 = por %p290, %p291
      %p294 = scmp.ne.s32.totalorder %s279, %s293
      %p295 = scmp.eq.s32.totalorder %s33, 0
      %p296 = por %p294, %p295
      %s298 = sadd.s32 %s297, 1
      %p301 = scmp.eq.s32.totalorder %s27, 1
      %p302 = scmp.ne.s32.totalorder %s297, %s299
      %p303 = scmp.eq.s32.totalorder %s27, 0
      %p304 = por %p302, %p303
      %p305 = scmp.ne.s32.totalorder %s297, %s299
      %p306 = scmp.eq.s32.totalorder %s32, 1
      %p307 = por %p305, %p306
      %p308 = scmp.ne.s32.totalorder %s299, %s300
      %p309 = scmp.eq.s32.totalorder %s32, 0
      %p310 = por %p308, %p309
      %p311 = scmp.ne.s32.totalorder %s299, %s300
      %p312 = scmp.eq.s32.totalorder %s33, 1
      %p313 = por %p311, %p312
      %p315 = scmp.ne.s32.totalorder %s300, %s314
      %p316 = scmp.eq.s32.totalorder %s33, 0
      %p317 = por %p315, %p316
      %s318 = ssub.s32 %s27, %s34
      %p319 = scmp.eq.s32.totalorder %s318, 0
      %s321 = sadd.s32 %s320, 1
      %s322 = scalar_select %p319, %s320, %s321
      %p325 = pneg %p319
      %p326 = scmp.eq.s32.totalorder %s27, 1
      %p327 = por %p325, %p326
      %p328 = scmp.ne.s32.totalorder %s320, %s323
      %p329 = scmp.eq.s32.totalorder %s27, 0
      %p330 = por %p328, %p329
      %p331 = scmp.ne.s32.totalorder %s320, %s323
      %p332 = scmp.eq.s32.totalorder %s32, 1
      %p333 = por %p331, %p332
      %p334 = scmp.ne.s32.totalorder %s323, %s324
      %p335 = scmp.eq.s32.totalorder %s32, 0
      %p336 = por %p334, %p335
      %p337 = scmp.ne.s32.totalorder %s323, %s324
      %p338 = scmp.eq.s32.totalorder %s33, 1
      %p339 = por %p337, %p338
      %p341 = scmp.ne.s32.totalorder %s324, %s340
      %p342 = scmp.eq.s32.totalorder %s33, 0
      %p343 = por %p341, %p342
      %p344 = scmp.le.s32.totalorder 1, %s27
      %p345 = scmp.lt.s32.totalorder %s27, 3
      %p346 = pnand %p344, %p345
      %p347 = pneg %p346
      // Predicated region
      $region9: #{leap_model_forward.1} parent=5 // pred_check
        _
      $region10: #{leap_model_forward.1} parent=5 // pred_check_branch
        %349 = sbr.rel (%p346) target = $region12
      $region11: #{leap_model_forward.1} parent=5 // pred_region
        %s350 = ssub.s32 %s27, 1
        // Predicated region
        $region13: #{leap_model_forward.1} parent=11 // pred_check
          %p351 = pneg %p100
        $region14: #{leap_model_forward.1} parent=11 // pred_check_branch
          %353 = sbr.rel (%p351) target = $region16
        $region15: #{leap_model_forward.1} parent=11 // pred_region
          _
        $region16: #{leap_model_forward.1} parent=11 // pred_fallthru
          _
        // Predicated region
        $region17: #{leap_model_forward.1} parent=11 // pred_check
          %p354 = pneg %p121
        $region18: #{leap_model_forward.1} parent=11 // pred_check_branch
          %356 = sbr.rel (%p354) target = $region20
        $region19: #{leap_model_forward.1} parent=11 // pred_region
          %s358 = ssub.s32 576, 576
          %359 = vsyncadd [#allocation4], %s358
          %s360 = sshll.u32 [#allocation3], 4
          %s361 = int_to_ptr.vmem [resolvable:$true] %s360
          %366 = dma.hbm_to_vmem [thread:$0]  %s3, 576, %s361, [#allocation4], 64, 64, 4
        $region20: #{leap_model_forward.1} parent=11 // pred_fallthru
          _
        // Predicated region
        $region21: #{leap_model_forward.1} parent=11 // pred_check
          %p367 = pneg %p142
        $region22: #{leap_model_forward.1} parent=11 // pred_check_branch
          %369 = sbr.rel (%p367) target = $region24
        $region23: #{leap_model_forward.1} parent=11 // pred_region
          _
        $region24: #{leap_model_forward.1} parent=11 // pred_fallthru
          _
        // Predicated region
        $region25: #{leap_model_forward.1} parent=11 // pred_check
          %p370 = pneg %p163
        $region26: #{leap_model_forward.1} parent=11 // pred_check_branch
          %372 = sbr.rel (%p370) target = $region28
        $region27: #{leap_model_forward.1} parent=11 // pred_region
          %s374 = ssub.s32 576, 576
          %375 = vsyncadd [#allocation7], %s374
          %s376 = sshll.u32 [#allocation6], 4
          %s377 = int_to_ptr.vmem [resolvable:$true] %s376
          %382 = dma.hbm_to_vmem [thread:$0]  %s5, 576, %s377, [#allocation7], 64, 64, 4
        $region28: #{leap_model_forward.1} parent=11 // pred_fallthru
          _
        // Predicated region
        $region29: #{leap_model_forward.1} parent=11 // pred_check
          %p383 = pneg %p184
        $region30: #{leap_model_forward.1} parent=11 // pred_check_branch
          %385 = sbr.rel (%p383) target = $region32
        $region31: #{leap_model_forward.1} parent=11 // pred_region
          %s387 = ssub.s32 34560, 34560
          %388 = vsyncadd [#allocation7], %s387
          %s389 = sshll.u32 [#allocation8], 4
          %s390 = int_to_ptr.vmem [resolvable:$true] %s389
          %395 = dma.hbm_to_vmem [thread:$0]  %s6, 34560, %s390, [#allocation7], 256, 256, 16
        $region32: #{leap_model_forward.1} parent=11 // pred_fallthru
          _
        // Predicated region
        $region33: #{leap_model_forward.1} parent=11 // pred_check
          %p396 = pneg %p205
        $region34: #{leap_model_forward.1} parent=11 // pred_check_branch
          %398 = sbr.rel (%p396) target = $region36
        $region35: #{leap_model_forward.1} parent=11 // pred_region
          %s400 = ssub.s32 512, 512
          %401 = vsyncadd [#allocation10], %s400
          %s402 = sshll.u32 [#allocation9], 4
          %s403 = int_to_ptr.vmem [resolvable:$true] %s402
          %408 = dma.hbm_to_vmem [thread:$0]  %s7, 512, %s403, [#allocation10], 256, 256, 16
        $region36: #{leap_model_forward.1} parent=11 // pred_fallthru
          _
        // Predicated region
        $region37: #{leap_model_forward.1} parent=11 // pred_check
          %p409 = pneg %p226
        $region38: #{leap_model_forward.1} parent=11 // pred_check_branch
          %411 = sbr.rel (%p409) target = $region40
        $region39: #{leap_model_forward.1} parent=11 // pred_region
          %s413 = ssub.s32 128, 128
          %414 = vsyncadd [#allocation10], %s413
          %s416 = sshll.u32 [#allocation11], 4
          %s417 = int_to_ptr.vmem [resolvable:$true] %s416
          %419 = dma.hbm_to_vmem [thread:$0]  %s8, 128, %s417, [#allocation10]
        $region40: #{leap_model_forward.1} parent=11 // pred_fallthru
          _
        // Predicated region
        $region41: #{leap_model_forward.1} parent=11 // pred_check
          %p420 = pneg %p247
        $region42: #{leap_model_forward.1} parent=11 // pred_check_branch
          %422 = sbr.rel (%p420) target = $region44
        $region43: #{leap_model_forward.1} parent=11 // pred_region
          %s424 = ssub.s32 8192, 8192
          %425 = vsyncadd [#allocation13], %s424
          %s426 = sshll.u32 [#allocation12], 4
          %s427 = int_to_ptr.vmem [resolvable:$true] %s426
          %432 = dma.hbm_to_vmem [thread:$0]  %s9, 8192, %s427, [#allocation13], 256, 256, 16
        $region44: #{leap_model_forward.1} parent=11 // pred_fallthru
          _
        // Predicated region
        $region45: #{leap_model_forward.1} parent=11 // pred_check
          %p433 = pneg %p268
        $region46: #{leap_model_forward.1} parent=11 // pred_check_branch
          %435 = sbr.rel (%p433) target = $region48
        $region47: #{leap_model_forward.1} parent=11 // pred_region
          %s437 = ssub.s32 128, 128
          %438 = vsyncadd [#allocation13], %s437
          %s440 = sshll.u32 [#allocation14], 4
          %s441 = int_to_ptr.vmem [resolvable:$true] %s440
          %443 = dma.hbm_to_vmem [thread:$0]  %s10, 128, %s441, [#allocation13]
        $region48: #{leap_model_forward.1} parent=11 // pred_fallthru
          _
        // Predicated region
        $region49: #{leap_model_forward.1} parent=11 // pred_check
          %p444 = pneg %p289
        $region50: #{leap_model_forward.1} parent=11 // pred_check_branch
          %446 = sbr.rel (%p444) target = $region52
        $region51: #{leap_model_forward.1} parent=11 // pred_region
          _
        $region52: #{leap_model_forward.1} parent=11 // pred_fallthru
          _
        // Predicated region
        $region53: #{leap_model_forward.1} parent=11 // pred_check
          %p447 = pneg %p310
        $region54: #{leap_model_forward.1} parent=11 // pred_check_branch
          %449 = sbr.rel (%p447) target = $region56
        $region55: #{leap_model_forward.1} parent=11 // pred_region
          %s451 = ssub.s32 48, 48
          %452 = vsyncadd [#allocation16], %s451
          %s454 = sshll.u32 [#allocation15], 4
          %s455 = int_to_ptr.vmem [resolvable:$true] %s454
          %457 = dma.hbm_to_vmem [thread:$0]  %s12, 48, %s455, [#allocation16]
        $region56: #{leap_model_forward.1} parent=11 // pred_fallthru
          _
      $region12: #{leap_model_forward.1} parent=5 // pred_fallthru
        _
      %p458 = scmp.lt.s32.totalorder %s27, 2
      // Predicated region
      $region57: #{leap_model_forward.1} parent=5 // pred_check
        %p459 = pneg %p458
      $region58: #{leap_model_forward.1} parent=5 // pred_check_branch
        %461 = sbr.rel (%p459) target = $region60
      $region59: #{leap_model_forward.1} parent=5 // pred_region
        // Predicated region
        $region61: #{leap_model_forward.1} parent=59 // pred_check
          %p462 = pneg %p47
        $region62: #{leap_model_forward.1} parent=59 // pred_check_branch
          %464 = sbr.rel (%p462) target = $region64
        $region63: #{leap_model_forward.1} parent=59 // pred_region
          %s465 = sand.u32 %s37, 1
          %s466 = sand.u32 %s37, 1
          %s467 = smul.addr %s466, 72
          %s468 = scalar_lea.vmem [#allocation2], %s467
          %s469 = smul.addr %s27, 8
          %s470 = scalar_lea.vmem %s0, %s469
          // Predicated region
          $region65: #{leap_model_forward.1} parent=63 // pred_check
            _
          $region66: #{leap_model_forward.1} parent=63 // pred_check_branch
            %472 = sbr.rel (0) target = $region68
          $region67: #{leap_model_forward.1} parent=63 // pred_region
            // Predicated region
            $region69: #{leap_model_forward.1} parent=67 // pred_check
              _
            $region70: #{leap_model_forward.1} parent=67 // pred_check_branch
              %474 = sbr.rel (0) target = $region72
            $region71: #{leap_model_forward.1} parent=67 // pred_region
              // Predicated region
              $region84: #{leap_model_forward.1} parent=71 // pred_check
                _
              $region85: #{leap_model_forward.1} parent=71 // pred_check_branch
                %506 = sbr.rel (0) target = $region87
              $region86: #{leap_model_forward.1} parent=71 // pred_region
                loop: start=0, step=1, limit=1
                $region88: #{leap_model_forward.1} parent=86 // loop_pre_header
                  _
                $region89: #{leap_model_forward.1} parent=86 // loop_header
                  %s508 = sphi 0, %s512
                  %p509 = scmp.ge.s32.totalorder %s508, 1
                  %s513 = sphi %s470, %s470
                  %s514 = sphi %s468, %s468
                $region90: #{leap_model_forward.1} parent=86 // loop_header_branch
                  %511 = sbr.rel (%p509) target = $region94
                $region91: #{leap_model_forward.1} parent=86 // loop_body
                  %v515 = vld [vmem:[%s513] sm:$0xff]
                  %516 = vst [vmem:[%s514] sm:$0xff] %v515
                  %v517 = vld [vmem:[%s513 + $0x10] sm:$0xff]
                  %518 = vst [vmem:[%s514 + $0x8] sm:$0xff] %v517
                  %v519 = vld [vmem:[%s513 + $0x20] sm:$0xff]
                  %520 = vst [vmem:[%s514 + $0x10] sm:$0xff] %v519
                  %v521 = vld [vmem:[%s513 + $0x30] sm:$0xff]
                  %522 = vst [vmem:[%s514 + $0x18] sm:$0xff] %v521
                  %v523 = vld [vmem:[%s513 + $0x40] sm:$0xff]
                  %524 = vst [vmem:[%s514 + $0x20] sm:$0xff] %v523
                  %v525 = vld [vmem:[%s513 + $0x50] sm:$0xff]
                  %526 = vst [vmem:[%s514 + $0x28] sm:$0xff] %v525
                  %v527 = vld [vmem:[%s513 + $0x60] sm:$0xff]
                  %528 = vst [vmem:[%s514 + $0x30] sm:$0xff] %v527
                  %v529 = vld [vmem:[%s513 + $0x70] sm:$0xff]
                  %530 = vst [vmem:[%s514 + $0x38] sm:$0xff] %v529
                  %v531 = vld [vmem:[%s513 + $0x80] sm:$0xff]
                  %532 = vst [vmem:[%s514 + $0x40] sm:$0xff] %v531
                $region92: #{leap_model_forward.1} parent=86 // loop_footer
                  %s512 = sadd.s32 1, %s508
                $region93: #{leap_model_forward.1} parent=86 // loop_footer_branch
                  %507 = sbr.rel target = $region89
                $region94: #{leap_model_forward.1} parent=86 // loop_exit
                  _
              $region87: #{leap_model_forward.1} parent=71 // pred_fallthru
                _
              // Predicated region
              $region95: #{leap_model_forward.1} parent=71 // pred_check
                _
              $region96: #{leap_model_forward.1} parent=71 // pred_check_branch
                %534 = sbr.rel target = $region98
              $region97: #{leap_model_forward.1} parent=71 // pred_region
                _
              $region98: #{leap_model_forward.1} parent=71 // pred_fallthru
                _
            $region72: #{leap_model_forward.1} parent=67 // pred_fallthru
              _
            // Predicated region
            $region73: #{leap_model_forward.1} parent=67 // pred_check
              _
            $region74: #{leap_model_forward.1} parent=67 // pred_check_branch
              %476 = sbr.rel target = $region76
            $region75: #{leap_model_forward.1} parent=67 // pred_region
              %s478 = ssub.s32 256, 1
              loop: start=0, step=1, limit=1
              $region77: #{leap_model_forward.1} parent=75 // loop_pre_header
                _
              $region78: #{leap_model_forward.1} parent=75 // loop_header
                %s480 = sphi 0, %s484
                %p481 = scmp.ge.s32.totalorder %s480, 1
                %s485 = sphi %s470, %s470
                %s486 = sphi %s468, %s468
              $region79: #{leap_model_forward.1} parent=75 // loop_header_branch
                %483 = sbr.rel (%p481) target = $region83
              $region80: #{leap_model_forward.1} parent=75 // loop_body
                %v487 = vld [vmem:[%s485] sm:%s478]
                %488 = vst [vmem:[%s486] sm:%s478] %v487
                %v489 = vld [vmem:[%s485 + $0x10] sm:%s478]
                %490 = vst [vmem:[%s486 + $0x8] sm:%s478] %v489
                %v491 = vld [vmem:[%s485 + $0x20] sm:%s478]
                %492 = vst [vmem:[%s486 + $0x10] sm:%s478] %v491
                %v493 = vld [vmem:[%s485 + $0x30] sm:%s478]
                %494 = vst [vmem:[%s486 + $0x18] sm:%s478] %v493
                %v495 = vld [vmem:[%s485 + $0x40] sm:%s478]
                %496 = vst [vmem:[%s486 + $0x20] sm:%s478] %v495
                %v497 = vld [vmem:[%s485 + $0x50] sm:%s478]
                %498 = vst [vmem:[%s486 + $0x28] sm:%s478] %v497
                %v499 = vld [vmem:[%s485 + $0x60] sm:%s478]
                %500 = vst [vmem:[%s486 + $0x30] sm:%s478] %v499
                %v501 = vld [vmem:[%s485 + $0x70] sm:%s478]
                %502 = vst [vmem:[%s486 + $0x38] sm:%s478] %v501
                %v503 = vld [vmem:[%s485 + $0x80] sm:%s478]
                %504 = vst [vmem:[%s486 + $0x40] sm:%s478] %v503
              $region81: #{leap_model_forward.1} parent=75 // loop_footer
                %s484 = sadd.s32 1, %s480
              $region82: #{leap_model_forward.1} parent=75 // loop_footer_branch
                %479 = sbr.rel target = $region78
              $region83: #{leap_model_forward.1} parent=75 // loop_exit
                _
            $region76: #{leap_model_forward.1} parent=67 // pred_fallthru
              _
          $region68: #{leap_model_forward.1} parent=63 // pred_fallthru
            _
          %535 = vnop
        $region64: #{leap_model_forward.1} parent=59 // pred_fallthru
          _
        // Predicated region
        $region99: #{leap_model_forward.1} parent=59 // pred_check
          %p536 = pneg %p73
        $region100: #{leap_model_forward.1} parent=59 // pred_check_branch
          %538 = sbr.rel (%p536) target = $region102
        $region101: #{leap_model_forward.1} parent=59 // pred_region
          %p539 = scmp.lt.s32.totalorder %s27, 1
          %s540 = scalar_select %p539, %s27, 1
          %s541 = smul.addr %s540, 8
          %s542 = scalar_lea.vmem %s1, %s541
        $region102: #{leap_model_forward.1} parent=59 // pred_fallthru
          _
      $region60: #{leap_model_forward.1} parent=5 // pred_fallthru
        _
      %p543 = scmp.le.s32.totalorder 1, %s27
      %p544 = scmp.lt.s32.totalorder %s27, 3
      %p545 = pnand %p543, %p544
      %p546 = pneg %p545
      // Predicated region
      $region103: #{leap_model_forward.1} parent=5 // pred_check
        _
      $region104: #{leap_model_forward.1} parent=5 // pred_check_branch
        %548 = sbr.rel (%p545) target = $region106
      $region105: #{leap_model_forward.1} parent=5 // pred_region
        %s549 = ssub.s32 %s27, 1
        %s550 = sand.u32 %s40, 1
        %s551 = sand.u32 %s40, 1
        %s552 = smul.addr %s551, 72
        %s553 = scalar_lea.vmem [#allocation2], %s552
        // Predicated region
        $region107: #{leap_model_forward.1} parent=105 // pred_check
          %p554 = pneg %p53
        $region108: #{leap_model_forward.1} parent=105 // pred_check_branch
          %556 = sbr.rel (%p554) target = $region110
        $region109: #{leap_model_forward.1} parent=105 // pred_region
          _
        $region110: #{leap_model_forward.1} parent=105 // pred_fallthru
          _
        // Predicated region
        $region111: #{leap_model_forward.1} parent=105 // pred_check
          %p557 = pneg %p121
        $region112: #{leap_model_forward.1} parent=105 // pred_check_branch
          %559 = sbr.rel (%p557) target = $region114
        $region113: #{leap_model_forward.1} parent=105 // pred_region
          %560 = dma.done [#allocation4], 576
        $region114: #{leap_model_forward.1} parent=105 // pred_fallthru
          _
        // Predicated region
        $region115: #{leap_model_forward.1} parent=105 // pred_check
          %p561 = pneg %p163
        $region116: #{leap_model_forward.1} parent=105 // pred_check_branch
          %563 = sbr.rel (%p561) target = $region118
        $region117: #{leap_model_forward.1} parent=105 // pred_region
          %564 = dma.done [#allocation7], 576
        $region118: #{leap_model_forward.1} parent=105 // pred_fallthru
          _
        // Predicated region
        $region119: #{leap_model_forward.1} parent=105 // pred_check
          %p565 = pneg %p184
        $region120: #{leap_model_forward.1} parent=105 // pred_check_branch
          %567 = sbr.rel (%p565) target = $region122
        $region121: #{leap_model_forward.1} parent=105 // pred_region
          %568 = dma.done [#allocation7], 34560
        $region122: #{leap_model_forward.1} parent=105 // pred_fallthru
          _
        // Predicated region
        $region123: #{leap_model_forward.1} parent=105 // pred_check
          %p569 = pneg %p205
        $region124: #{leap_model_forward.1} parent=105 // pred_check_branch
          %571 = sbr.rel (%p569) target = $region126
        $region125: #{leap_model_forward.1} parent=105 // pred_region
          %572 = dma.done [#allocation10], 512
        $region126: #{leap_model_forward.1} parent=105 // pred_fallthru
          _
        // Predicated region
        $region127: #{leap_model_forward.1} parent=105 // pred_check
          %p573 = pneg %p226
        $region128: #{leap_model_forward.1} parent=105 // pred_check_branch
          %575 = sbr.rel (%p573) target = $region130
        $region129: #{leap_model_forward.1} parent=105 // pred_region
          %576 = dma.done [#allocation10], 128
        $region130: #{leap_model_forward.1} parent=105 // pred_fallthru
          _
        // Predicated region
        $region131: #{leap_model_forward.1} parent=105 // pred_check
          %p577 = pneg %p247
        $region132: #{leap_model_forward.1} parent=105 // pred_check_branch
          %579 = sbr.rel (%p577) target = $region134
        $region133: #{leap_model_forward.1} parent=105 // pred_region
          %580 = dma.done [#allocation13], 8192
        $region134: #{leap_model_forward.1} parent=105 // pred_fallthru
          _
        // Predicated region
        $region135: #{leap_model_forward.1} parent=105 // pred_check
          %p581 = pneg %p268
        $region136: #{leap_model_forward.1} parent=105 // pred_check_branch
          %583 = sbr.rel (%p581) target = $region138
        $region137: #{leap_model_forward.1} parent=105 // pred_region
          %584 = dma.done [#allocation13], 128
        $region138: #{leap_model_forward.1} parent=105 // pred_fallthru
          _
        // Predicated region
        $region139: #{leap_model_forward.1} parent=105 // pred_check
          %p585 = pneg %p310
        $region140: #{leap_model_forward.1} parent=105 // pred_check_branch
          %587 = sbr.rel (%p585) target = $region142
        $region141: #{leap_model_forward.1} parent=105 // pred_region
          %588 = dma.done [#allocation16], 48
        $region142: #{leap_model_forward.1} parent=105 // pred_fallthru
          _
        %s589 = sand.u32 %s40, 1
        %s590 = sand.u32 %s40, 1
        %s591 = smul.addr %s590, 72
        %s592 = scalar_lea.vmem [#allocation2], %s591
        %p593 = pneg %p53
        %p594 = pneg %p50
        %p595 = scmp.lt.s32.totalorder %s32, 1
        %s596 = scalar_select %p595, %s32, 1
        %s597 = smul.addr %s596, 8
        %s598 = scalar_lea.vmem %s1, %s597
        %p599 = pneg %p79
        %p600 = pneg %p76
        %p601 = pneg %p100
        %p602 = pneg %p97
        %p603 = pneg %p121
        %p604 = pneg %p118
        %p605 = pneg %p142
        %p606 = pneg %p139
        %p607 = pneg %p163
        %p608 = pneg %p160
        %p609 = pneg %p184
        %p610 = pneg %p181
        %p611 = pneg %p205
        %p612 = pneg %p202
        %p613 = pneg %p226
        %p614 = pneg %p223
        %p615 = pneg %p247
        %p616 = pneg %p244
        %p617 = pneg %p268
        %p618 = pneg %p265
        %p619 = pneg %p289
        %p620 = pneg %p286
        %p621 = pneg %p310
        %p622 = pneg %p307
        %p623 = pneg %p336
        %p624 = pneg %p333
        %s625 = sand.u32 %s323, 1
        %s626 = scalar_lea.sflag [#allocation5], %s625
        %s627 = sand.u32 %s323, 1
        %s628 = smul.addr %s627, 24
        %s629 = scalar_lea.vmem [#allocation17], %s628
        %p630 = scmp.lt.s32.totalorder %s32, 1
        %s631 = scalar_select %p630, %s32, 1
        %s632 = smul.addr %s631, 8
        %s633 = scalar_lea.vmem %s1, %s632
        %v634 = vld [vmem:[%s633] sm:$0xff]
        %v635 = vld [vmem:[#allocation9] sm:$0xff]
        %v636 = vld [vmem:[#allocation9 + $0x8] sm:$0xff]
        %v637 = vld [vmem:[#allocation9 + $0x10] sm:$0xff]
        %v638 = vld [vmem:[#allocation9 + $0x18] sm:$0xff]
        %v639 = vld [vmem:[%s553] sm:$0xff]
        %v640 = vld [vmem:[#allocation3] sm:$0x7]
        %v641 = vld [vmem:[%s2] sm:$0xff]
        %v642 = vld [vmem:[%s2 + $0x8] sm:$0xff]
        %v643 = vld [vmem:[%s2 + $0x10] sm:$0xff]
        %v644 = vld [vmem:[%s2 + $0x18] sm:$0xff]
        %v645 = vld [vmem:[%s2 + $0x20] sm:$0xff]
        %v646 = vld [vmem:[%s2 + $0x28] sm:$0xff]
        %v647 = vld [vmem:[%s2 + $0x30] sm:$0xff]
        %v648 = vld [vmem:[%s2 + $0x38] sm:$0xf]
        %v649 = vlaneseq
        %v650 = vshrl.u32 %v649, 7
        %v651 = vsub.s32 0, %v650
        %v652 = vrot.slane %v640, %v651
        %vm653 = vcmask 490496
        %v655 = vsel %vm653, %v639, 0
        %vm657 = vcmask 1043456
        %v659 = vsel %vm657, %v648, 0
        %661 = vmatprep.subr.mxu0 0.0
        %662 = vmatpush1.msra.mxu0 0.0
        %663 = vmatprep.subr.mxu0 0.0
        %664 = vmatpush1.msra.mxu0 0.0
        %665 = vmatprep.subr.mxu0 0.0
        %666 = vmatpush1.msra.mxu0 0.0
        %667 = vmatprep.subr.mxu0 0.0
        %668 = vmatpush1.msra.mxu0 0.0
        %669 = vmatprep.subr.mxu0 0.0
        %670 = vmatpush1.msra.mxu0 0.0
        %671 = vmatprep.subr.mxu0 0.0
        %672 = vmatpush1.msra.mxu0 0.0
        %673 = vmatprep.subr.mxu0 0.0
        %674 = vmatpush1.msra.mxu0 0.0
        %675 = vmatprep.subr.mxu0 0.0
        %676 = vmatpush1.msra.mxu0 0.0
        %677 = vmatprep.subr.mxu0 0.0
        %678 = vmatpush1.msra.mxu0 %v659
        %679 = vmatprep.subr.mxu0 0.0
        %680 = vmatpush1.msra.mxu0 %v647
        %681 = vmatprep.subr.mxu0 0.0
        %682 = vmatpush1.msra.mxu0 %v646
        %683 = vmatprep.subr.mxu0 0.0
        %684 = vmatpush1.msra.mxu0 %v645
        %685 = vmatprep.subr.mxu0 0.0
        %686 = vmatpush1.msra.mxu0 %v644
        %687 = vmatprep.subr.mxu0 0.0
        %688 = vmatpush1.msra.mxu0 %v643
        %689 = vmatprep.subr.mxu0 0.0
        %690 = vmatpush1.msra.mxu0 %v642
        %691 = vmatprep.subr.mxu0 0.0
        %692 = vmatpush1.msra.mxu0 %v641
        %693 = vmatprep.subr.mxu0 0.0
        %694 = vmatpush2.msra.mxu0 0.0
        %695 = vmatprep.subr.mxu0 0.0
        %696 = vmatpush2.msra.mxu0 0.0
        %697 = vmatprep.subr.mxu0 0.0
        %698 = vmatpush2.msra.mxu0 0.0
        %699 = vmatprep.subr.mxu0 0.0
        %700 = vmatpush2.msra.mxu0 0.0
        %701 = vmatprep.subr.mxu0 0.0
        %702 = vmatpush2.msra.mxu0 0.0
        %703 = vmatprep.subr.mxu0 0.0
        %704 = vmatpush2.msra.mxu0 0.0
        %705 = vmatprep.subr.mxu0 0.0
        %706 = vmatpush2.msra.mxu0 0.0
        %707 = vmatprep.subr.mxu0 0.0
        %708 = vmatpush2.msra.mxu0 0.0
        %709 = vmatprep.subr.mxu0 0.0
        %710 = vmatpush2.msra.mxu0 0.0
        %711 = vmatprep.subr.mxu0 0.0
        %712 = vmatpush2.msra.mxu0 0.0
        %713 = vmatprep.subr.mxu0 0.0
        %714 = vmatpush2.msra.mxu0 0.0
        %715 = vmatprep.subr.mxu0 0.0
        %716 = vmatpush2.msra.mxu0 0.0
        %717 = vmatprep.subr.mxu0 0.0
        %718 = vmatpush2.msra.mxu0 0.0
        %719 = vmatprep.subr.mxu0 0.0
        %720 = vmatpush2.msra.mxu0 0.0
        %721 = vmatprep.subr.mxu0 0.0
        %722 = vmatpush2.msra.mxu0 0.0
        %723 = vmatprep.subr.mxu0 0.0
        %724 = vmatpush2.msra.mxu0 0.0
        %725 = vmatprep.mubr.f32.mxu0 0.0
        %726 = vmatmul.mubr.f32.gmra.mxu0 %v655
        %v727 = vpop.f32.mrf.mxu0
        %v728 = vadd.f32 %v652, %v727
        %v729 = vpop.f32.mrf.mxu0
        %730 = vdwg.mxu0
        %vm731 = vcmask 982016
        %v732 = vsel %vm731, %v728, 0.0
        %733 = vadd.xlane.f32.xlu0 %v732
        %v734 = vpop.xlane.xlu0 %733
        %v735 = vmul.f32 %v734, 0.008333334
        %v736 = vmul.f32 %v728, %v728
        %v737 = vsel %vm731, %v736, 0.0
        %738 = vadd.xlane.f32.xlu0 %v737
        %v739 = vpop.xlane.xlu0 %738
        %v740 = vmul.f32 %v739, 0.008333334
        %v741 = vmul.f32 %v735, %v735
        %v742 = vsub.f32 %v740, %v741
        %v743 = vsub.f32 %v728, %v735
        %v744 = vadd.f32 %v742, 1e-05
        %v745 = vrsqrt.pop %v744
        %v746 = vmul.f32 %v743, %v745
        %v747 = vlaneseq
        %v748 = vshrl.u32 %v747, 7
        %v749 = vsub.s32 1, %v748
        %v750 = vrot.slane %v640, %v749
        %v751 = vmul.f32 %v746, %v750
        %v752 = vlaneseq
        %v753 = vshrl.u32 %v752, 7
        %v754 = vsub.s32 2, %v753
        %v755 = vrot.slane %v640, %v754
        %v756 = vadd.f32 %v751, %v755
        %v757 = vmul.f32 %v756, 0.01
        %v758 = vmax.f32 %v756, %v757
        %v759 = vld [vmem:[#allocation6] sm:$0x7]
        %v760 = vld [vmem:[%s4] sm:$0xff]
        %v761 = vld [vmem:[%s4 + $0x8] sm:$0xff]
        %v762 = vld [vmem:[%s4 + $0x10] sm:$0xff]
        %v763 = vld [vmem:[%s4 + $0x18] sm:$0xff]
        %v764 = vld [vmem:[%s4 + $0x20] sm:$0xff]
        %v765 = vld [vmem:[%s4 + $0x28] sm:$0xff]
        %v766 = vld [vmem:[%s4 + $0x30] sm:$0xff]
        %v767 = vld [vmem:[%s4 + $0x38] sm:$0xff]
        %v768 = vld [vmem:[%s4 + $0x40] sm:$0xff]
        %v769 = vld [vmem:[%s4 + $0x48] sm:$0xff]
        %v770 = vld [vmem:[%s4 + $0x50] sm:$0xff]
        %v771 = vld [vmem:[%s4 + $0x58] sm:$0xff]
        %v772 = vld [vmem:[%s4 + $0x60] sm:$0xff]
        %v773 = vld [vmem:[%s4 + $0x68] sm:$0xff]
        %v774 = vld [vmem:[%s4 + $0x70] sm:$0xff]
        %v775 = vlaneseq
        %v776 = vshrl.u32 %v775, 7
        %v777 = vsub.s32 0, %v776
        %v778 = vrot.slane %v759, %v777
        %v780 = vsel %vm731, %v758, 0
        %782 = vmatprep.subr.mxu0 0.0
        %783 = vmatpush1.msra.mxu0 0.0
        %784 = vmatprep.subr.mxu0 0.0
        %785 = vmatpush1.msra.mxu0 %v774
        %786 = vmatprep.subr.mxu0 0.0
        %787 = vmatpush1.msra.mxu0 %v773
        %788 = vmatprep.subr.mxu0 0.0
        %789 = vmatpush1.msra.mxu0 %v772
        %790 = vmatprep.subr.mxu0 0.0
        %791 = vmatpush1.msra.mxu0 %v771
        %792 = vmatprep.subr.mxu0 0.0
        %793 = vmatpush1.msra.mxu0 %v770
        %794 = vmatprep.subr.mxu0 0.0
        %795 = vmatpush1.msra.mxu0 %v769
        %796 = vmatprep.subr.mxu0 0.0
        %797 = vmatpush1.msra.mxu0 %v768
        %798 = vmatprep.subr.mxu0 0.0
        %799 = vmatpush1.msra.mxu0 %v767
        %800 = vmatprep.subr.mxu0 0.0
        %801 = vmatpush1.msra.mxu0 %v766
        %802 = vmatprep.subr.mxu0 0.0
        %803 = vmatpush1.msra.mxu0 %v765
        %804 = vmatprep.subr.mxu0 0.0
        %805 = vmatpush1.msra.mxu0 %v764
        %806 = vmatprep.subr.mxu0 0.0
        %807 = vmatpush1.msra.mxu0 %v763
        %808 = vmatprep.subr.mxu0 0.0
        %809 = vmatpush1.msra.mxu0 %v762
        %810 = vmatprep.subr.mxu0 0.0
        %811 = vmatpush1.msra.mxu0 %v761
        %812 = vmatprep.subr.mxu0 0.0
        %813 = vmatpush1.msra.mxu0 %v760
        %814 = vmatprep.subr.mxu0 0.0
        %815 = vmatpush2.msra.mxu0 0.0
        %816 = vmatprep.subr.mxu0 0.0
        %817 = vmatpush2.msra.mxu0 0.0
        %818 = vmatprep.subr.mxu0 0.0
        %819 = vmatpush2.msra.mxu0 0.0
        %820 = vmatprep.subr.mxu0 0.0
        %821 = vmatpush2.msra.mxu0 0.0
        %822 = vmatprep.subr.mxu0 0.0
        %823 = vmatpush2.msra.mxu0 0.0
        %824 = vmatprep.subr.mxu0 0.0
        %825 = vmatpush2.msra.mxu0 0.0
        %826 = vmatprep.subr.mxu0 0.0
        %827 = vmatpush2.msra.mxu0 0.0
        %828 = vmatprep.subr.mxu0 0.0
        %829 = vmatpush2.msra.mxu0 0.0
        %830 = vmatprep.subr.mxu0 0.0
        %831 = vmatpush2.msra.mxu0 0.0
        %832 = vmatprep.subr.mxu0 0.0
        %833 = vmatpush2.msra.mxu0 0.0
        %834 = vmatprep.subr.mxu0 0.0
        %835 = vmatpush2.msra.mxu0 0.0
        %836 = vmatprep.subr.mxu0 0.0
        %837 = vmatpush2.msra.mxu0 0.0
        %838 = vmatprep.subr.mxu0 0.0
        %839 = vmatpush2.msra.mxu0 0.0
        %840 = vmatprep.subr.mxu0 0.0
        %841 = vmatpush2.msra.mxu0 0.0
        %842 = vmatprep.subr.mxu0 0.0
        %843 = vmatpush2.msra.mxu0 0.0
        %844 = vmatprep.subr.mxu0 0.0
        %845 = vmatpush2.msra.mxu0 0.0
        %846 = vmatprep.mubr.f32.mxu0 0.0
        %847 = vmatmul.mubr.f32.gmra.mxu0 %v780
        %v848 = vpop.f32.mrf.mxu0
        %v849 = vadd.f32 %v778, %v848
        %v850 = vpop.f32.mrf.mxu0
        %851 = vdwg.mxu0
        %v852 = vsel %vm731, %v849, 0.0
        %853 = vadd.xlane.f32.xlu0 %v852
        %v854 = vpop.xlane.xlu0 %853
        %v855 = vmul.f32 %v854, 0.008333334
        %v856 = vmul.f32 %v849, %v849
        %v857 = vsel %vm731, %v856, 0.0
        %858 = vadd.xlane.f32.xlu0 %v857
        %v859 = vpop.xlane.xlu0 %858
        %v860 = vmul.f32 %v859, 0.008333334
        %v861 = vmul.f32 %v855, %v855
        %v862 = vsub.f32 %v860, %v861
        %v863 = vsub.f32 %v849, %v855
        %v864 = vadd.f32 %v862, 1e-05
        %v865 = vrsqrt.pop %v864
        %v866 = vmul.f32 %v863, %v865
        %v867 = vlaneseq
        %v868 = vshrl.u32 %v867, 7
        %v869 = vsub.s32 1, %v868
        %v870 = vrot.slane %v759, %v869
        %v871 = vmul.f32 %v866, %v870
        %v872 = vlaneseq
        %v873 = vshrl.u32 %v872, 7
        %v874 = vsub.s32 2, %v873
        %v875 = vrot.slane %v759, %v874
        %v876 = vadd.f32 %v871, %v875
        %v877 = vmul.f32 %v876, 0.01
        %v878 = vmax.f32 %v876, %v877
        %v879 = vld [vmem:[#allocation8] sm:$0xff]
        %v880 = vld [vmem:[#allocation8 + $0x8] sm:$0xff]
        %v881 = vld [vmem:[#allocation8 + $0x10] sm:$0xff]
        %v882 = vld [vmem:[#allocation8 + $0x18] sm:$0xff]
        %v883 = vld [vmem:[#allocation8 + $0x20] sm:$0xff]
        %v884 = vld [vmem:[#allocation8 + $0x28] sm:$0xff]
        %v885 = vld [vmem:[#allocation8 + $0x30] sm:$0xff]
        %v886 = vld [vmem:[#allocation8 + $0x38] sm:$0xff]
        %v887 = vld [vmem:[#allocation8 + $0x40] sm:$0xff]
        %v888 = vld [vmem:[#allocation8 + $0x48] sm:$0xff]
        %v889 = vld [vmem:[#allocation8 + $0x50] sm:$0xff]
        %v890 = vld [vmem:[#allocation8 + $0x58] sm:$0xff]
        %v891 = vld [vmem:[#allocation8 + $0x60] sm:$0xff]
        %v892 = vld [vmem:[#allocation8 + $0x68] sm:$0xff]
        %v893 = vld [vmem:[#allocation8 + $0x70] sm:$0xff]
        %v894 = vld [vmem:[#allocation8 + $0x78] sm:$0xff]
        %v895 = vld [vmem:[#allocation8 + $0x80] sm:$0xff]
        %v896 = vld [vmem:[#allocation8 + $0x88] sm:$0xff]
        %v897 = vld [vmem:[#allocation8 + $0x90] sm:$0xff]
        %v898 = vld [vmem:[#allocation8 + $0x98] sm:$0xff]
        %v899 = vld [vmem:[#allocation8 + $0xa0] sm:$0xff]
        %v900 = vld [vmem:[#allocation8 + $0xa8] sm:$0xff]
        %v901 = vld [vmem:[#allocation8 + $0xb0] sm:$0xff]
        %v902 = vld [vmem:[#allocation8 + $0xb8] sm:$0xff]
        %v903 = vld [vmem:[#allocation8 + $0xc0] sm:$0xff]
        %v904 = vld [vmem:[#allocation8 + $0xc8] sm:$0xff]
        %v905 = vld [vmem:[#allocation8 + $0xd0] sm:$0xff]
        %v906 = vld [vmem:[#allocation8 + $0xd8] sm:$0xff]
        %v907 = vld [vmem:[#allocation8 + $0xe0] sm:$0xff]
        %v908 = vld [vmem:[#allocation8 + $0xe8] sm:$0xff]
        %v910 = vsel %vm731, %v878, 0
        %912 = vmatprep.subr.mxu0 0.0
        %913 = vmatpush1.msra.mxu0 0.0
        %914 = vmatprep.subr.mxu0 %v908
        %915 = vmatpush1.msra.mxu0 %v907
        %916 = vmatprep.subr.mxu0 %v906
        %917 = vmatpush1.msra.mxu0 %v905
        %918 = vmatprep.subr.mxu0 %v904
        %919 = vmatpush1.msra.mxu0 %v903
        %920 = vmatprep.subr.mxu0 %v902
        %921 = vmatpush1.msra.mxu0 %v901
        %922 = vmatprep.subr.mxu0 %v900
        %923 = vmatpush1.msra.mxu0 %v899
        %924 = vmatprep.subr.mxu0 %v898
        %925 = vmatpush1.msra.mxu0 %v897
        %926 = vmatprep.subr.mxu0 %v896
        %927 = vmatpush1.msra.mxu0 %v895
        %928 = vmatprep.subr.mxu0 %v894
        %929 = vmatpush1.msra.mxu0 %v893
        %930 = vmatprep.subr.mxu0 %v892
        %931 = vmatpush1.msra.mxu0 %v891
        %932 = vmatprep.subr.mxu0 %v890
        %933 = vmatpush1.msra.mxu0 %v889
        %934 = vmatprep.subr.mxu0 %v888
        %935 = vmatpush1.msra.mxu0 %v887
        %936 = vmatprep.subr.mxu0 %v886
        %937 = vmatpush1.msra.mxu0 %v885
        %938 = vmatprep.subr.mxu0 %v884
        %939 = vmatpush1.msra.mxu0 %v883
        %940 = vmatprep.subr.mxu0 %v882
        %941 = vmatpush1.msra.mxu0 %v881
        %942 = vmatprep.subr.mxu0 %v880
        %943 = vmatpush1.msra.mxu0 %v879
        %944 = vmatprep.subr.mxu0 0.0
        %945 = vmatpush2.msra.mxu0 0.0
        %946 = vmatprep.subr.mxu0 0.0
        %947 = vmatpush2.msra.mxu0 0.0
        %948 = vmatprep.subr.mxu0 0.0
        %949 = vmatpush2.msra.mxu0 0.0
        %950 = vmatprep.subr.mxu0 0.0
        %951 = vmatpush2.msra.mxu0 0.0
        %952 = vmatprep.subr.mxu0 0.0
        %953 = vmatpush2.msra.mxu0 0.0
        %954 = vmatprep.subr.mxu0 0.0
        %955 = vmatpush2.msra.mxu0 0.0
        %956 = vmatprep.subr.mxu0 0.0
        %957 = vmatpush2.msra.mxu0 0.0
        %958 = vmatprep.subr.mxu0 0.0
        %959 = vmatpush2.msra.mxu0 0.0
        %960 = vmatprep.subr.mxu0 0.0
        %961 = vmatpush2.msra.mxu0 0.0
        %962 = vmatprep.subr.mxu0 0.0
        %963 = vmatpush2.msra.mxu0 0.0
        %964 = vmatprep.subr.mxu0 0.0
        %965 = vmatpush2.msra.mxu0 0.0
        %966 = vmatprep.subr.mxu0 0.0
        %967 = vmatpush2.msra.mxu0 0.0
        %968 = vmatprep.subr.mxu0 0.0
        %969 = vmatpush2.msra.mxu0 0.0
        %970 = vmatprep.subr.mxu0 0.0
        %971 = vmatpush2.msra.mxu0 0.0
        %972 = vmatprep.subr.mxu0 0.0
        %973 = vmatpush2.msra.mxu0 0.0
        %974 = vmatprep.subr.mxu0 0.0
        %975 = vmatpush2.msra.mxu0 0.0
        %976 = vmatprep.mubr.f32.mxu0 0.0
        %977 = vmatmul.mubr.f32.gmra.mxu0 %v910
        %v978 = vpop.f32.mrf.mxu0
        %v979 = vadd.f32 0.0, %v978
        %v980 = vpop.f32.mrf.mxu0
        %v981 = vadd.f32 0.0, %v980
        %982 = vdwg.mxu0
        %vm983 = vcmask 130048
        %v985 = vsel %vm983, %v634, 0
        %987 = vmatprep.subr.mxu0 0.0
        %988 = vmatpush1.msra.mxu0 0.0
        %989 = vmatprep.subr.mxu0 0.0
        %990 = vmatpush1.msra.mxu0 0.0
        %991 = vmatprep.subr.mxu0 0.0
        %992 = vmatpush1.msra.mxu0 0.0
        %993 = vmatprep.subr.mxu0 0.0
        %994 = vmatpush1.msra.mxu0 0.0
        %995 = vmatprep.subr.mxu0 0.0
        %996 = vmatpush1.msra.mxu0 0.0
        %997 = vmatprep.subr.mxu0 0.0
        %998 = vmatpush1.msra.mxu0 0.0
        %999 = vmatprep.subr.mxu0 0.0
        %1000 = vmatpush1.msra.mxu0 0.0
        %1001 = vmatprep.subr.mxu0 0.0
        %1002 = vmatpush1.msra.mxu0 0.0
        %1003 = vmatprep.subr.mxu0 0.0
        %1004 = vmatpush1.msra.mxu0 0.0
        %1005 = vmatprep.subr.mxu0 0.0
        %1006 = vmatpush1.msra.mxu0 0.0
        %1007 = vmatprep.subr.mxu0 0.0
        %1008 = vmatpush1.msra.mxu0 0.0
        %1009 = vmatprep.subr.mxu0 0.0
        %1010 = vmatpush1.msra.mxu0 0.0
        %1011 = vmatprep.subr.mxu0 0.0
        %1012 = vmatpush1.msra.mxu0 0.0
        %1013 = vmatprep.subr.mxu0 0.0
        %1014 = vmatpush1.msra.mxu0 0.0
        %1015 = vmatprep.subr.mxu0 %v638
        %1016 = vmatpush1.msra.mxu0 %v637
        %1017 = vmatprep.subr.mxu0 %v636
        %1018 = vmatpush1.msra.mxu0 %v635
        %1019 = vmatprep.subr.mxu0 0.0
        %1020 = vmatpush2.msra.mxu0 0.0
        %1021 = vmatprep.subr.mxu0 0.0
        %1022 = vmatpush2.msra.mxu0 0.0
        %1023 = vmatprep.subr.mxu0 0.0
        %1024 = vmatpush2.msra.mxu0 0.0
        %1025 = vmatprep.subr.mxu0 0.0
        %1026 = vmatpush2.msra.mxu0 0.0
        %1027 = vmatprep.subr.mxu0 0.0
        %1028 = vmatpush2.msra.mxu0 0.0
        %1029 = vmatprep.subr.mxu0 0.0
        %1030 = vmatpush2.msra.mxu0 0.0
        %1031 = vmatprep.subr.mxu0 0.0
        %1032 = vmatpush2.msra.mxu0 0.0
        %1033 = vmatprep.subr.mxu0 0.0
        %1034 = vmatpush2.msra.mxu0 0.0
        %1035 = vmatprep.subr.mxu0 0.0
        %1036 = vmatpush2.msra.mxu0 0.0
        %1037 = vmatprep.subr.mxu0 0.0
        %1038 = vmatpush2.msra.mxu0 0.0
        %1039 = vmatprep.subr.mxu0 0.0
        %1040 = vmatpush2.msra.mxu0 0.0
        %1041 = vmatprep.subr.mxu0 0.0
        %1042 = vmatpush2.msra.mxu0 0.0
        %1043 = vmatprep.subr.mxu0 0.0
        %1044 = vmatpush2.msra.mxu0 0.0
        %1045 = vmatprep.subr.mxu0 0.0
        %1046 = vmatpush2.msra.mxu0 0.0
        %1047 = vmatprep.subr.mxu0 0.0
        %1048 = vmatpush2.msra.mxu0 0.0
        %1049 = vmatprep.subr.mxu0 0.0
        %1050 = vmatpush2.msra.mxu0 0.0
        %1051 = vmatprep.mubr.f32.mxu0 0.0
        %1052 = vmatmul.mubr.f32.gmra.mxu0 %v985
        %v1053 = vpop.f32.mrf.mxu0
        %v1054 = vadd.f32 %v979, %v1053
        %v1055 = vpop.f32.mrf.mxu0
        %v1056 = vadd.f32 %v981, %v1055
        %1057 = vdwg.mxu0
        %s1058 = scalar_lea.vmem %s553, 8 [#allocation2]
        %v1059 = vld [vmem:[%s1058] sm:$0xff]
        %s1060 = scalar_lea.vmem [#allocation3], 4
        %v1061 = vld [vmem:[%s1060] sm:$0x7]
        %s1062 = scalar_lea.vmem %s2, 64
        %v1063 = vld [vmem:[%s1062] sm:$0xff]
        %v1064 = vld [vmem:[%s1062 + $0x8] sm:$0xff]
        %v1065 = vld [vmem:[%s1062 + $0x10] sm:$0xff]
        %v1066 = vld [vmem:[%s1062 + $0x18] sm:$0xff]
        %v1067 = vld [vmem:[%s1062 + $0x20] sm:$0xff]
        %v1068 = vld [vmem:[%s1062 + $0x28] sm:$0xff]
        %v1069 = vld [vmem:[%s1062 + $0x30] sm:$0xff]
        %v1070 = vld [vmem:[%s1062 + $0x38] sm:$0xf]
        %v1071 = vlaneseq
        %v1072 = vshrl.u32 %v1071, 7
        %v1073 = vsub.s32 0, %v1072
        %v1074 = vrot.slane %v1061, %v1073
        %v1076 = vsel %vm653, %v1059, 0
        %v1079 = vsel %vm657, %v1070, 0
        %1081 = vmatprep.subr.mxu0 0.0
        %1082 = vmatpush1.msra.mxu0 0.0
        %1083 = vmatprep.subr.mxu0 0.0
        %1084 = vmatpush1.msra.mxu0 0.0
        %1085 = vmatprep.subr.mxu0 0.0
        %1086 = vmatpush1.msra.mxu0 0.0
        %1087 = vmatprep.subr.mxu0 0.0
        %1088 = vmatpush1.msra.mxu0 0.0
        %1089 = vmatprep.subr.mxu0 0.0
        %1090 = vmatpush1.msra.mxu0 0.0
        %1091 = vmatprep.subr.mxu0 0.0
        %1092 = vmatpush1.msra.mxu0 0.0
        %1093 = vmatprep.subr.mxu0 0.0
        %1094 = vmatpush1.msra.mxu0 0.0
        %1095 = vmatprep.subr.mxu0 0.0
        %1096 = vmatpush1.msra.mxu0 0.0
        %1097 = vmatprep.subr.mxu0 0.0
        %1098 = vmatpush1.msra.mxu0 %v1079
        %1099 = vmatprep.subr.mxu0 0.0
        %1100 = vmatpush1.msra.mxu0 %v1069
        %1101 = vmatprep.subr.mxu0 0.0
        %1102 = vmatpush1.msra.mxu0 %v1068
        %1103 = vmatprep.subr.mxu0 0.0
        %1104 = vmatpush1.msra.mxu0 %v1067
        %1105 = vmatprep.subr.mxu0 0.0
        %1106 = vmatpush1.msra.mxu0 %v1066
        %1107 = vmatprep.subr.mxu0 0.0
        %1108 = vmatpush1.msra.mxu0 %v1065
        %1109 = vmatprep.subr.mxu0 0.0
        %1110 = vmatpush1.msra.mxu0 %v1064
        %1111 = vmatprep.subr.mxu0 0.0
        %1112 = vmatpush1.msra.mxu0 %v1063
        %1113 = vmatprep.subr.mxu0 0.0
        %1114 = vmatpush2.msra.mxu0 0.0
        %1115 = vmatprep.subr.mxu0 0.0
        %1116 = vmatpush2.msra.mxu0 0.0
        %1117 = vmatprep.subr.mxu0 0.0
        %1118 = vmatpush2.msra.mxu0 0.0
        %1119 = vmatprep.subr.mxu0 0.0
        %1120 = vmatpush2.msra.mxu0 0.0
        %1121 = vmatprep.subr.mxu0 0.0
        %1122 = vmatpush2.msra.mxu0 0.0
        %1123 = vmatprep.subr.mxu0 0.0
        %1124 = vmatpush2.msra.mxu0 0.0
        %1125 = vmatprep.subr.mxu0 0.0
        %1126 = vmatpush2.msra.mxu0 0.0
        %1127 = vmatprep.subr.mxu0 0.0
        %1128 = vmatpush2.msra.mxu0 0.0
        %1129 = vmatprep.subr.mxu0 0.0
        %1130 = vmatpush2.msra.mxu0 0.0
        %1131 = vmatprep.subr.mxu0 0.0
        %1132 = vmatpush2.msra.mxu0 0.0
        %1133 = vmatprep.subr.mxu0 0.0
        %1134 = vmatpush2.msra.mxu0 0.0
        %1135 = vmatprep.subr.mxu0 0.0
        %1136 = vmatpush2.msra.mxu0 0.0
        %1137 = vmatprep.subr.mxu0 0.0
        %1138 = vmatpush2.msra.mxu0 0.0
        %1139 = vmatprep.subr.mxu0 0.0
        %1140 = vmatpush2.msra.mxu0 0.0
        %1141 = vmatprep.subr.mxu0 0.0
        %1142 = vmatpush2.msra.mxu0 0.0
        %1143 = vmatprep.subr.mxu0 0.0
        %1144 = vmatpush2.msra.mxu0 0.0
        %1145 = vmatprep.mubr.f32.mxu0 0.0
        %1146 = vmatmul.mubr.f32.gmra.mxu0 %v1076
        %v1147 = vpop.f32.mrf.mxu0
        %v1148 = vadd.f32 %v1074, %v1147
        %v1149 = vpop.f32.mrf.mxu0
        %1150 = vdwg.mxu0
        %v1151 = vsel %vm731, %v1148, 0.0
        %1152 = vadd.xlane.f32.xlu0 %v1151
        %v1153 = vpop.xlane.xlu0 %1152
        %v1154 = vmul.f32 %v1153, 0.008333334
        %v1155 = vmul.f32 %v1148, %v1148
        %v1156 = vsel %vm731, %v1155, 0.0
        %1157 = vadd.xlane.f32.xlu0 %v1156
        %v1158 = vpop.xlane.xlu0 %1157
        %v1159 = vmul.f32 %v1158, 0.008333334
        %v1160 = vmul.f32 %v1154, %v1154
        %v1161 = vsub.f32 %v1159, %v1160
        %v1162 = vsub.f32 %v1148, %v1154
        %v1163 = vadd.f32 %v1161, 1e-05
        %v1164 = vrsqrt.pop %v1163
        %v1165 = vmul.f32 %v1162, %v1164
        %v1166 = vlaneseq
        %v1167 = vshrl.u32 %v1166, 7
        %v1168 = vsub.s32 1, %v1167
        %v1169 = vrot.slane %v1061, %v1168
        %v1170 = vmul.f32 %v1165, %v1169
        %v1171 = vlaneseq
        %v1172 = vshrl.u32 %v1171, 7
        %v1173 = vsub.s32 2, %v1172
        %v1174 = vrot.slane %v1061, %v1173
        %v1175 = vadd.f32 %v1170, %v1174
        %v1176 = vmul.f32 %v1175, 0.01
        %v1177 = vmax.f32 %v1175, %v1176
        %s1178 = scalar_lea.vmem [#allocation6], 4
        %v1179 = vld [vmem:[%s1178] sm:$0x7]
        %s1180 = scalar_lea.vmem %s4, 120
        %v1181 = vld [vmem:[%s1180] sm:$0xff]
        %v1182 = vld [vmem:[%s1180 + $0x8] sm:$0xff]
        %v1183 = vld [vmem:[%s1180 + $0x10] sm:$0xff]
        %v1184 = vld [vmem:[%s1180 + $0x18] sm:$0xff]
        %v1185 = vld [vmem:[%s1180 + $0x20] sm:$0xff]
        %v1186 = vld [vmem:[%s1180 + $0x28] sm:$0xff]
        %v1187 = vld [vmem:[%s1180 + $0x30] sm:$0xff]
        %v1188 = vld [vmem:[%s1180 + $0x38] sm:$0xff]
        %v1189 = vld [vmem:[%s1180 + $0x40] sm:$0xff]
        %v1190 = vld [vmem:[%s1180 + $0x48] sm:$0xff]
        %v1191 = vld [vmem:[%s1180 + $0x50] sm:$0xff]
        %v1192 = vld [vmem:[%s1180 + $0x58] sm:$0xff]
        %v1193 = vld [vmem:[%s1180 + $0x60] sm:$0xff]
        %v1194 = vld [vmem:[%s1180 + $0x68] sm:$0xff]
        %v1195 = vld [vmem:[%s1180 + $0x70] sm:$0xff]
        %v1196 = vlaneseq
        %v1197 = vshrl.u32 %v1196, 7
        %v1198 = vsub.s32 0, %v1197
        %v1199 = vrot.slane %v1179, %v1198
        %v1201 = vsel %vm731, %v1177, 0
        %1203 = vmatprep.subr.mxu0 0.0
        %1204 = vmatpush1.msra.mxu0 0.0
        %1205 = vmatprep.subr.mxu0 0.0
        %1206 = vmatpush1.msra.mxu0 %v1195
        %1207 = vmatprep.subr.mxu0 0.0
        %1208 = vmatpush1.msra.mxu0 %v1194
        %1209 = vmatprep.subr.mxu0 0.0
        %1210 = vmatpush1.msra.mxu0 %v1193
        %1211 = vmatprep.subr.mxu0 0.0
        %1212 = vmatpush1.msra.mxu0 %v1192
        %1213 = vmatprep.subr.mxu0 0.0
        %1214 = vmatpush1.msra.mxu0 %v1191
        %1215 = vmatprep.subr.mxu0 0.0
        %1216 = vmatpush1.msra.mxu0 %v1190
        %1217 = vmatprep.subr.mxu0 0.0
        %1218 = vmatpush1.msra.mxu0 %v1189
        %1219 = vmatprep.subr.mxu0 0.0
        %1220 = vmatpush1.msra.mxu0 %v1188
        %1221 = vmatprep.subr.mxu0 0.0
        %1222 = vmatpush1.msra.mxu0 %v1187
        %1223 = vmatprep.subr.mxu0 0.0
        %1224 = vmatpush1.msra.mxu0 %v1186
        %1225 = vmatprep.subr.mxu0 0.0
        %1226 = vmatpush1.msra.mxu0 %v1185
        %1227 = vmatprep.subr.mxu0 0.0
        %1228 = vmatpush1.msra.mxu0 %v1184
        %1229 = vmatprep.subr.mxu0 0.0
        %1230 = vmatpush1.msra.mxu0 %v1183
        %1231 = vmatprep.subr.mxu0 0.0
        %1232 = vmatpush1.msra.mxu0 %v1182
        %1233 = vmatprep.subr.mxu0 0.0
        %1234 = vmatpush1.msra.mxu0 %v1181
        %1235 = vmatprep.subr.mxu0 0.0
        %1236 = vmatpush2.msra.mxu0 0.0
        %1237 = vmatprep.subr.mxu0 0.0
        %1238 = vmatpush2.msra.mxu0 0.0
        %1239 = vmatprep.subr.mxu0 0.0
        %1240 = vmatpush2.msra.mxu0 0.0
        %1241 = vmatprep.subr.mxu0 0.0
        %1242 = vmatpush2.msra.mxu0 0.0
        %1243 = vmatprep.subr.mxu0 0.0
        %1244 = vmatpush2.msra.mxu0 0.0
        %1245 = vmatprep.subr.mxu0 0.0
        %1246 = vmatpush2.msra.mxu0 0.0
        %1247 = vmatprep.subr.mxu0 0.0
        %1248 = vmatpush2.msra.mxu0 0.0
        %1249 = vmatprep.subr.mxu0 0.0
        %1250 = vmatpush2.msra.mxu0 0.0
        %1251 = vmatprep.subr.mxu0 0.0
        %1252 = vmatpush2.msra.mxu0 0.0
        %1253 = vmatprep.subr.mxu0 0.0
        %1254 = vmatpush2.msra.mxu0 0.0
        %1255 = vmatprep.subr.mxu0 0.0
        %1256 = vmatpush2.msra.mxu0 0.0
        %1257 = vmatprep.subr.mxu0 0.0
        %1258 = vmatpush2.msra.mxu0 0.0
        %1259 = vmatprep.subr.mxu0 0.0
        %1260 = vmatpush2.msra.mxu0 0.0
        %1261 = vmatprep.subr.mxu0 0.0
        %1262 = vmatpush2.msra.mxu0 0.0
        %1263 = vmatprep.subr.mxu0 0.0
        %1264 = vmatpush2.msra.mxu0 0.0
        %1265 = vmatprep.subr.mxu0 0.0
        %1266 = vmatpush2.msra.mxu0 0.0
        %1267 = vmatprep.mubr.f32.mxu0 0.0
        %1268 = vmatmul.mubr.f32.gmra.mxu0 %v1201
        %v1269 = vpop.f32.mrf.mxu0
        %v1270 = vadd.f32 %v1199, %v1269
        %v1271 = vpop.f32.mrf.mxu0
        %1272 = vdwg.mxu0
        %v1273 = vsel %vm731, %v1270, 0.0
        %1274 = vadd.xlane.f32.xlu0 %v1273
        %v1275 = vpop.xlane.xlu0 %1274
        %v1276 = vmul.f32 %v1275, 0.008333334
        %v1277 = vmul.f32 %v1270, %v1270
        %v1278 = vsel %vm731, %v1277, 0.0
        %1279 = vadd.xlane.f32.xlu0 %v1278
        %v1280 = vpop.xlane.xlu0 %1279
        %v1281 = vmul.f32 %v1280, 0.008333334
        %v1282 = vmul.f32 %v1276, %v1276
        %v1283 = vsub.f32 %v1281, %v1282
        %v1284 = vsub.f32 %v1270, %v1276
        %v1285 = vadd.f32 %v1283, 1e-05
        %v1286 = vrsqrt.pop %v1285
        %v1287 = vmul.f32 %v1284, %v1286
        %v1288 = vlaneseq
        %v1289 = vshrl.u32 %v1288, 7
        %v1290 = vsub.s32 1, %v1289
        %v1291 = vrot.slane %v1179, %v1290
        %v1292 = vmul.f32 %v1287, %v1291
        %v1293 = vlaneseq
        %v1294 = vshrl.u32 %v1293, 7
        %v1295 = vsub.s32 2, %v1294
        %v1296 = vrot.slane %v1179, %v1295
        %v1297 = vadd.f32 %v1292, %v1296
        %v1298 = vmul.f32 %v1297, 0.01
        %v1299 = vmax.f32 %v1297, %v1298
        %s1300 = scalar_lea.vmem [#allocation8], 240
        %v1301 = vld [vmem:[%s1300] sm:$0xff]
        %v1302 = vld [vmem:[%s1300 + $0x8] sm:$0xff]
        %v1303 = vld [vmem:[%s1300 + $0x10] sm:$0xff]
        %v1304 = vld [vmem:[%s1300 + $0x18] sm:$0xff]
        %v1305 = vld [vmem:[%s1300 + $0x20] sm:$0xff]
        %v1306 = vld [vmem:[%s1300 + $0x28] sm:$0xff]
        %v1307 = vld [vmem:[%s1300 + $0x30] sm:$0xff]
        %v1308 = vld [vmem:[%s1300 + $0x38] sm:$0xff]
        %v1309 = vld [vmem:[%s1300 + $0x40] sm:$0xff]
        %v1310 = vld [vmem:[%s1300 + $0x48] sm:$0xff]
        %v1311 = vld [vmem:[%s1300 + $0x50] sm:$0xff]
        %v1312 = vld [vmem:[%s1300 + $0x58] sm:$0xff]
        %v1313 = vld [vmem:[%s1300 + $0x60] sm:$0xff]
        %v1314 = vld [vmem:[%s1300 + $0x68] sm:$0xff]
        %v1315 = vld [vmem:[%s1300 + $0x70] sm:$0xff]
        %v1316 = vld [vmem:[%s1300 + $0x78] sm:$0xff]
        %v1317 = vld [vmem:[%s1300 + $0x80] sm:$0xff]
        %v1318 = vld [vmem:[%s1300 + $0x88] sm:$0xff]
        %v1319 = vld [vmem:[%s1300 + $0x90] sm:$0xff]
        %v1320 = vld [vmem:[%s1300 + $0x98] sm:$0xff]
        %v1321 = vld [vmem:[%s1300 + $0xa0] sm:$0xff]
        %v1322 = vld [vmem:[%s1300 + $0xa8] sm:$0xff]
        %v1323 = vld [vmem:[%s1300 + $0xb0] sm:$0xff]
        %v1324 = vld [vmem:[%s1300 + $0xb8] sm:$0xff]
        %v1325 = vld [vmem:[%s1300 + $0xc0] sm:$0xff]
        %v1326 = vld [vmem:[%s1300 + $0xc8] sm:$0xff]
        %v1327 = vld [vmem:[%s1300 + $0xd0] sm:$0xff]
        %v1328 = vld [vmem:[%s1300 + $0xd8] sm:$0xff]
        %v1329 = vld [vmem:[%s1300 + $0xe0] sm:$0xff]
        %v1330 = vld [vmem:[%s1300 + $0xe8] sm:$0xff]
        %v1332 = vsel %vm731, %v1299, 0
        %1334 = vmatprep.subr.mxu0 0.0
        %1335 = vmatpush1.msra.mxu0 0.0
        %1336 = vmatprep.subr.mxu0 %v1330
        %1337 = vmatpush1.msra.mxu0 %v1329
        %1338 = vmatprep.subr.mxu0 %v1328
        %1339 = vmatpush1.msra.mxu0 %v1327
        %1340 = vmatprep.subr.mxu0 %v1326
        %1341 = vmatpush1.msra.mxu0 %v1325
        %1342 = vmatprep.subr.mxu0 %v1324
        %1343 = vmatpush1.msra.mxu0 %v1323
        %1344 = vmatprep.subr.mxu0 %v1322
        %1345 = vmatpush1.msra.mxu0 %v1321
        %1346 = vmatprep.subr.mxu0 %v1320
        %1347 = vmatpush1.msra.mxu0 %v1319
        %1348 = vmatprep.subr.mxu0 %v1318
        %1349 = vmatpush1.msra.mxu0 %v1317
        %1350 = vmatprep.subr.mxu0 %v1316
        %1351 = vmatpush1.msra.mxu0 %v1315
        %1352 = vmatprep.subr.mxu0 %v1314
        %1353 = vmatpush1.msra.mxu0 %v1313
        %1354 = vmatprep.subr.mxu0 %v1312
        %1355 = vmatpush1.msra.mxu0 %v1311
        %1356 = vmatprep.subr.mxu0 %v1310
        %1357 = vmatpush1.msra.mxu0 %v1309
        %1358 = vmatprep.subr.mxu0 %v1308
        %1359 = vmatpush1.msra.mxu0 %v1307
        %1360 = vmatprep.subr.mxu0 %v1306
        %1361 = vmatpush1.msra.mxu0 %v1305
        %1362 = vmatprep.subr.mxu0 %v1304
        %1363 = vmatpush1.msra.mxu0 %v1303
        %1364 = vmatprep.subr.mxu0 %v1302
        %1365 = vmatpush1.msra.mxu0 %v1301
        %1366 = vmatprep.subr.mxu0 0.0
        %1367 = vmatpush2.msra.mxu0 0.0
        %1368 = vmatprep.subr.mxu0 0.0
        %1369 = vmatpush2.msra.mxu0 0.0
        %1370 = vmatprep.subr.mxu0 0.0
        %1371 = vmatpush2.msra.mxu0 0.0
        %1372 = vmatprep.subr.mxu0 0.0
        %1373 = vmatpush2.msra.mxu0 0.0
        %1374 = vmatprep.subr.mxu0 0.0
        %1375 = vmatpush2.msra.mxu0 0.0
        %1376 = vmatprep.subr.mxu0 0.0
        %1377 = vmatpush2.msra.mxu0 0.0
        %1378 = vmatprep.subr.mxu0 0.0
        %1379 = vmatpush2.msra.mxu0 0.0
        %1380 = vmatprep.subr.mxu0 0.0
        %1381 = vmatpush2.msra.mxu0 0.0
        %1382 = vmatprep.subr.mxu0 0.0
        %1383 = vmatpush2.msra.mxu0 0.0
        %1384 = vmatprep.subr.mxu0 0.0
        %1385 = vmatpush2.msra.mxu0 0.0
        %1386 = vmatprep.subr.mxu0 0.0
        %1387 = vmatpush2.msra.mxu0 0.0
        %1388 = vmatprep.subr.mxu0 0.0
        %1389 = vmatpush2.msra.mxu0 0.0
        %1390 = vmatprep.subr.mxu0 0.0
        %1391 = vmatpush2.msra.mxu0 0.0
        %1392 = vmatprep.subr.mxu0 0.0
        %1393 = vmatpush2.msra.mxu0 0.0
        %1394 = vmatprep.subr.mxu0 0.0
        %1395 = vmatpush2.msra.mxu0 0.0
        %1396 = vmatprep.subr.mxu0 0.0
        %1397 = vmatpush2.msra.mxu0 0.0
        %1398 = vmatprep.mubr.f32.mxu0 0.0
        %1399 = vmatmul.mubr.f32.gmra.mxu0 %v1332
        %v1400 = vpop.f32.mrf.mxu0
        %v1401 = vadd.f32 0.0, %v1400
        %v1402 = vpop.f32.mrf.mxu0
        %v1403 = vadd.f32 0.0, %v1402
        %1404 = vdwg.mxu0
        %v1405 = vadd.f32 %v1054, %v1401
        %v1406 = vadd.f32 %v1056, %v1403
        %s1407 = scalar_lea.vmem %s553, 16 [#allocation2]
        %v1408 = vld [vmem:[%s1407] sm:$0xff]
        %s1409 = scalar_lea.vmem [#allocation3], 8
        %v1410 = vld [vmem:[%s1409] sm:$0x7]
        %s1411 = scalar_lea.vmem %s2, 128
        %v1412 = vld [vmem:[%s1411] sm:$0xff]
        %v1413 = vld [vmem:[%s1411 + $0x8] sm:$0xff]
        %v1414 = vld [vmem:[%s1411 + $0x10] sm:$0xff]
        %v1415 = vld [vmem:[%s1411 + $0x18] sm:$0xff]
        %v1416 = vld [vmem:[%s1411 + $0x20] sm:$0xff]
        %v1417 = vld [vmem:[%s1411 + $0x28] sm:$0xff]
        %v1418 = vld [vmem:[%s1411 + $0x30] sm:$0xff]
        %v1419 = vld [vmem:[%s1411 + $0x38] sm:$0xf]
        %v1420 = vlaneseq
        %v1421 = vshrl.u32 %v1420, 7
        %v1422 = vsub.s32 0, %v1421
        %v1423 = vrot.slane %v1410, %v1422
        %v1425 = vsel %vm653, %v1408, 0
        %v1428 = vsel %vm657, %v1419, 0
        %1430 = vmatprep.subr.mxu0 0.0
        %1431 = vmatpush1.msra.mxu0 0.0
        %1432 = vmatprep.subr.mxu0 0.0
        %1433 = vmatpush1.msra.mxu0 0.0
        %1434 = vmatprep.subr.mxu0 0.0
        %1435 = vmatpush1.msra.mxu0 0.0
        %1436 = vmatprep.subr.mxu0 0.0
        %1437 = vmatpush1.msra.mxu0 0.0
        %1438 = vmatprep.subr.mxu0 0.0
        %1439 = vmatpush1.msra.mxu0 0.0
        %1440 = vmatprep.subr.mxu0 0.0
        %1441 = vmatpush1.msra.mxu0 0.0
        %1442 = vmatprep.subr.mxu0 0.0
        %1443 = vmatpush1.msra.mxu0 0.0
        %1444 = vmatprep.subr.mxu0 0.0
        %1445 = vmatpush1.msra.mxu0 0.0
        %1446 = vmatprep.subr.mxu0 0.0
        %1447 = vmatpush1.msra.mxu0 %v1428
        %1448 = vmatprep.subr.mxu0 0.0
        %1449 = vmatpush1.msra.mxu0 %v1418
        %1450 = vmatprep.subr.mxu0 0.0
        %1451 = vmatpush1.msra.mxu0 %v1417
        %1452 = vmatprep.subr.mxu0 0.0
        %1453 = vmatpush1.msra.mxu0 %v1416
        %1454 = vmatprep.subr.mxu0 0.0
        %1455 = vmatpush1.msra.mxu0 %v1415
        %1456 = vmatprep.subr.mxu0 0.0
        %1457 = vmatpush1.msra.mxu0 %v1414
        %1458 = vmatprep.subr.mxu0 0.0
        %1459 = vmatpush1.msra.mxu0 %v1413
        %1460 = vmatprep.subr.mxu0 0.0
        %1461 = vmatpush1.msra.mxu0 %v1412
        %1462 = vmatprep.subr.mxu0 0.0
        %1463 = vmatpush2.msra.mxu0 0.0
        %1464 = vmatprep.subr.mxu0 0.0
        %1465 = vmatpush2.msra.mxu0 0.0
        %1466 = vmatprep.subr.mxu0 0.0
        %1467 = vmatpush2.msra.mxu0 0.0
        %1468 = vmatprep.subr.mxu0 0.0
        %1469 = vmatpush2.msra.mxu0 0.0
        %1470 = vmatprep.subr.mxu0 0.0
        %1471 = vmatpush2.msra.mxu0 0.0
        %1472 = vmatprep.subr.mxu0 0.0
        %1473 = vmatpush2.msra.mxu0 0.0
        %1474 = vmatprep.subr.mxu0 0.0
        %1475 = vmatpush2.msra.mxu0 0.0
        %1476 = vmatprep.subr.mxu0 0.0
        %1477 = vmatpush2.msra.mxu0 0.0
        %1478 = vmatprep.subr.mxu0 0.0
        %1479 = vmatpush2.msra.mxu0 0.0
        %1480 = vmatprep.subr.mxu0 0.0
        %1481 = vmatpush2.msra.mxu0 0.0
        %1482 = vmatprep.subr.mxu0 0.0
        %1483 = vmatpush2.msra.mxu0 0.0
        %1484 = vmatprep.subr.mxu0 0.0
        %1485 = vmatpush2.msra.mxu0 0.0
        %1486 = vmatprep.subr.mxu0 0.0
        %1487 = vmatpush2.msra.mxu0 0.0
        %1488 = vmatprep.subr.mxu0 0.0
        %1489 = vmatpush2.msra.mxu0 0.0
        %1490 = vmatprep.subr.mxu0 0.0
        %1491 = vmatpush2.msra.mxu0 0.0
        %1492 = vmatprep.subr.mxu0 0.0
        %1493 = vmatpush2.msra.mxu0 0.0
        %1494 = vmatprep.mubr.f32.mxu0 0.0
        %1495 = vmatmul.mubr.f32.gmra.mxu0 %v1425
        %v1496 = vpop.f32.mrf.mxu0
        %v1497 = vadd.f32 %v1423, %v1496
        %v1498 = vpop.f32.mrf.mxu0
        %1499 = vdwg.mxu0
        %v1500 = vsel %vm731, %v1497, 0.0
        %1501 = vadd.xlane.f32.xlu0 %v1500
        %v1502 = vpop.xlane.xlu0 %1501
        %v1503 = vmul.f32 %v1502, 0.008333334
        %v1504 = vmul.f32 %v1497, %v1497
        %v1505 = vsel %vm731, %v1504, 0.0
        %1506 = vadd.xlane.f32.xlu0 %v1505
        %v1507 = vpop.xlane.xlu0 %1506
        %v1508 = vmul.f32 %v1507, 0.008333334
        %v1509 = vmul.f32 %v1503, %v1503
        %v1510 = vsub.f32 %v1508, %v1509
        %v1511 = vsub.f32 %v1497, %v1503
        %v1512 = vadd.f32 %v1510, 1e-05
        %v1513 = vrsqrt.pop %v1512
        %v1514 = vmul.f32 %v1511, %v1513
        %v1515 = vlaneseq
        %v1516 = vshrl.u32 %v1515, 7
        %v1517 = vsub.s32 1, %v1516
        %v1518 = vrot.slane %v1410, %v1517
        %v1519 = vmul.f32 %v1514, %v1518
        %v1520 = vlaneseq
        %v1521 = vshrl.u32 %v1520, 7
        %v1522 = vsub.s32 2, %v1521
        %v1523 = vrot.slane %v1410, %v1522
        %v1524 = vadd.f32 %v1519, %v1523
        %v1525 = vmul.f32 %v1524, 0.01
        %v1526 = vmax.f32 %v1524, %v1525
        %s1527 = scalar_lea.vmem [#allocation6], 8
        %v1528 = vld [vmem:[%s1527] sm:$0x7]
        %s1529 = scalar_lea.vmem %s4, 240
        %v1530 = vld [vmem:[%s1529] sm:$0xff]
        %v1531 = vld [vmem:[%s1529 + $0x8] sm:$0xff]
        %v1532 = vld [vmem:[%s1529 + $0x10] sm:$0xff]
        %v1533 = vld [vmem:[%s1529 + $0x18] sm:$0xff]
        %v1534 = vld [vmem:[%s1529 + $0x20] sm:$0xff]
        %v1535 = vld [vmem:[%s1529 + $0x28] sm:$0xff]
        %v1536 = vld [vmem:[%s1529 + $0x30] sm:$0xff]
        %v1537 = vld [vmem:[%s1529 + $0x38] sm:$0xff]
        %v1538 = vld [vmem:[%s1529 + $0x40] sm:$0xff]
        %v1539 = vld [vmem:[%s1529 + $0x48] sm:$0xff]
        %v1540 = vld [vmem:[%s1529 + $0x50] sm:$0xff]
        %v1541 = vld [vmem:[%s1529 + $0x58] sm:$0xff]
        %v1542 = vld [vmem:[%s1529 + $0x60] sm:$0xff]
        %v1543 = vld [vmem:[%s1529 + $0x68] sm:$0xff]
        %v1544 = vld [vmem:[%s1529 + $0x70] sm:$0xff]
        %v1545 = vlaneseq
        %v1546 = vshrl.u32 %v1545, 7
        %v1547 = vsub.s32 0, %v1546
        %v1548 = vrot.slane %v1528, %v1547
        %v1550 = vsel %vm731, %v1526, 0
        %1552 = vmatprep.subr.mxu0 0.0
        %1553 = vmatpush1.msra.mxu0 0.0
        %1554 = vmatprep.subr.mxu0 0.0
        %1555 = vmatpush1.msra.mxu0 %v1544
        %1556 = vmatprep.subr.mxu0 0.0
        %1557 = vmatpush1.msra.mxu0 %v1543
        %1558 = vmatprep.subr.mxu0 0.0
        %1559 = vmatpush1.msra.mxu0 %v1542
        %1560 = vmatprep.subr.mxu0 0.0
        %1561 = vmatpush1.msra.mxu0 %v1541
        %1562 = vmatprep.subr.mxu0 0.0
        %1563 = vmatpush1.msra.mxu0 %v1540
        %1564 = vmatprep.subr.mxu0 0.0
        %1565 = vmatpush1.msra.mxu0 %v1539
        %1566 = vmatprep.subr.mxu0 0.0
        %1567 = vmatpush1.msra.mxu0 %v1538
        %1568 = vmatprep.subr.mxu0 0.0
        %1569 = vmatpush1.msra.mxu0 %v1537
        %1570 = vmatprep.subr.mxu0 0.0
        %1571 = vmatpush1.msra.mxu0 %v1536
        %1572 = vmatprep.subr.mxu0 0.0
        %1573 = vmatpush1.msra.mxu0 %v1535
        %1574 = vmatprep.subr.mxu0 0.0
        %1575 = vmatpush1.msra.mxu0 %v1534
        %1576 = vmatprep.subr.mxu0 0.0
        %1577 = vmatpush1.msra.mxu0 %v1533
        %1578 = vmatprep.subr.mxu0 0.0
        %1579 = vmatpush1.msra.mxu0 %v1532
        %1580 = vmatprep.subr.mxu0 0.0
        %1581 = vmatpush1.msra.mxu0 %v1531
        %1582 = vmatprep.subr.mxu0 0.0
        %1583 = vmatpush1.msra.mxu0 %v1530
        %1584 = vmatprep.subr.mxu0 0.0
        %1585 = vmatpush2.msra.mxu0 0.0
        %1586 = vmatprep.subr.mxu0 0.0
        %1587 = vmatpush2.msra.mxu0 0.0
        %1588 = vmatprep.subr.mxu0 0.0
        %1589 = vmatpush2.msra.mxu0 0.0
        %1590 = vmatprep.subr.mxu0 0.0
        %1591 = vmatpush2.msra.mxu0 0.0
        %1592 = vmatprep.subr.mxu0 0.0
        %1593 = vmatpush2.msra.mxu0 0.0
        %1594 = vmatprep.subr.mxu0 0.0
        %1595 = vmatpush2.msra.mxu0 0.0
        %1596 = vmatprep.subr.mxu0 0.0
        %1597 = vmatpush2.msra.mxu0 0.0
        %1598 = vmatprep.subr.mxu0 0.0
        %1599 = vmatpush2.msra.mxu0 0.0
        %1600 = vmatprep.subr.mxu0 0.0
        %1601 = vmatpush2.msra.mxu0 0.0
        %1602 = vmatprep.subr.mxu0 0.0
        %1603 = vmatpush2.msra.mxu0 0.0
        %1604 = vmatprep.subr.mxu0 0.0
        %1605 = vmatpush2.msra.mxu0 0.0
        %1606 = vmatprep.subr.mxu0 0.0
        %1607 = vmatpush2.msra.mxu0 0.0
        %1608 = vmatprep.subr.mxu0 0.0
        %1609 = vmatpush2.msra.mxu0 0.0
        %1610 = vmatprep.subr.mxu0 0.0
        %1611 = vmatpush2.msra.mxu0 0.0
        %1612 = vmatprep.subr.mxu0 0.0
        %1613 = vmatpush2.msra.mxu0 0.0
        %1614 = vmatprep.subr.mxu0 0.0
        %1615 = vmatpush2.msra.mxu0 0.0
        %1616 = vmatprep.mubr.f32.mxu0 0.0
        %1617 = vmatmul.mubr.f32.gmra.mxu0 %v1550
        %v1618 = vpop.f32.mrf.mxu0
        %v1619 = vadd.f32 %v1548, %v1618
        %v1620 = vpop.f32.mrf.mxu0
        %1621 = vdwg.mxu0
        %v1622 = vsel %vm731, %v1619, 0.0
        %1623 = vadd.xlane.f32.xlu0 %v1622
        %v1624 = vpop.xlane.xlu0 %1623
        %v1625 = vmul.f32 %v1624, 0.008333334
        %v1626 = vmul.f32 %v1619, %v1619
        %v1627 = vsel %vm731, %v1626, 0.0
        %1628 = vadd.xlane.f32.xlu0 %v1627
        %v1629 = vpop.xlane.xlu0 %1628
        %v1630 = vmul.f32 %v1629, 0.008333334
        %v1631 = vmul.f32 %v1625, %v1625
        %v1632 = vsub.f32 %v1630, %v1631
        %v1633 = vsub.f32 %v1619, %v1625
        %v1634 = vadd.f32 %v1632, 1e-05
        %v1635 = vrsqrt.pop %v1634
        %v1636 = vmul.f32 %v1633, %v1635
        %v1637 = vlaneseq
        %v1638 = vshrl.u32 %v1637, 7
        %v1639 = vsub.s32 1, %v1638
        %v1640 = vrot.slane %v1528, %v1639
        %v1641 = vmul.f32 %v1636, %v1640
        %v1642 = vlaneseq
        %v1643 = vshrl.u32 %v1642, 7
        %v1644 = vsub.s32 2, %v1643
        %v1645 = vrot.slane %v1528, %v1644
        %v1646 = vadd.f32 %v1641, %v1645
        %v1647 = vmul.f32 %v1646, 0.01
        %v1648 = vmax.f32 %v1646, %v1647
        %s1649 = scalar_lea.vmem [#allocation8], 480
        %v1650 = vld [vmem:[%s1649] sm:$0xff]
        %v1651 = vld [vmem:[%s1649 + $0x8] sm:$0xff]
        %v1652 = vld [vmem:[%s1649 + $0x10] sm:$0xff]
        %v1653 = vld [vmem:[%s1649 + $0x18] sm:$0xff]
        %v1654 = vld [vmem:[%s1649 + $0x20] sm:$0xff]
        %v1655 = vld [vmem:[%s1649 + $0x28] sm:$0xff]
        %v1656 = vld [vmem:[%s1649 + $0x30] sm:$0xff]
        %v1657 = vld [vmem:[%s1649 + $0x38] sm:$0xff]
        %v1658 = vld [vmem:[%s1649 + $0x40] sm:$0xff]
        %v1659 = vld [vmem:[%s1649 + $0x48] sm:$0xff]
        %v1660 = vld [vmem:[%s1649 + $0x50] sm:$0xff]
        %v1661 = vld [vmem:[%s1649 + $0x58] sm:$0xff]
        %v1662 = vld [vmem:[%s1649 + $0x60] sm:$0xff]
        %v1663 = vld [vmem:[%s1649 + $0x68] sm:$0xff]
        %v1664 = vld [vmem:[%s1649 + $0x70] sm:$0xff]
        %v1665 = vld [vmem:[%s1649 + $0x78] sm:$0xff]
        %v1666 = vld [vmem:[%s1649 + $0x80] sm:$0xff]
        %v1667 = vld [vmem:[%s1649 + $0x88] sm:$0xff]
        %v1668 = vld [vmem:[%s1649 + $0x90] sm:$0xff]
        %v1669 = vld [vmem:[%s1649 + $0x98] sm:$0xff]
        %v1670 = vld [vmem:[%s1649 + $0xa0] sm:$0xff]
        %v1671 = vld [vmem:[%s1649 + $0xa8] sm:$0xff]
        %v1672 = vld [vmem:[%s1649 + $0xb0] sm:$0xff]
        %v1673 = vld [vmem:[%s1649 + $0xb8] sm:$0xff]
        %v1674 = vld [vmem:[%s1649 + $0xc0] sm:$0xff]
        %v1675 = vld [vmem:[%s1649 + $0xc8] sm:$0xff]
        %v1676 = vld [vmem:[%s1649 + $0xd0] sm:$0xff]
        %v1677 = vld [vmem:[%s1649 + $0xd8] sm:$0xff]
        %v1678 = vld [vmem:[%s1649 + $0xe0] sm:$0xff]
        %v1679 = vld [vmem:[%s1649 + $0xe8] sm:$0xff]
        %v1681 = vsel %vm731, %v1648, 0
        %1683 = vmatprep.subr.mxu0 0.0
        %1684 = vmatpush1.msra.mxu0 0.0
        %1685 = vmatprep.subr.mxu0 %v1679
        %1686 = vmatpush1.msra.mxu0 %v1678
        %1687 = vmatprep.subr.mxu0 %v1677
        %1688 = vmatpush1.msra.mxu0 %v1676
        %1689 = vmatprep.subr.mxu0 %v1675
        %1690 = vmatpush1.msra.mxu0 %v1674
        %1691 = vmatprep.subr.mxu0 %v1673
        %1692 = vmatpush1.msra.mxu0 %v1672
        %1693 = vmatprep.subr.mxu0 %v1671
        %1694 = vmatpush1.msra.mxu0 %v1670
        %1695 = vmatprep.subr.mxu0 %v1669
        %1696 = vmatpush1.msra.mxu0 %v1668
        %1697 = vmatprep.subr.mxu0 %v1667
        %1698 = vmatpush1.msra.mxu0 %v1666
        %1699 = vmatprep.subr.mxu0 %v1665
        %1700 = vmatpush1.msra.mxu0 %v1664
        %1701 = vmatprep.subr.mxu0 %v1663
        %1702 = vmatpush1.msra.mxu0 %v1662
        %1703 = vmatprep.subr.mxu0 %v1661
        %1704 = vmatpush1.msra.mxu0 %v1660
        %1705 = vmatprep.subr.mxu0 %v1659
        %1706 = vmatpush1.msra.mxu0 %v1658
        %1707 = vmatprep.subr.mxu0 %v1657
        %1708 = vmatpush1.msra.mxu0 %v1656
        %1709 = vmatprep.subr.mxu0 %v1655
        %1710 = vmatpush1.msra.mxu0 %v1654
        %1711 = vmatprep.subr.mxu0 %v1653
        %1712 = vmatpush1.msra.mxu0 %v1652
        %1713 = vmatprep.subr.mxu0 %v1651
        %1714 = vmatpush1.msra.mxu0 %v1650
        %1715 = vmatprep.subr.mxu0 0.0
        %1716 = vmatpush2.msra.mxu0 0.0
        %1717 = vmatprep.subr.mxu0 0.0
        %1718 = vmatpush2.msra.mxu0 0.0
        %1719 = vmatprep.subr.mxu0 0.0
        %1720 = vmatpush2.msra.mxu0 0.0
        %1721 = vmatprep.subr.mxu0 0.0
        %1722 = vmatpush2.msra.mxu0 0.0
        %1723 = vmatprep.subr.mxu0 0.0
        %1724 = vmatpush2.msra.mxu0 0.0
        %1725 = vmatprep.subr.mxu0 0.0
        %1726 = vmatpush2.msra.mxu0 0.0
        %1727 = vmatprep.subr.mxu0 0.0
        %1728 = vmatpush2.msra.mxu0 0.0
        %1729 = vmatprep.subr.mxu0 0.0
        %1730 = vmatpush2.msra.mxu0 0.0
        %1731 = vmatprep.subr.mxu0 0.0
        %1732 = vmatpush2.msra.mxu0 0.0
        %1733 = vmatprep.subr.mxu0 0.0
        %1734 = vmatpush2.msra.mxu0 0.0
        %1735 = vmatprep.subr.mxu0 0.0
        %1736 = vmatpush2.msra.mxu0 0.0
        %1737 = vmatprep.subr.mxu0 0.0
        %1738 = vmatpush2.msra.mxu0 0.0
        %1739 = vmatprep.subr.mxu0 0.0
        %1740 = vmatpush2.msra.mxu0 0.0
        %1741 = vmatprep.subr.mxu0 0.0
        %1742 = vmatpush2.msra.mxu0 0.0
        %1743 = vmatprep.subr.mxu0 0.0
        %1744 = vmatpush2.msra.mxu0 0.0
        %1745 = vmatprep.subr.mxu0 0.0
        %1746 = vmatpush2.msra.mxu0 0.0
        %1747 = vmatprep.mubr.f32.mxu0 0.0
        %1748 = vmatmul.mubr.f32.gmra.mxu0 %v1681
        %v1749 = vpop.f32.mrf.mxu0
        %v1750 = vadd.f32 0.0, %v1749
        %v1751 = vpop.f32.mrf.mxu0
        %v1752 = vadd.f32 0.0, %v1751
        %1753 = vdwg.mxu0
        %v1754 = vadd.f32 %v1405, %v1750
        %v1755 = vadd.f32 %v1406, %v1752
        %s1756 = scalar_lea.vmem %s553, 24 [#allocation2]
        %v1757 = vld [vmem:[%s1756] sm:$0xff]
        %s1758 = scalar_lea.vmem [#allocation3], 12
        %v1759 = vld [vmem:[%s1758] sm:$0x7]
        %s1760 = scalar_lea.vmem %s2, 192
        %v1761 = vld [vmem:[%s1760] sm:$0xff]
        %v1762 = vld [vmem:[%s1760 + $0x8] sm:$0xff]
        %v1763 = vld [vmem:[%s1760 + $0x10] sm:$0xff]
        %v1764 = vld [vmem:[%s1760 + $0x18] sm:$0xff]
        %v1765 = vld [vmem:[%s1760 + $0x20] sm:$0xff]
        %v1766 = vld [vmem:[%s1760 + $0x28] sm:$0xff]
        %v1767 = vld [vmem:[%s1760 + $0x30] sm:$0xff]
        %v1768 = vld [vmem:[%s1760 + $0x38] sm:$0xf]
        %v1769 = vlaneseq
        %v1770 = vshrl.u32 %v1769, 7
        %v1771 = vsub.s32 0, %v1770
        %v1772 = vrot.slane %v1759, %v1771
        %v1774 = vsel %vm653, %v1757, 0
        %v1777 = vsel %vm657, %v1768, 0
        %1779 = vmatprep.subr.mxu0 0.0
        %1780 = vmatpush1.msra.mxu0 0.0
        %1781 = vmatprep.subr.mxu0 0.0
        %1782 = vmatpush1.msra.mxu0 0.0
        %1783 = vmatprep.subr.mxu0 0.0
        %1784 = vmatpush1.msra.mxu0 0.0
        %1785 = vmatprep.subr.mxu0 0.0
        %1786 = vmatpush1.msra.mxu0 0.0
        %1787 = vmatprep.subr.mxu0 0.0
        %1788 = vmatpush1.msra.mxu0 0.0
        %1789 = vmatprep.subr.mxu0 0.0
        %1790 = vmatpush1.msra.mxu0 0.0
        %1791 = vmatprep.subr.mxu0 0.0
        %1792 = vmatpush1.msra.mxu0 0.0
        %1793 = vmatprep.subr.mxu0 0.0
        %1794 = vmatpush1.msra.mxu0 0.0
        %1795 = vmatprep.subr.mxu0 0.0
        %1796 = vmatpush1.msra.mxu0 %v1777
        %1797 = vmatprep.subr.mxu0 0.0
        %1798 = vmatpush1.msra.mxu0 %v1767
        %1799 = vmatprep.subr.mxu0 0.0
        %1800 = vmatpush1.msra.mxu0 %v1766
        %1801 = vmatprep.subr.mxu0 0.0
        %1802 = vmatpush1.msra.mxu0 %v1765
        %1803 = vmatprep.subr.mxu0 0.0
        %1804 = vmatpush1.msra.mxu0 %v1764
        %1805 = vmatprep.subr.mxu0 0.0
        %1806 = vmatpush1.msra.mxu0 %v1763
        %1807 = vmatprep.subr.mxu0 0.0
        %1808 = vmatpush1.msra.mxu0 %v1762
        %1809 = vmatprep.subr.mxu0 0.0
        %1810 = vmatpush1.msra.mxu0 %v1761
        %1811 = vmatprep.subr.mxu0 0.0
        %1812 = vmatpush2.msra.mxu0 0.0
        %1813 = vmatprep.subr.mxu0 0.0
        %1814 = vmatpush2.msra.mxu0 0.0
        %1815 = vmatprep.subr.mxu0 0.0
        %1816 = vmatpush2.msra.mxu0 0.0
        %1817 = vmatprep.subr.mxu0 0.0
        %1818 = vmatpush2.msra.mxu0 0.0
        %1819 = vmatprep.subr.mxu0 0.0
        %1820 = vmatpush2.msra.mxu0 0.0
        %1821 = vmatprep.subr.mxu0 0.0
        %1822 = vmatpush2.msra.mxu0 0.0
        %1823 = vmatprep.subr.mxu0 0.0
        %1824 = vmatpush2.msra.mxu0 0.0
        %1825 = vmatprep.subr.mxu0 0.0
        %1826 = vmatpush2.msra.mxu0 0.0
        %1827 = vmatprep.subr.mxu0 0.0
        %1828 = vmatpush2.msra.mxu0 0.0
        %1829 = vmatprep.subr.mxu0 0.0
        %1830 = vmatpush2.msra.mxu0 0.0
        %1831 = vmatprep.subr.mxu0 0.0
        %1832 = vmatpush2.msra.mxu0 0.0
        %1833 = vmatprep.subr.mxu0 0.0
        %1834 = vmatpush2.msra.mxu0 0.0
        %1835 = vmatprep.subr.mxu0 0.0
        %1836 = vmatpush2.msra.mxu0 0.0
        %1837 = vmatprep.subr.mxu0 0.0
        %1838 = vmatpush2.msra.mxu0 0.0
        %1839 = vmatprep.subr.mxu0 0.0
        %1840 = vmatpush2.msra.mxu0 0.0
        %1841 = vmatprep.subr.mxu0 0.0
        %1842 = vmatpush2.msra.mxu0 0.0
        %1843 = vmatprep.mubr.f32.mxu0 0.0
        %1844 = vmatmul.mubr.f32.gmra.mxu0 %v1774
        %v1845 = vpop.f32.mrf.mxu0
        %v1846 = vadd.f32 %v1772, %v1845
        %v1847 = vpop.f32.mrf.mxu0
        %1848 = vdwg.mxu0
        %v1849 = vsel %vm731, %v1846, 0.0
        %1850 = vadd.xlane.f32.xlu0 %v1849
        %v1851 = vpop.xlane.xlu0 %1850
        %v1852 = vmul.f32 %v1851, 0.008333334
        %v1853 = vmul.f32 %v1846, %v1846
        %v1854 = vsel %vm731, %v1853, 0.0
        %1855 = vadd.xlane.f32.xlu0 %v1854
        %v1856 = vpop.xlane.xlu0 %1855
        %v1857 = vmul.f32 %v1856, 0.008333334
        %v1858 = vmul.f32 %v1852, %v1852
        %v1859 = vsub.f32 %v1857, %v1858
        %v1860 = vsub.f32 %v1846, %v1852
        %v1861 = vadd.f32 %v1859, 1e-05
        %v1862 = vrsqrt.pop %v1861
        %v1863 = vmul.f32 %v1860, %v1862
        %v1864 = vlaneseq
        %v1865 = vshrl.u32 %v1864, 7
        %v1866 = vsub.s32 1, %v1865
        %v1867 = vrot.slane %v1759, %v1866
        %v1868 = vmul.f32 %v1863, %v1867
        %v1869 = vlaneseq
        %v1870 = vshrl.u32 %v1869, 7
        %v1871 = vsub.s32 2, %v1870
        %v1872 = vrot.slane %v1759, %v1871
        %v1873 = vadd.f32 %v1868, %v1872
        %v1874 = vmul.f32 %v1873, 0.01
        %v1875 = vmax.f32 %v1873, %v1874
        %s1876 = scalar_lea.vmem [#allocation6], 12
        %v1877 = vld [vmem:[%s1876] sm:$0x7]
        %s1878 = scalar_lea.vmem %s4, 360
        %v1879 = vld [vmem:[%s1878] sm:$0xff]
        %v1880 = vld [vmem:[%s1878 + $0x8] sm:$0xff]
        %v1881 = vld [vmem:[%s1878 + $0x10] sm:$0xff]
        %v1882 = vld [vmem:[%s1878 + $0x18] sm:$0xff]
        %v1883 = vld [vmem:[%s1878 + $0x20] sm:$0xff]
        %v1884 = vld [vmem:[%s1878 + $0x28] sm:$0xff]
        %v1885 = vld [vmem:[%s1878 + $0x30] sm:$0xff]
        %v1886 = vld [vmem:[%s1878 + $0x38] sm:$0xff]
        %v1887 = vld [vmem:[%s1878 + $0x40] sm:$0xff]
        %v1888 = vld [vmem:[%s1878 + $0x48] sm:$0xff]
        %v1889 = vld [vmem:[%s1878 + $0x50] sm:$0xff]
        %v1890 = vld [vmem:[%s1878 + $0x58] sm:$0xff]
        %v1891 = vld [vmem:[%s1878 + $0x60] sm:$0xff]
        %v1892 = vld [vmem:[%s1878 + $0x68] sm:$0xff]
        %v1893 = vld [vmem:[%s1878 + $0x70] sm:$0xff]
        %v1894 = vlaneseq
        %v1895 = vshrl.u32 %v1894, 7
        %v1896 = vsub.s32 0, %v1895
        %v1897 = vrot.slane %v1877, %v1896
        %v1899 = vsel %vm731, %v1875, 0
        %1901 = vmatprep.subr.mxu0 0.0
        %1902 = vmatpush1.msra.mxu0 0.0
        %1903 = vmatprep.subr.mxu0 0.0
        %1904 = vmatpush1.msra.mxu0 %v1893
        %1905 = vmatprep.subr.mxu0 0.0
        %1906 = vmatpush1.msra.mxu0 %v1892
        %1907 = vmatprep.subr.mxu0 0.0
        %1908 = vmatpush1.msra.mxu0 %v1891
        %1909 = vmatprep.subr.mxu0 0.0
        %1910 = vmatpush1.msra.mxu0 %v1890
        %1911 = vmatprep.subr.mxu0 0.0
        %1912 = vmatpush1.msra.mxu0 %v1889
        %1913 = vmatprep.subr.mxu0 0.0
        %1914 = vmatpush1.msra.mxu0 %v1888
        %1915 = vmatprep.subr.mxu0 0.0
        %1916 = vmatpush1.msra.mxu0 %v1887
        %1917 = vmatprep.subr.mxu0 0.0
        %1918 = vmatpush1.msra.mxu0 %v1886
        %1919 = vmatprep.subr.mxu0 0.0
        %1920 = vmatpush1.msra.mxu0 %v1885
        %1921 = vmatprep.subr.mxu0 0.0
        %1922 = vmatpush1.msra.mxu0 %v1884
        %1923 = vmatprep.subr.mxu0 0.0
        %1924 = vmatpush1.msra.mxu0 %v1883
        %1925 = vmatprep.subr.mxu0 0.0
        %1926 = vmatpush1.msra.mxu0 %v1882
        %1927 = vmatprep.subr.mxu0 0.0
        %1928 = vmatpush1.msra.mxu0 %v1881
        %1929 = vmatprep.subr.mxu0 0.0
        %1930 = vmatpush1.msra.mxu0 %v1880
        %1931 = vmatprep.subr.mxu0 0.0
        %1932 = vmatpush1.msra.mxu0 %v1879
        %1933 = vmatprep.subr.mxu0 0.0
        %1934 = vmatpush2.msra.mxu0 0.0
        %1935 = vmatprep.subr.mxu0 0.0
        %1936 = vmatpush2.msra.mxu0 0.0
        %1937 = vmatprep.subr.mxu0 0.0
        %1938 = vmatpush2.msra.mxu0 0.0
        %1939 = vmatprep.subr.mxu0 0.0
        %1940 = vmatpush2.msra.mxu0 0.0
        %1941 = vmatprep.subr.mxu0 0.0
        %1942 = vmatpush2.msra.mxu0 0.0
        %1943 = vmatprep.subr.mxu0 0.0
        %1944 = vmatpush2.msra.mxu0 0.0
        %1945 = vmatprep.subr.mxu0 0.0
        %1946 = vmatpush2.msra.mxu0 0.0
        %1947 = vmatprep.subr.mxu0 0.0
        %1948 = vmatpush2.msra.mxu0 0.0
        %1949 = vmatprep.subr.mxu0 0.0
        %1950 = vmatpush2.msra.mxu0 0.0
        %1951 = vmatprep.subr.mxu0 0.0
        %1952 = vmatpush2.msra.mxu0 0.0
        %1953 = vmatprep.subr.mxu0 0.0
        %1954 = vmatpush2.msra.mxu0 0.0
        %1955 = vmatprep.subr.mxu0 0.0
        %1956 = vmatpush2.msra.mxu0 0.0
        %1957 = vmatprep.subr.mxu0 0.0
        %1958 = vmatpush2.msra.mxu0 0.0
        %1959 = vmatprep.subr.mxu0 0.0
        %1960 = vmatpush2.msra.mxu0 0.0
        %1961 = vmatprep.subr.mxu0 0.0
        %1962 = vmatpush2.msra.mxu0 0.0
        %1963 = vmatprep.subr.mxu0 0.0
        %1964 = vmatpush2.msra.mxu0 0.0
        %1965 = vmatprep.mubr.f32.mxu0 0.0
        %1966 = vmatmul.mubr.f32.gmra.mxu0 %v1899
        %v1967 = vpop.f32.mrf.mxu0
        %v1968 = vadd.f32 %v1897, %v1967
        %v1969 = vpop.f32.mrf.mxu0
        %1970 = vdwg.mxu0
        %v1971 = vsel %vm731, %v1968, 0.0
        %1972 = vadd.xlane.f32.xlu0 %v1971
        %v1973 = vpop.xlane.xlu0 %1972
        %v1974 = vmul.f32 %v1973, 0.008333334
        %v1975 = vmul.f32 %v1968, %v1968
        %v1976 = vsel %vm731, %v1975, 0.0
        %1977 = vadd.xlane.f32.xlu0 %v1976
        %v1978 = vpop.xlane.xlu0 %1977
        %v1979 = vmul.f32 %v1978, 0.008333334
        %v1980 = vmul.f32 %v1974, %v1974
        %v1981 = vsub.f32 %v1979, %v1980
        %v1982 = vsub.f32 %v1968, %v1974
        %v1983 = vadd.f32 %v1981, 1e-05
        %v1984 = vrsqrt.pop %v1983
        %v1985 = vmul.f32 %v1982, %v1984
        %v1986 = vlaneseq
        %v1987 = vshrl.u32 %v1986, 7
        %v1988 = vsub.s32 1, %v1987
        %v1989 = vrot.slane %v1877, %v1988
        %v1990 = vmul.f32 %v1985, %v1989
        %v1991 = vlaneseq
        %v1992 = vshrl.u32 %v1991, 7
        %v1993 = vsub.s32 2, %v1992
        %v1994 = vrot.slane %v1877, %v1993
        %v1995 = vadd.f32 %v1990, %v1994
        %v1996 = vmul.f32 %v1995, 0.01
        %v1997 = vmax.f32 %v1995, %v1996
        %s1998 = scalar_lea.vmem [#allocation8], 720
        %v1999 = vld [vmem:[%s1998] sm:$0xff]
        %v2000 = vld [vmem:[%s1998 + $0x8] sm:$0xff]
        %v2001 = vld [vmem:[%s1998 + $0x10] sm:$0xff]
        %v2002 = vld [vmem:[%s1998 + $0x18] sm:$0xff]
        %v2003 = vld [vmem:[%s1998 + $0x20] sm:$0xff]
        %v2004 = vld [vmem:[%s1998 + $0x28] sm:$0xff]
        %v2005 = vld [vmem:[%s1998 + $0x30] sm:$0xff]
        %v2006 = vld [vmem:[%s1998 + $0x38] sm:$0xff]
        %v2007 = vld [vmem:[%s1998 + $0x40] sm:$0xff]
        %v2008 = vld [vmem:[%s1998 + $0x48] sm:$0xff]
        %v2009 = vld [vmem:[%s1998 + $0x50] sm:$0xff]
        %v2010 = vld [vmem:[%s1998 + $0x58] sm:$0xff]
        %v2011 = vld [vmem:[%s1998 + $0x60] sm:$0xff]
        %v2012 = vld [vmem:[%s1998 + $0x68] sm:$0xff]
        %v2013 = vld [vmem:[%s1998 + $0x70] sm:$0xff]
        %v2014 = vld [vmem:[%s1998 + $0x78] sm:$0xff]
        %v2015 = vld [vmem:[%s1998 + $0x80] sm:$0xff]
        %v2016 = vld [vmem:[%s1998 + $0x88] sm:$0xff]
        %v2017 = vld [vmem:[%s1998 + $0x90] sm:$0xff]
        %v2018 = vld [vmem:[%s1998 + $0x98] sm:$0xff]
        %v2019 = vld [vmem:[%s1998 + $0xa0] sm:$0xff]
        %v2020 = vld [vmem:[%s1998 + $0xa8] sm:$0xff]
        %v2021 = vld [vmem:[%s1998 + $0xb0] sm:$0xff]
        %v2022 = vld [vmem:[%s1998 + $0xb8] sm:$0xff]
        %v2023 = vld [vmem:[%s1998 + $0xc0] sm:$0xff]
        %v2024 = vld [vmem:[%s1998 + $0xc8] sm:$0xff]
        %v2025 = vld [vmem:[%s1998 + $0xd0] sm:$0xff]
        %v2026 = vld [vmem:[%s1998 + $0xd8] sm:$0xff]
        %v2027 = vld [vmem:[%s1998 + $0xe0] sm:$0xff]
        %v2028 = vld [vmem:[%s1998 + $0xe8] sm:$0xff]
        %v2030 = vsel %vm731, %v1997, 0
        %2032 = vmatprep.subr.mxu0 0.0
        %2033 = vmatpush1.msra.mxu0 0.0
        %2034 = vmatprep.subr.mxu0 %v2028
        %2035 = vmatpush1.msra.mxu0 %v2027
        %2036 = vmatprep.subr.mxu0 %v2026
        %2037 = vmatpush1.msra.mxu0 %v2025
        %2038 = vmatprep.subr.mxu0 %v2024
        %2039 = vmatpush1.msra.mxu0 %v2023
        %2040 = vmatprep.subr.mxu0 %v2022
        %2041 = vmatpush1.msra.mxu0 %v2021
        %2042 = vmatprep.subr.mxu0 %v2020
        %2043 = vmatpush1.msra.mxu0 %v2019
        %2044 = vmatprep.subr.mxu0 %v2018
        %2045 = vmatpush1.msra.mxu0 %v2017
        %2046 = vmatprep.subr.mxu0 %v2016
        %2047 = vmatpush1.msra.mxu0 %v2015
        %2048 = vmatprep.subr.mxu0 %v2014
        %2049 = vmatpush1.msra.mxu0 %v2013
        %2050 = vmatprep.subr.mxu0 %v2012
        %2051 = vmatpush1.msra.mxu0 %v2011
        %2052 = vmatprep.subr.mxu0 %v2010
        %2053 = vmatpush1.msra.mxu0 %v2009
        %2054 = vmatprep.subr.mxu0 %v2008
        %2055 = vmatpush1.msra.mxu0 %v2007
        %2056 = vmatprep.subr.mxu0 %v2006
        %2057 = vmatpush1.msra.mxu0 %v2005
        %2058 = vmatprep.subr.mxu0 %v2004
        %2059 = vmatpush1.msra.mxu0 %v2003
        %2060 = vmatprep.subr.mxu0 %v2002
        %2061 = vmatpush1.msra.mxu0 %v2001
        %2062 = vmatprep.subr.mxu0 %v2000
        %2063 = vmatpush1.msra.mxu0 %v1999
        %2064 = vmatprep.subr.mxu0 0.0
        %2065 = vmatpush2.msra.mxu0 0.0
        %2066 = vmatprep.subr.mxu0 0.0
        %2067 = vmatpush2.msra.mxu0 0.0
        %2068 = vmatprep.subr.mxu0 0.0
        %2069 = vmatpush2.msra.mxu0 0.0
        %2070 = vmatprep.subr.mxu0 0.0
        %2071 = vmatpush2.msra.mxu0 0.0
        %2072 = vmatprep.subr.mxu0 0.0
        %2073 = vmatpush2.msra.mxu0 0.0
        %2074 = vmatprep.subr.mxu0 0.0
        %2075 = vmatpush2.msra.mxu0 0.0
        %2076 = vmatprep.subr.mxu0 0.0
        %2077 = vmatpush2.msra.mxu0 0.0
        %2078 = vmatprep.subr.mxu0 0.0
        %2079 = vmatpush2.msra.mxu0 0.0
        %2080 = vmatprep.subr.mxu0 0.0
        %2081 = vmatpush2.msra.mxu0 0.0
        %2082 = vmatprep.subr.mxu0 0.0
        %2083 = vmatpush2.msra.mxu0 0.0
        %2084 = vmatprep.subr.mxu0 0.0
        %2085 = vmatpush2.msra.mxu0 0.0
        %2086 = vmatprep.subr.mxu0 0.0
        %2087 = vmatpush2.msra.mxu0 0.0
        %2088 = vmatprep.subr.mxu0 0.0
        %2089 = vmatpush2.msra.mxu0 0.0
        %2090 = vmatprep.subr.mxu0 0.0
        %2091 = vmatpush2.msra.mxu0 0.0
        %2092 = vmatprep.subr.mxu0 0.0
        %2093 = vmatpush2.msra.mxu0 0.0
        %2094 = vmatprep.subr.mxu0 0.0
        %2095 = vmatpush2.msra.mxu0 0.0
        %2096 = vmatprep.mubr.f32.mxu0 0.0
        %2097 = vmatmul.mubr.f32.gmra.mxu0 %v2030
        %v2098 = vpop.f32.mrf.mxu0
        %v2099 = vadd.f32 0.0, %v2098
        %v2100 = vpop.f32.mrf.mxu0
        %v2101 = vadd.f32 0.0, %v2100
        %2102 = vdwg.mxu0
        %v2103 = vadd.f32 %v1754, %v2099
        %v2104 = vadd.f32 %v1755, %v2101
        %s2105 = scalar_lea.vmem %s553, 32 [#allocation2]
        %v2106 = vld [vmem:[%s2105] sm:$0xff]
        %s2107 = scalar_lea.vmem [#allocation3], 16
        %v2108 = vld [vmem:[%s2107] sm:$0x7]
        %s2109 = scalar_lea.vmem %s2, 256
        %v2110 = vld [vmem:[%s2109] sm:$0xff]
        %v2111 = vld [vmem:[%s2109 + $0x8] sm:$0xff]
        %v2112 = vld [vmem:[%s2109 + $0x10] sm:$0xff]
        %v2113 = vld [vmem:[%s2109 + $0x18] sm:$0xff]
        %v2114 = vld [vmem:[%s2109 + $0x20] sm:$0xff]
        %v2115 = vld [vmem:[%s2109 + $0x28] sm:$0xff]
        %v2116 = vld [vmem:[%s2109 + $0x30] sm:$0xff]
        %v2117 = vld [vmem:[%s2109 + $0x38] sm:$0xf]
        %v2118 = vlaneseq
        %v2119 = vshrl.u32 %v2118, 7
        %v2120 = vsub.s32 0, %v2119
        %v2121 = vrot.slane %v2108, %v2120
        %v2123 = vsel %vm653, %v2106, 0
        %v2126 = vsel %vm657, %v2117, 0
        %2128 = vmatprep.subr.mxu0 0.0
        %2129 = vmatpush1.msra.mxu0 0.0
        %2130 = vmatprep.subr.mxu0 0.0
        %2131 = vmatpush1.msra.mxu0 0.0
        %2132 = vmatprep.subr.mxu0 0.0
        %2133 = vmatpush1.msra.mxu0 0.0
        %2134 = vmatprep.subr.mxu0 0.0
        %2135 = vmatpush1.msra.mxu0 0.0
        %2136 = vmatprep.subr.mxu0 0.0
        %2137 = vmatpush1.msra.mxu0 0.0
        %2138 = vmatprep.subr.mxu0 0.0
        %2139 = vmatpush1.msra.mxu0 0.0
        %2140 = vmatprep.subr.mxu0 0.0
        %2141 = vmatpush1.msra.mxu0 0.0
        %2142 = vmatprep.subr.mxu0 0.0
        %2143 = vmatpush1.msra.mxu0 0.0
        %2144 = vmatprep.subr.mxu0 0.0
        %2145 = vmatpush1.msra.mxu0 %v2126
        %2146 = vmatprep.subr.mxu0 0.0
        %2147 = vmatpush1.msra.mxu0 %v2116
        %2148 = vmatprep.subr.mxu0 0.0
        %2149 = vmatpush1.msra.mxu0 %v2115
        %2150 = vmatprep.subr.mxu0 0.0
        %2151 = vmatpush1.msra.mxu0 %v2114
        %2152 = vmatprep.subr.mxu0 0.0
        %2153 = vmatpush1.msra.mxu0 %v2113
        %2154 = vmatprep.subr.mxu0 0.0
        %2155 = vmatpush1.msra.mxu0 %v2112
        %2156 = vmatprep.subr.mxu0 0.0
        %2157 = vmatpush1.msra.mxu0 %v2111
        %2158 = vmatprep.subr.mxu0 0.0
        %2159 = vmatpush1.msra.mxu0 %v2110
        %2160 = vmatprep.subr.mxu0 0.0
        %2161 = vmatpush2.msra.mxu0 0.0
        %2162 = vmatprep.subr.mxu0 0.0
        %2163 = vmatpush2.msra.mxu0 0.0
        %2164 = vmatprep.subr.mxu0 0.0
        %2165 = vmatpush2.msra.mxu0 0.0
        %2166 = vmatprep.subr.mxu0 0.0
        %2167 = vmatpush2.msra.mxu0 0.0
        %2168 = vmatprep.subr.mxu0 0.0
        %2169 = vmatpush2.msra.mxu0 0.0
        %2170 = vmatprep.subr.mxu0 0.0
        %2171 = vmatpush2.msra.mxu0 0.0
        %2172 = vmatprep.subr.mxu0 0.0
        %2173 = vmatpush2.msra.mxu0 0.0
        %2174 = vmatprep.subr.mxu0 0.0
        %2175 = vmatpush2.msra.mxu0 0.0
        %2176 = vmatprep.subr.mxu0 0.0
        %2177 = vmatpush2.msra.mxu0 0.0
        %2178 = vmatprep.subr.mxu0 0.0
        %2179 = vmatpush2.msra.mxu0 0.0
        %2180 = vmatprep.subr.mxu0 0.0
        %2181 = vmatpush2.msra.mxu0 0.0
        %2182 = vmatprep.subr.mxu0 0.0
        %2183 = vmatpush2.msra.mxu0 0.0
        %2184 = vmatprep.subr.mxu0 0.0
        %2185 = vmatpush2.msra.mxu0 0.0
        %2186 = vmatprep.subr.mxu0 0.0
        %2187 = vmatpush2.msra.mxu0 0.0
        %2188 = vmatprep.subr.mxu0 0.0
        %2189 = vmatpush2.msra.mxu0 0.0
        %2190 = vmatprep.subr.mxu0 0.0
        %2191 = vmatpush2.msra.mxu0 0.0
        %2192 = vmatprep.mubr.f32.mxu0 0.0
        %2193 = vmatmul.mubr.f32.gmra.mxu0 %v2123
        %v2194 = vpop.f32.mrf.mxu0
        %v2195 = vadd.f32 %v2121, %v2194
        %v2196 = vpop.f32.mrf.mxu0
        %2197 = vdwg.mxu0
        %v2198 = vsel %vm731, %v2195, 0.0
        %2199 = vadd.xlane.f32.xlu0 %v2198
        %v2200 = vpop.xlane.xlu0 %2199
        %v2201 = vmul.f32 %v2200, 0.008333334
        %v2202 = vmul.f32 %v2195, %v2195
        %v2203 = vsel %vm731, %v2202, 0.0
        %2204 = vadd.xlane.f32.xlu0 %v2203
        %v2205 = vpop.xlane.xlu0 %2204
        %v2206 = vmul.f32 %v2205, 0.008333334
        %v2207 = vmul.f32 %v2201, %v2201
        %v2208 = vsub.f32 %v2206, %v2207
        %v2209 = vsub.f32 %v2195, %v2201
        %v2210 = vadd.f32 %v2208, 1e-05
        %v2211 = vrsqrt.pop %v2210
        %v2212 = vmul.f32 %v2209, %v2211
        %v2213 = vlaneseq
        %v2214 = vshrl.u32 %v2213, 7
        %v2215 = vsub.s32 1, %v2214
        %v2216 = vrot.slane %v2108, %v2215
        %v2217 = vmul.f32 %v2212, %v2216
        %v2218 = vlaneseq
        %v2219 = vshrl.u32 %v2218, 7
        %v2220 = vsub.s32 2, %v2219
        %v2221 = vrot.slane %v2108, %v2220
        %v2222 = vadd.f32 %v2217, %v2221
        %v2223 = vmul.f32 %v2222, 0.01
        %v2224 = vmax.f32 %v2222, %v2223
        %s2225 = scalar_lea.vmem [#allocation6], 16
        %v2226 = vld [vmem:[%s2225] sm:$0x7]
        %s2227 = scalar_lea.vmem %s4, 480
        %v2228 = vld [vmem:[%s2227] sm:$0xff]
        %v2229 = vld [vmem:[%s2227 + $0x8] sm:$0xff]
        %v2230 = vld [vmem:[%s2227 + $0x10] sm:$0xff]
        %v2231 = vld [vmem:[%s2227 + $0x18] sm:$0xff]
        %v2232 = vld [vmem:[%s2227 + $0x20] sm:$0xff]
        %v2233 = vld [vmem:[%s2227 + $0x28] sm:$0xff]
        %v2234 = vld [vmem:[%s2227 + $0x30] sm:$0xff]
        %v2235 = vld [vmem:[%s2227 + $0x38] sm:$0xff]
        %v2236 = vld [vmem:[%s2227 + $0x40] sm:$0xff]
        %v2237 = vld [vmem:[%s2227 + $0x48] sm:$0xff]
        %v2238 = vld [vmem:[%s2227 + $0x50] sm:$0xff]
        %v2239 = vld [vmem:[%s2227 + $0x58] sm:$0xff]
        %v2240 = vld [vmem:[%s2227 + $0x60] sm:$0xff]
        %v2241 = vld [vmem:[%s2227 + $0x68] sm:$0xff]
        %v2242 = vld [vmem:[%s2227 + $0x70] sm:$0xff]
        %v2243 = vlaneseq
        %v2244 = vshrl.u32 %v2243, 7
        %v2245 = vsub.s32 0, %v2244
        %v2246 = vrot.slane %v2226, %v2245
        %v2248 = vsel %vm731, %v2224, 0
        %2250 = vmatprep.subr.mxu0 0.0
        %2251 = vmatpush1.msra.mxu0 0.0
        %2252 = vmatprep.subr.mxu0 0.0
        %2253 = vmatpush1.msra.mxu0 %v2242
        %2254 = vmatprep.subr.mxu0 0.0
        %2255 = vmatpush1.msra.mxu0 %v2241
        %2256 = vmatprep.subr.mxu0 0.0
        %2257 = vmatpush1.msra.mxu0 %v2240
        %2258 = vmatprep.subr.mxu0 0.0
        %2259 = vmatpush1.msra.mxu0 %v2239
        %2260 = vmatprep.subr.mxu0 0.0
        %2261 = vmatpush1.msra.mxu0 %v2238
        %2262 = vmatprep.subr.mxu0 0.0
        %2263 = vmatpush1.msra.mxu0 %v2237
        %2264 = vmatprep.subr.mxu0 0.0
        %2265 = vmatpush1.msra.mxu0 %v2236
        %2266 = vmatprep.subr.mxu0 0.0
        %2267 = vmatpush1.msra.mxu0 %v2235
        %2268 = vmatprep.subr.mxu0 0.0
        %2269 = vmatpush1.msra.mxu0 %v2234
        %2270 = vmatprep.subr.mxu0 0.0
        %2271 = vmatpush1.msra.mxu0 %v2233
        %2272 = vmatprep.subr.mxu0 0.0
        %2273 = vmatpush1.msra.mxu0 %v2232
        %2274 = vmatprep.subr.mxu0 0.0
        %2275 = vmatpush1.msra.mxu0 %v2231
        %2276 = vmatprep.subr.mxu0 0.0
        %2277 = vmatpush1.msra.mxu0 %v2230
        %2278 = vmatprep.subr.mxu0 0.0
        %2279 = vmatpush1.msra.mxu0 %v2229
        %2280 = vmatprep.subr.mxu0 0.0
        %2281 = vmatpush1.msra.mxu0 %v2228
        %2282 = vmatprep.subr.mxu0 0.0
        %2283 = vmatpush2.msra.mxu0 0.0
        %2284 = vmatprep.subr.mxu0 0.0
        %2285 = vmatpush2.msra.mxu0 0.0
        %2286 = vmatprep.subr.mxu0 0.0
        %2287 = vmatpush2.msra.mxu0 0.0
        %2288 = vmatprep.subr.mxu0 0.0
        %2289 = vmatpush2.msra.mxu0 0.0
        %2290 = vmatprep.subr.mxu0 0.0
        %2291 = vmatpush2.msra.mxu0 0.0
        %2292 = vmatprep.subr.mxu0 0.0
        %2293 = vmatpush2.msra.mxu0 0.0
        %2294 = vmatprep.subr.mxu0 0.0
        %2295 = vmatpush2.msra.mxu0 0.0
        %2296 = vmatprep.subr.mxu0 0.0
        %2297 = vmatpush2.msra.mxu0 0.0
        %2298 = vmatprep.subr.mxu0 0.0
        %2299 = vmatpush2.msra.mxu0 0.0
        %2300 = vmatprep.subr.mxu0 0.0
        %2301 = vmatpush2.msra.mxu0 0.0
        %2302 = vmatprep.subr.mxu0 0.0
        %2303 = vmatpush2.msra.mxu0 0.0
        %2304 = vmatprep.subr.mxu0 0.0
        %2305 = vmatpush2.msra.mxu0 0.0
        %2306 = vmatprep.subr.mxu0 0.0
        %2307 = vmatpush2.msra.mxu0 0.0
        %2308 = vmatprep.subr.mxu0 0.0
        %2309 = vmatpush2.msra.mxu0 0.0
        %2310 = vmatprep.subr.mxu0 0.0
        %2311 = vmatpush2.msra.mxu0 0.0
        %2312 = vmatprep.subr.mxu0 0.0
        %2313 = vmatpush2.msra.mxu0 0.0
        %2314 = vmatprep.mubr.f32.mxu0 0.0
        %2315 = vmatmul.mubr.f32.gmra.mxu0 %v2248
        %v2316 = vpop.f32.mrf.mxu0
        %v2317 = vadd.f32 %v2246, %v2316
        %v2318 = vpop.f32.mrf.mxu0
        %2319 = vdwg.mxu0
        %v2320 = vsel %vm731, %v2317, 0.0
        %2321 = vadd.xlane.f32.xlu0 %v2320
        %v2322 = vpop.xlane.xlu0 %2321
        %v2323 = vmul.f32 %v2322, 0.008333334
        %v2324 = vmul.f32 %v2317, %v2317
        %v2325 = vsel %vm731, %v2324, 0.0
        %2326 = vadd.xlane.f32.xlu0 %v2325
        %v2327 = vpop.xlane.xlu0 %2326
        %v2328 = vmul.f32 %v2327, 0.008333334
        %v2329 = vmul.f32 %v2323, %v2323
        %v2330 = vsub.f32 %v2328, %v2329
        %v2331 = vsub.f32 %v2317, %v2323
        %v2332 = vadd.f32 %v2330, 1e-05
        %v2333 = vrsqrt.pop %v2332
        %v2334 = vmul.f32 %v2331, %v2333
        %v2335 = vlaneseq
        %v2336 = vshrl.u32 %v2335, 7
        %v2337 = vsub.s32 1, %v2336
        %v2338 = vrot.slane %v2226, %v2337
        %v2339 = vmul.f32 %v2334, %v2338
        %v2340 = vlaneseq
        %v2341 = vshrl.u32 %v2340, 7
        %v2342 = vsub.s32 2, %v2341
        %v2343 = vrot.slane %v2226, %v2342
        %v2344 = vadd.f32 %v2339, %v2343
        %v2345 = vmul.f32 %v2344, 0.01
        %v2346 = vmax.f32 %v2344, %v2345
        %s2347 = scalar_lea.vmem [#allocation8], 960
        %v2348 = vld [vmem:[%s2347] sm:$0xff]
        %v2349 = vld [vmem:[%s2347 + $0x8] sm:$0xff]
        %v2350 = vld [vmem:[%s2347 + $0x10] sm:$0xff]
        %v2351 = vld [vmem:[%s2347 + $0x18] sm:$0xff]
        %v2352 = vld [vmem:[%s2347 + $0x20] sm:$0xff]
        %v2353 = vld [vmem:[%s2347 + $0x28] sm:$0xff]
        %v2354 = vld [vmem:[%s2347 + $0x30] sm:$0xff]
        %v2355 = vld [vmem:[%s2347 + $0x38] sm:$0xff]
        %v2356 = vld [vmem:[%s2347 + $0x40] sm:$0xff]
        %v2357 = vld [vmem:[%s2347 + $0x48] sm:$0xff]
        %v2358 = vld [vmem:[%s2347 + $0x50] sm:$0xff]
        %v2359 = vld [vmem:[%s2347 + $0x58] sm:$0xff]
        %v2360 = vld [vmem:[%s2347 + $0x60] sm:$0xff]
        %v2361 = vld [vmem:[%s2347 + $0x68] sm:$0xff]
        %v2362 = vld [vmem:[%s2347 + $0x70] sm:$0xff]
        %v2363 = vld [vmem:[%s2347 + $0x78] sm:$0xff]
        %v2364 = vld [vmem:[%s2347 + $0x80] sm:$0xff]
        %v2365 = vld [vmem:[%s2347 + $0x88] sm:$0xff]
        %v2366 = vld [vmem:[%s2347 + $0x90] sm:$0xff]
        %v2367 = vld [vmem:[%s2347 + $0x98] sm:$0xff]
        %v2368 = vld [vmem:[%s2347 + $0xa0] sm:$0xff]
        %v2369 = vld [vmem:[%s2347 + $0xa8] sm:$0xff]
        %v2370 = vld [vmem:[%s2347 + $0xb0] sm:$0xff]
        %v2371 = vld [vmem:[%s2347 + $0xb8] sm:$0xff]
        %v2372 = vld [vmem:[%s2347 + $0xc0] sm:$0xff]
        %v2373 = vld [vmem:[%s2347 + $0xc8] sm:$0xff]
        %v2374 = vld [vmem:[%s2347 + $0xd0] sm:$0xff]
        %v2375 = vld [vmem:[%s2347 + $0xd8] sm:$0xff]
        %v2376 = vld [vmem:[%s2347 + $0xe0] sm:$0xff]
        %v2377 = vld [vmem:[%s2347 + $0xe8] sm:$0xff]
        %v2379 = vsel %vm731, %v2346, 0
        %2381 = vmatprep.subr.mxu0 0.0
        %2382 = vmatpush1.msra.mxu0 0.0
        %2383 = vmatprep.subr.mxu0 %v2377
        %2384 = vmatpush1.msra.mxu0 %v2376
        %2385 = vmatprep.subr.mxu0 %v2375
        %2386 = vmatpush1.msra.mxu0 %v2374
        %2387 = vmatprep.subr.mxu0 %v2373
        %2388 = vmatpush1.msra.mxu0 %v2372
        %2389 = vmatprep.subr.mxu0 %v2371
        %2390 = vmatpush1.msra.mxu0 %v2370
        %2391 = vmatprep.subr.mxu0 %v2369
        %2392 = vmatpush1.msra.mxu0 %v2368
        %2393 = vmatprep.subr.mxu0 %v2367
        %2394 = vmatpush1.msra.mxu0 %v2366
        %2395 = vmatprep.subr.mxu0 %v2365
        %2396 = vmatpush1.msra.mxu0 %v2364
        %2397 = vmatprep.subr.mxu0 %v2363
        %2398 = vmatpush1.msra.mxu0 %v2362
        %2399 = vmatprep.subr.mxu0 %v2361
        %2400 = vmatpush1.msra.mxu0 %v2360
        %2401 = vmatprep.subr.mxu0 %v2359
        %2402 = vmatpush1.msra.mxu0 %v2358
        %2403 = vmatprep.subr.mxu0 %v2357
        %2404 = vmatpush1.msra.mxu0 %v2356
        %2405 = vmatprep.subr.mxu0 %v2355
        %2406 = vmatpush1.msra.mxu0 %v2354
        %2407 = vmatprep.subr.mxu0 %v2353
        %2408 = vmatpush1.msra.mxu0 %v2352
        %2409 = vmatprep.subr.mxu0 %v2351
        %2410 = vmatpush1.msra.mxu0 %v2350
        %2411 = vmatprep.subr.mxu0 %v2349
        %2412 = vmatpush1.msra.mxu0 %v2348
        %2413 = vmatprep.subr.mxu0 0.0
        %2414 = vmatpush2.msra.mxu0 0.0
        %2415 = vmatprep.subr.mxu0 0.0
        %2416 = vmatpush2.msra.mxu0 0.0
        %2417 = vmatprep.subr.mxu0 0.0
        %2418 = vmatpush2.msra.mxu0 0.0
        %2419 = vmatprep.subr.mxu0 0.0
        %2420 = vmatpush2.msra.mxu0 0.0
        %2421 = vmatprep.subr.mxu0 0.0
        %2422 = vmatpush2.msra.mxu0 0.0
        %2423 = vmatprep.subr.mxu0 0.0
        %2424 = vmatpush2.msra.mxu0 0.0
        %2425 = vmatprep.subr.mxu0 0.0
        %2426 = vmatpush2.msra.mxu0 0.0
        %2427 = vmatprep.subr.mxu0 0.0
        %2428 = vmatpush2.msra.mxu0 0.0
        %2429 = vmatprep.subr.mxu0 0.0
        %2430 = vmatpush2.msra.mxu0 0.0
        %2431 = vmatprep.subr.mxu0 0.0
        %2432 = vmatpush2.msra.mxu0 0.0
        %2433 = vmatprep.subr.mxu0 0.0
        %2434 = vmatpush2.msra.mxu0 0.0
        %2435 = vmatprep.subr.mxu0 0.0
        %2436 = vmatpush2.msra.mxu0 0.0
        %2437 = vmatprep.subr.mxu0 0.0
        %2438 = vmatpush2.msra.mxu0 0.0
        %2439 = vmatprep.subr.mxu0 0.0
        %2440 = vmatpush2.msra.mxu0 0.0
        %2441 = vmatprep.subr.mxu0 0.0
        %2442 = vmatpush2.msra.mxu0 0.0
        %2443 = vmatprep.subr.mxu0 0.0
        %2444 = vmatpush2.msra.mxu0 0.0
        %2445 = vmatprep.mubr.f32.mxu0 0.0
        %2446 = vmatmul.mubr.f32.gmra.mxu0 %v2379
        %v2447 = vpop.f32.mrf.mxu0
        %v2448 = vadd.f32 0.0, %v2447
        %v2449 = vpop.f32.mrf.mxu0
        %v2450 = vadd.f32 0.0, %v2449
        %2451 = vdwg.mxu0
        %v2452 = vadd.f32 %v2103, %v2448
        %v2453 = vadd.f32 %v2104, %v2450
        %s2454 = scalar_lea.vmem %s553, 40 [#allocation2]
        %v2455 = vld [vmem:[%s2454] sm:$0xff]
        %s2456 = scalar_lea.vmem [#allocation3], 20
        %v2457 = vld [vmem:[%s2456] sm:$0x7]
        %s2458 = scalar_lea.vmem %s2, 320
        %v2459 = vld [vmem:[%s2458] sm:$0xff]
        %v2460 = vld [vmem:[%s2458 + $0x8] sm:$0xff]
        %v2461 = vld [vmem:[%s2458 + $0x10] sm:$0xff]
        %v2462 = vld [vmem:[%s2458 + $0x18] sm:$0xff]
        %v2463 = vld [vmem:[%s2458 + $0x20] sm:$0xff]
        %v2464 = vld [vmem:[%s2458 + $0x28] sm:$0xff]
        %v2465 = vld [vmem:[%s2458 + $0x30] sm:$0xff]
        %v2466 = vld [vmem:[%s2458 + $0x38] sm:$0xf]
        %v2467 = vlaneseq
        %v2468 = vshrl.u32 %v2467, 7
        %v2469 = vsub.s32 0, %v2468
        %v2470 = vrot.slane %v2457, %v2469
        %v2472 = vsel %vm653, %v2455, 0
        %v2475 = vsel %vm657, %v2466, 0
        %2477 = vmatprep.subr.mxu0 0.0
        %2478 = vmatpush1.msra.mxu0 0.0
        %2479 = vmatprep.subr.mxu0 0.0
        %2480 = vmatpush1.msra.mxu0 0.0
        %2481 = vmatprep.subr.mxu0 0.0
        %2482 = vmatpush1.msra.mxu0 0.0
        %2483 = vmatprep.subr.mxu0 0.0
        %2484 = vmatpush1.msra.mxu0 0.0
        %2485 = vmatprep.subr.mxu0 0.0
        %2486 = vmatpush1.msra.mxu0 0.0
        %2487 = vmatprep.subr.mxu0 0.0
        %2488 = vmatpush1.msra.mxu0 0.0
        %2489 = vmatprep.subr.mxu0 0.0
        %2490 = vmatpush1.msra.mxu0 0.0
        %2491 = vmatprep.subr.mxu0 0.0
        %2492 = vmatpush1.msra.mxu0 0.0
        %2493 = vmatprep.subr.mxu0 0.0
        %2494 = vmatpush1.msra.mxu0 %v2475
        %2495 = vmatprep.subr.mxu0 0.0
        %2496 = vmatpush1.msra.mxu0 %v2465
        %2497 = vmatprep.subr.mxu0 0.0
        %2498 = vmatpush1.msra.mxu0 %v2464
        %2499 = vmatprep.subr.mxu0 0.0
        %2500 = vmatpush1.msra.mxu0 %v2463
        %2501 = vmatprep.subr.mxu0 0.0
        %2502 = vmatpush1.msra.mxu0 %v2462
        %2503 = vmatprep.subr.mxu0 0.0
        %2504 = vmatpush1.msra.mxu0 %v2461
        %2505 = vmatprep.subr.mxu0 0.0
        %2506 = vmatpush1.msra.mxu0 %v2460
        %2507 = vmatprep.subr.mxu0 0.0
        %2508 = vmatpush1.msra.mxu0 %v2459
        %2509 = vmatprep.subr.mxu0 0.0
        %2510 = vmatpush2.msra.mxu0 0.0
        %2511 = vmatprep.subr.mxu0 0.0
        %2512 = vmatpush2.msra.mxu0 0.0
        %2513 = vmatprep.subr.mxu0 0.0
        %2514 = vmatpush2.msra.mxu0 0.0
        %2515 = vmatprep.subr.mxu0 0.0
        %2516 = vmatpush2.msra.mxu0 0.0
        %2517 = vmatprep.subr.mxu0 0.0
        %2518 = vmatpush2.msra.mxu0 0.0
        %2519 = vmatprep.subr.mxu0 0.0
        %2520 = vmatpush2.msra.mxu0 0.0
        %2521 = vmatprep.subr.mxu0 0.0
        %2522 = vmatpush2.msra.mxu0 0.0
        %2523 = vmatprep.subr.mxu0 0.0
        %2524 = vmatpush2.msra.mxu0 0.0
        %2525 = vmatprep.subr.mxu0 0.0
        %2526 = vmatpush2.msra.mxu0 0.0
        %2527 = vmatprep.subr.mxu0 0.0
        %2528 = vmatpush2.msra.mxu0 0.0
        %2529 = vmatprep.subr.mxu0 0.0
        %2530 = vmatpush2.msra.mxu0 0.0
        %2531 = vmatprep.subr.mxu0 0.0
        %2532 = vmatpush2.msra.mxu0 0.0
        %2533 = vmatprep.subr.mxu0 0.0
        %2534 = vmatpush2.msra.mxu0 0.0
        %2535 = vmatprep.subr.mxu0 0.0
        %2536 = vmatpush2.msra.mxu0 0.0
        %2537 = vmatprep.subr.mxu0 0.0
        %2538 = vmatpush2.msra.mxu0 0.0
        %2539 = vmatprep.subr.mxu0 0.0
        %2540 = vmatpush2.msra.mxu0 0.0
        %2541 = vmatprep.mubr.f32.mxu0 0.0
        %2542 = vmatmul.mubr.f32.gmra.mxu0 %v2472
        %v2543 = vpop.f32.mrf.mxu0
        %v2544 = vadd.f32 %v2470, %v2543
        %v2545 = vpop.f32.mrf.mxu0
        %2546 = vdwg.mxu0
        %v2547 = vsel %vm731, %v2544, 0.0
        %2548 = vadd.xlane.f32.xlu0 %v2547
        %v2549 = vpop.xlane.xlu0 %2548
        %v2550 = vmul.f32 %v2549, 0.008333334
        %v2551 = vmul.f32 %v2544, %v2544
        %v2552 = vsel %vm731, %v2551, 0.0
        %2553 = vadd.xlane.f32.xlu0 %v2552
        %v2554 = vpop.xlane.xlu0 %2553
        %v2555 = vmul.f32 %v2554, 0.008333334
        %v2556 = vmul.f32 %v2550, %v2550
        %v2557 = vsub.f32 %v2555, %v2556
        %v2558 = vsub.f32 %v2544, %v2550
        %v2559 = vadd.f32 %v2557, 1e-05
        %v2560 = vrsqrt.pop %v2559
        %v2561 = vmul.f32 %v2558, %v2560
        %v2562 = vlaneseq
        %v2563 = vshrl.u32 %v2562, 7
        %v2564 = vsub.s32 1, %v2563
        %v2565 = vrot.slane %v2457, %v2564
        %v2566 = vmul.f32 %v2561, %v2565
        %v2567 = vlaneseq
        %v2568 = vshrl.u32 %v2567, 7
        %v2569 = vsub.s32 2, %v2568
        %v2570 = vrot.slane %v2457, %v2569
        %v2571 = vadd.f32 %v2566, %v2570
        %v2572 = vmul.f32 %v2571, 0.01
        %v2573 = vmax.f32 %v2571, %v2572
        %s2574 = scalar_lea.vmem [#allocation6], 20
        %v2575 = vld [vmem:[%s2574] sm:$0x7]
        %s2576 = scalar_lea.vmem %s4, 600
        %v2577 = vld [vmem:[%s2576] sm:$0xff]
        %v2578 = vld [vmem:[%s2576 + $0x8] sm:$0xff]
        %v2579 = vld [vmem:[%s2576 + $0x10] sm:$0xff]
        %v2580 = vld [vmem:[%s2576 + $0x18] sm:$0xff]
        %v2581 = vld [vmem:[%s2576 + $0x20] sm:$0xff]
        %v2582 = vld [vmem:[%s2576 + $0x28] sm:$0xff]
        %v2583 = vld [vmem:[%s2576 + $0x30] sm:$0xff]
        %v2584 = vld [vmem:[%s2576 + $0x38] sm:$0xff]
        %v2585 = vld [vmem:[%s2576 + $0x40] sm:$0xff]
        %v2586 = vld [vmem:[%s2576 + $0x48] sm:$0xff]
        %v2587 = vld [vmem:[%s2576 + $0x50] sm:$0xff]
        %v2588 = vld [vmem:[%s2576 + $0x58] sm:$0xff]
        %v2589 = vld [vmem:[%s2576 + $0x60] sm:$0xff]
        %v2590 = vld [vmem:[%s2576 + $0x68] sm:$0xff]
        %v2591 = vld [vmem:[%s2576 + $0x70] sm:$0xff]
        %v2592 = vlaneseq
        %v2593 = vshrl.u32 %v2592, 7
        %v2594 = vsub.s32 0, %v2593
        %v2595 = vrot.slane %v2575, %v2594
        %v2597 = vsel %vm731, %v2573, 0
        %2599 = vmatprep.subr.mxu0 0.0
        %2600 = vmatpush1.msra.mxu0 0.0
        %2601 = vmatprep.subr.mxu0 0.0
        %2602 = vmatpush1.msra.mxu0 %v2591
        %2603 = vmatprep.subr.mxu0 0.0
        %2604 = vmatpush1.msra.mxu0 %v2590
        %2605 = vmatprep.subr.mxu0 0.0
        %2606 = vmatpush1.msra.mxu0 %v2589
        %2607 = vmatprep.subr.mxu0 0.0
        %2608 = vmatpush1.msra.mxu0 %v2588
        %2609 = vmatprep.subr.mxu0 0.0
        %2610 = vmatpush1.msra.mxu0 %v2587
        %2611 = vmatprep.subr.mxu0 0.0
        %2612 = vmatpush1.msra.mxu0 %v2586
        %2613 = vmatprep.subr.mxu0 0.0
        %2614 = vmatpush1.msra.mxu0 %v2585
        %2615 = vmatprep.subr.mxu0 0.0
        %2616 = vmatpush1.msra.mxu0 %v2584
        %2617 = vmatprep.subr.mxu0 0.0
        %2618 = vmatpush1.msra.mxu0 %v2583
        %2619 = vmatprep.subr.mxu0 0.0
        %2620 = vmatpush1.msra.mxu0 %v2582
        %2621 = vmatprep.subr.mxu0 0.0
        %2622 = vmatpush1.msra.mxu0 %v2581
        %2623 = vmatprep.subr.mxu0 0.0
        %2624 = vmatpush1.msra.mxu0 %v2580
        %2625 = vmatprep.subr.mxu0 0.0
        %2626 = vmatpush1.msra.mxu0 %v2579
        %2627 = vmatprep.subr.mxu0 0.0
        %2628 = vmatpush1.msra.mxu0 %v2578
        %2629 = vmatprep.subr.mxu0 0.0
        %2630 = vmatpush1.msra.mxu0 %v2577
        %2631 = vmatprep.subr.mxu0 0.0
        %2632 = vmatpush2.msra.mxu0 0.0
        %2633 = vmatprep.subr.mxu0 0.0
        %2634 = vmatpush2.msra.mxu0 0.0
        %2635 = vmatprep.subr.mxu0 0.0
        %2636 = vmatpush2.msra.mxu0 0.0
        %2637 = vmatprep.subr.mxu0 0.0
        %2638 = vmatpush2.msra.mxu0 0.0
        %2639 = vmatprep.subr.mxu0 0.0
        %2640 = vmatpush2.msra.mxu0 0.0
        %2641 = vmatprep.subr.mxu0 0.0
        %2642 = vmatpush2.msra.mxu0 0.0
        %2643 = vmatprep.subr.mxu0 0.0
        %2644 = vmatpush2.msra.mxu0 0.0
        %2645 = vmatprep.subr.mxu0 0.0
        %2646 = vmatpush2.msra.mxu0 0.0
        %2647 = vmatprep.subr.mxu0 0.0
        %2648 = vmatpush2.msra.mxu0 0.0
        %2649 = vmatprep.subr.mxu0 0.0
        %2650 = vmatpush2.msra.mxu0 0.0
        %2651 = vmatprep.subr.mxu0 0.0
        %2652 = vmatpush2.msra.mxu0 0.0
        %2653 = vmatprep.subr.mxu0 0.0
        %2654 = vmatpush2.msra.mxu0 0.0
        %2655 = vmatprep.subr.mxu0 0.0
        %2656 = vmatpush2.msra.mxu0 0.0
        %2657 = vmatprep.subr.mxu0 0.0
        %2658 = vmatpush2.msra.mxu0 0.0
        %2659 = vmatprep.subr.mxu0 0.0
        %2660 = vmatpush2.msra.mxu0 0.0
        %2661 = vmatprep.subr.mxu0 0.0
        %2662 = vmatpush2.msra.mxu0 0.0
        %2663 = vmatprep.mubr.f32.mxu0 0.0
        %2664 = vmatmul.mubr.f32.gmra.mxu0 %v2597
        %v2665 = vpop.f32.mrf.mxu0
        %v2666 = vadd.f32 %v2595, %v2665
        %v2667 = vpop.f32.mrf.mxu0
        %2668 = vdwg.mxu0
        %v2669 = vsel %vm731, %v2666, 0.0
        %2670 = vadd.xlane.f32.xlu0 %v2669
        %v2671 = vpop.xlane.xlu0 %2670
        %v2672 = vmul.f32 %v2671, 0.008333334
        %v2673 = vmul.f32 %v2666, %v2666
        %v2674 = vsel %vm731, %v2673, 0.0
        %2675 = vadd.xlane.f32.xlu0 %v2674
        %v2676 = vpop.xlane.xlu0 %2675
        %v2677 = vmul.f32 %v2676, 0.008333334
        %v2678 = vmul.f32 %v2672, %v2672
        %v2679 = vsub.f32 %v2677, %v2678
        %v2680 = vsub.f32 %v2666, %v2672
        %v2681 = vadd.f32 %v2679, 1e-05
        %v2682 = vrsqrt.pop %v2681
        %v2683 = vmul.f32 %v2680, %v2682
        %v2684 = vlaneseq
        %v2685 = vshrl.u32 %v2684, 7
        %v2686 = vsub.s32 1, %v2685
        %v2687 = vrot.slane %v2575, %v2686
        %v2688 = vmul.f32 %v2683, %v2687
        %v2689 = vlaneseq
        %v2690 = vshrl.u32 %v2689, 7
        %v2691 = vsub.s32 2, %v2690
        %v2692 = vrot.slane %v2575, %v2691
        %v2693 = vadd.f32 %v2688, %v2692
        %v2694 = vmul.f32 %v2693, 0.01
        %v2695 = vmax.f32 %v2693, %v2694
        %s2696 = scalar_lea.vmem [#allocation8], 1200
        %v2697 = vld [vmem:[%s2696] sm:$0xff]
        %v2698 = vld [vmem:[%s2696 + $0x8] sm:$0xff]
        %v2699 = vld [vmem:[%s2696 + $0x10] sm:$0xff]
        %v2700 = vld [vmem:[%s2696 + $0x18] sm:$0xff]
        %v2701 = vld [vmem:[%s2696 + $0x20] sm:$0xff]
        %v2702 = vld [vmem:[%s2696 + $0x28] sm:$0xff]
        %v2703 = vld [vmem:[%s2696 + $0x30] sm:$0xff]
        %v2704 = vld [vmem:[%s2696 + $0x38] sm:$0xff]
        %v2705 = vld [vmem:[%s2696 + $0x40] sm:$0xff]
        %v2706 = vld [vmem:[%s2696 + $0x48] sm:$0xff]
        %v2707 = vld [vmem:[%s2696 + $0x50] sm:$0xff]
        %v2708 = vld [vmem:[%s2696 + $0x58] sm:$0xff]
        %v2709 = vld [vmem:[%s2696 + $0x60] sm:$0xff]
        %v2710 = vld [vmem:[%s2696 + $0x68] sm:$0xff]
        %v2711 = vld [vmem:[%s2696 + $0x70] sm:$0xff]
        %v2712 = vld [vmem:[%s2696 + $0x78] sm:$0xff]
        %v2713 = vld [vmem:[%s2696 + $0x80] sm:$0xff]
        %v2714 = vld [vmem:[%s2696 + $0x88] sm:$0xff]
        %v2715 = vld [vmem:[%s2696 + $0x90] sm:$0xff]
        %v2716 = vld [vmem:[%s2696 + $0x98] sm:$0xff]
        %v2717 = vld [vmem:[%s2696 + $0xa0] sm:$0xff]
        %v2718 = vld [vmem:[%s2696 + $0xa8] sm:$0xff]
        %v2719 = vld [vmem:[%s2696 + $0xb0] sm:$0xff]
        %v2720 = vld [vmem:[%s2696 + $0xb8] sm:$0xff]
        %v2721 = vld [vmem:[%s2696 + $0xc0] sm:$0xff]
        %v2722 = vld [vmem:[%s2696 + $0xc8] sm:$0xff]
        %v2723 = vld [vmem:[%s2696 + $0xd0] sm:$0xff]
        %v2724 = vld [vmem:[%s2696 + $0xd8] sm:$0xff]
        %v2725 = vld [vmem:[%s2696 + $0xe0] sm:$0xff]
        %v2726 = vld [vmem:[%s2696 + $0xe8] sm:$0xff]
        %v2728 = vsel %vm731, %v2695, 0
        %2730 = vmatprep.subr.mxu0 0.0
        %2731 = vmatpush1.msra.mxu0 0.0
        %2732 = vmatprep.subr.mxu0 %v2726
        %2733 = vmatpush1.msra.mxu0 %v2725
        %2734 = vmatprep.subr.mxu0 %v2724
        %2735 = vmatpush1.msra.mxu0 %v2723
        %2736 = vmatprep.subr.mxu0 %v2722
        %2737 = vmatpush1.msra.mxu0 %v2721
        %2738 = vmatprep.subr.mxu0 %v2720
        %2739 = vmatpush1.msra.mxu0 %v2719
        %2740 = vmatprep.subr.mxu0 %v2718
        %2741 = vmatpush1.msra.mxu0 %v2717
        %2742 = vmatprep.subr.mxu0 %v2716
        %2743 = vmatpush1.msra.mxu0 %v2715
        %2744 = vmatprep.subr.mxu0 %v2714
        %2745 = vmatpush1.msra.mxu0 %v2713
        %2746 = vmatprep.subr.mxu0 %v2712
        %2747 = vmatpush1.msra.mxu0 %v2711
        %2748 = vmatprep.subr.mxu0 %v2710
        %2749 = vmatpush1.msra.mxu0 %v2709
        %2750 = vmatprep.subr.mxu0 %v2708
        %2751 = vmatpush1.msra.mxu0 %v2707
        %2752 = vmatprep.subr.mxu0 %v2706
        %2753 = vmatpush1.msra.mxu0 %v2705
        %2754 = vmatprep.subr.mxu0 %v2704
        %2755 = vmatpush1.msra.mxu0 %v2703
        %2756 = vmatprep.subr.mxu0 %v2702
        %2757 = vmatpush1.msra.mxu0 %v2701
        %2758 = vmatprep.subr.mxu0 %v2700
        %2759 = vmatpush1.msra.mxu0 %v2699
        %2760 = vmatprep.subr.mxu0 %v2698
        %2761 = vmatpush1.msra.mxu0 %v2697
        %2762 = vmatprep.subr.mxu0 0.0
        %2763 = vmatpush2.msra.mxu0 0.0
        %2764 = vmatprep.subr.mxu0 0.0
        %2765 = vmatpush2.msra.mxu0 0.0
        %2766 = vmatprep.subr.mxu0 0.0
        %2767 = vmatpush2.msra.mxu0 0.0
        %2768 = vmatprep.subr.mxu0 0.0
        %2769 = vmatpush2.msra.mxu0 0.0
        %2770 = vmatprep.subr.mxu0 0.0
        %2771 = vmatpush2.msra.mxu0 0.0
        %2772 = vmatprep.subr.mxu0 0.0
        %2773 = vmatpush2.msra.mxu0 0.0
        %2774 = vmatprep.subr.mxu0 0.0
        %2775 = vmatpush2.msra.mxu0 0.0
        %2776 = vmatprep.subr.mxu0 0.0
        %2777 = vmatpush2.msra.mxu0 0.0
        %2778 = vmatprep.subr.mxu0 0.0
        %2779 = vmatpush2.msra.mxu0 0.0
        %2780 = vmatprep.subr.mxu0 0.0
        %2781 = vmatpush2.msra.mxu0 0.0
        %2782 = vmatprep.subr.mxu0 0.0
        %2783 = vmatpush2.msra.mxu0 0.0
        %2784 = vmatprep.subr.mxu0 0.0
        %2785 = vmatpush2.msra.mxu0 0.0
        %2786 = vmatprep.subr.mxu0 0.0
        %2787 = vmatpush2.msra.mxu0 0.0
        %2788 = vmatprep.subr.mxu0 0.0
        %2789 = vmatpush2.msra.mxu0 0.0
        %2790 = vmatprep.subr.mxu0 0.0
        %2791 = vmatpush2.msra.mxu0 0.0
        %2792 = vmatprep.subr.mxu0 0.0
        %2793 = vmatpush2.msra.mxu0 0.0
        %2794 = vmatprep.mubr.f32.mxu0 0.0
        %2795 = vmatmul.mubr.f32.gmra.mxu0 %v2728
        %v2796 = vpop.f32.mrf.mxu0
        %v2797 = vadd.f32 0.0, %v2796
        %v2798 = vpop.f32.mrf.mxu0
        %v2799 = vadd.f32 0.0, %v2798
        %2800 = vdwg.mxu0
        %v2801 = vadd.f32 %v2452, %v2797
        %v2802 = vadd.f32 %v2453, %v2799
        %s2803 = scalar_lea.vmem %s553, 48 [#allocation2]
        %v2804 = vld [vmem:[%s2803] sm:$0xff]
        %s2805 = scalar_lea.vmem [#allocation3], 24
        %v2806 = vld [vmem:[%s2805] sm:$0x7]
        %s2807 = scalar_lea.vmem %s2, 384
        %v2808 = vld [vmem:[%s2807] sm:$0xff]
        %v2809 = vld [vmem:[%s2807 + $0x8] sm:$0xff]
        %v2810 = vld [vmem:[%s2807 + $0x10] sm:$0xff]
        %v2811 = vld [vmem:[%s2807 + $0x18] sm:$0xff]
        %v2812 = vld [vmem:[%s2807 + $0x20] sm:$0xff]
        %v2813 = vld [vmem:[%s2807 + $0x28] sm:$0xff]
        %v2814 = vld [vmem:[%s2807 + $0x30] sm:$0xff]
        %v2815 = vld [vmem:[%s2807 + $0x38] sm:$0xf]
        %v2816 = vlaneseq
        %v2817 = vshrl.u32 %v2816, 7
        %v2818 = vsub.s32 0, %v2817
        %v2819 = vrot.slane %v2806, %v2818
        %v2821 = vsel %vm653, %v2804, 0
        %v2824 = vsel %vm657, %v2815, 0
        %2826 = vmatprep.subr.mxu0 0.0
        %2827 = vmatpush1.msra.mxu0 0.0
        %2828 = vmatprep.subr.mxu0 0.0
        %2829 = vmatpush1.msra.mxu0 0.0
        %2830 = vmatprep.subr.mxu0 0.0
        %2831 = vmatpush1.msra.mxu0 0.0
        %2832 = vmatprep.subr.mxu0 0.0
        %2833 = vmatpush1.msra.mxu0 0.0
        %2834 = vmatprep.subr.mxu0 0.0
        %2835 = vmatpush1.msra.mxu0 0.0
        %2836 = vmatprep.subr.mxu0 0.0
        %2837 = vmatpush1.msra.mxu0 0.0
        %2838 = vmatprep.subr.mxu0 0.0
        %2839 = vmatpush1.msra.mxu0 0.0
        %2840 = vmatprep.subr.mxu0 0.0
        %2841 = vmatpush1.msra.mxu0 0.0
        %2842 = vmatprep.subr.mxu0 0.0
        %2843 = vmatpush1.msra.mxu0 %v2824
        %2844 = vmatprep.subr.mxu0 0.0
        %2845 = vmatpush1.msra.mxu0 %v2814
        %2846 = vmatprep.subr.mxu0 0.0
        %2847 = vmatpush1.msra.mxu0 %v2813
        %2848 = vmatprep.subr.mxu0 0.0
        %2849 = vmatpush1.msra.mxu0 %v2812
        %2850 = vmatprep.subr.mxu0 0.0
        %2851 = vmatpush1.msra.mxu0 %v2811
        %2852 = vmatprep.subr.mxu0 0.0
        %2853 = vmatpush1.msra.mxu0 %v2810
        %2854 = vmatprep.subr.mxu0 0.0
        %2855 = vmatpush1.msra.mxu0 %v2809
        %2856 = vmatprep.subr.mxu0 0.0
        %2857 = vmatpush1.msra.mxu0 %v2808
        %2858 = vmatprep.subr.mxu0 0.0
        %2859 = vmatpush2.msra.mxu0 0.0
        %2860 = vmatprep.subr.mxu0 0.0
        %2861 = vmatpush2.msra.mxu0 0.0
        %2862 = vmatprep.subr.mxu0 0.0
        %2863 = vmatpush2.msra.mxu0 0.0
        %2864 = vmatprep.subr.mxu0 0.0
        %2865 = vmatpush2.msra.mxu0 0.0
        %2866 = vmatprep.subr.mxu0 0.0
        %2867 = vmatpush2.msra.mxu0 0.0
        %2868 = vmatprep.subr.mxu0 0.0
        %2869 = vmatpush2.msra.mxu0 0.0
        %2870 = vmatprep.subr.mxu0 0.0
        %2871 = vmatpush2.msra.mxu0 0.0
        %2872 = vmatprep.subr.mxu0 0.0
        %2873 = vmatpush2.msra.mxu0 0.0
        %2874 = vmatprep.subr.mxu0 0.0
        %2875 = vmatpush2.msra.mxu0 0.0
        %2876 = vmatprep.subr.mxu0 0.0
        %2877 = vmatpush2.msra.mxu0 0.0
        %2878 = vmatprep.subr.mxu0 0.0
        %2879 = vmatpush2.msra.mxu0 0.0
        %2880 = vmatprep.subr.mxu0 0.0
        %2881 = vmatpush2.msra.mxu0 0.0
        %2882 = vmatprep.subr.mxu0 0.0
        %2883 = vmatpush2.msra.mxu0 0.0
        %2884 = vmatprep.subr.mxu0 0.0
        %2885 = vmatpush2.msra.mxu0 0.0
        %2886 = vmatprep.subr.mxu0 0.0
        %2887 = vmatpush2.msra.mxu0 0.0
        %2888 = vmatprep.subr.mxu0 0.0
        %2889 = vmatpush2.msra.mxu0 0.0
        %2890 = vmatprep.mubr.f32.mxu0 0.0
        %2891 = vmatmul.mubr.f32.gmra.mxu0 %v2821
        %v2892 = vpop.f32.mrf.mxu0
        %v2893 = vadd.f32 %v2819, %v2892
        %v2894 = vpop.f32.mrf.mxu0
        %2895 = vdwg.mxu0
        %v2896 = vsel %vm731, %v2893, 0.0
        %2897 = vadd.xlane.f32.xlu0 %v2896
        %v2898 = vpop.xlane.xlu0 %2897
        %v2899 = vmul.f32 %v2898, 0.008333334
        %v2900 = vmul.f32 %v2893, %v2893
        %v2901 = vsel %vm731, %v2900, 0.0
        %2902 = vadd.xlane.f32.xlu0 %v2901
        %v2903 = vpop.xlane.xlu0 %2902
        %v2904 = vmul.f32 %v2903, 0.008333334
        %v2905 = vmul.f32 %v2899, %v2899
        %v2906 = vsub.f32 %v2904, %v2905
        %v2907 = vsub.f32 %v2893, %v2899
        %v2908 = vadd.f32 %v2906, 1e-05
        %v2909 = vrsqrt.pop %v2908
        %v2910 = vmul.f32 %v2907, %v2909
        %v2911 = vlaneseq
        %v2912 = vshrl.u32 %v2911, 7
        %v2913 = vsub.s32 1, %v2912
        %v2914 = vrot.slane %v2806, %v2913
        %v2915 = vmul.f32 %v2910, %v2914
        %v2916 = vlaneseq
        %v2917 = vshrl.u32 %v2916, 7
        %v2918 = vsub.s32 2, %v2917
        %v2919 = vrot.slane %v2806, %v2918
        %v2920 = vadd.f32 %v2915, %v2919
        %v2921 = vmul.f32 %v2920, 0.01
        %v2922 = vmax.f32 %v2920, %v2921
        %s2923 = scalar_lea.vmem [#allocation6], 24
        %v2924 = vld [vmem:[%s2923] sm:$0x7]
        %s2925 = scalar_lea.vmem %s4, 720
        %v2926 = vld [vmem:[%s2925] sm:$0xff]
        %v2927 = vld [vmem:[%s2925 + $0x8] sm:$0xff]
        %v2928 = vld [vmem:[%s2925 + $0x10] sm:$0xff]
        %v2929 = vld [vmem:[%s2925 + $0x18] sm:$0xff]
        %v2930 = vld [vmem:[%s2925 + $0x20] sm:$0xff]
        %v2931 = vld [vmem:[%s2925 + $0x28] sm:$0xff]
        %v2932 = vld [vmem:[%s2925 + $0x30] sm:$0xff]
        %v2933 = vld [vmem:[%s2925 + $0x38] sm:$0xff]
        %v2934 = vld [vmem:[%s2925 + $0x40] sm:$0xff]
        %v2935 = vld [vmem:[%s2925 + $0x48] sm:$0xff]
        %v2936 = vld [vmem:[%s2925 + $0x50] sm:$0xff]
        %v2937 = vld [vmem:[%s2925 + $0x58] sm:$0xff]
        %v2938 = vld [vmem:[%s2925 + $0x60] sm:$0xff]
        %v2939 = vld [vmem:[%s2925 + $0x68] sm:$0xff]
        %v2940 = vld [vmem:[%s2925 + $0x70] sm:$0xff]
        %v2941 = vlaneseq
        %v2942 = vshrl.u32 %v2941, 7
        %v2943 = vsub.s32 0, %v2942
        %v2944 = vrot.slane %v2924, %v2943
        %v2946 = vsel %vm731, %v2922, 0
        %2948 = vmatprep.subr.mxu0 0.0
        %2949 = vmatpush1.msra.mxu0 0.0
        %2950 = vmatprep.subr.mxu0 0.0
        %2951 = vmatpush1.msra.mxu0 %v2940
        %2952 = vmatprep.subr.mxu0 0.0
        %2953 = vmatpush1.msra.mxu0 %v2939
        %2954 = vmatprep.subr.mxu0 0.0
        %2955 = vmatpush1.msra.mxu0 %v2938
        %2956 = vmatprep.subr.mxu0 0.0
        %2957 = vmatpush1.msra.mxu0 %v2937
        %2958 = vmatprep.subr.mxu0 0.0
        %2959 = vmatpush1.msra.mxu0 %v2936
        %2960 = vmatprep.subr.mxu0 0.0
        %2961 = vmatpush1.msra.mxu0 %v2935
        %2962 = vmatprep.subr.mxu0 0.0
        %2963 = vmatpush1.msra.mxu0 %v2934
        %2964 = vmatprep.subr.mxu0 0.0
        %2965 = vmatpush1.msra.mxu0 %v2933
        %2966 = vmatprep.subr.mxu0 0.0
        %2967 = vmatpush1.msra.mxu0 %v2932
        %2968 = vmatprep.subr.mxu0 0.0
        %2969 = vmatpush1.msra.mxu0 %v2931
        %2970 = vmatprep.subr.mxu0 0.0
        %2971 = vmatpush1.msra.mxu0 %v2930
        %2972 = vmatprep.subr.mxu0 0.0
        %2973 = vmatpush1.msra.mxu0 %v2929
        %2974 = vmatprep.subr.mxu0 0.0
        %2975 = vmatpush1.msra.mxu0 %v2928
        %2976 = vmatprep.subr.mxu0 0.0
        %2977 = vmatpush1.msra.mxu0 %v2927
        %2978 = vmatprep.subr.mxu0 0.0
        %2979 = vmatpush1.msra.mxu0 %v2926
        %2980 = vmatprep.subr.mxu0 0.0
        %2981 = vmatpush2.msra.mxu0 0.0
        %2982 = vmatprep.subr.mxu0 0.0
        %2983 = vmatpush2.msra.mxu0 0.0
        %2984 = vmatprep.subr.mxu0 0.0
        %2985 = vmatpush2.msra.mxu0 0.0
        %2986 = vmatprep.subr.mxu0 0.0
        %2987 = vmatpush2.msra.mxu0 0.0
        %2988 = vmatprep.subr.mxu0 0.0
        %2989 = vmatpush2.msra.mxu0 0.0
        %2990 = vmatprep.subr.mxu0 0.0
        %2991 = vmatpush2.msra.mxu0 0.0
        %2992 = vmatprep.subr.mxu0 0.0
        %2993 = vmatpush2.msra.mxu0 0.0
        %2994 = vmatprep.subr.mxu0 0.0
        %2995 = vmatpush2.msra.mxu0 0.0
        %2996 = vmatprep.subr.mxu0 0.0
        %2997 = vmatpush2.msra.mxu0 0.0
        %2998 = vmatprep.subr.mxu0 0.0
        %2999 = vmatpush2.msra.mxu0 0.0
        %3000 = vmatprep.subr.mxu0 0.0
        %3001 = vmatpush2.msra.mxu0 0.0
        %3002 = vmatprep.subr.mxu0 0.0
        %3003 = vmatpush2.msra.mxu0 0.0
        %3004 = vmatprep.subr.mxu0 0.0
        %3005 = vmatpush2.msra.mxu0 0.0
        %3006 = vmatprep.subr.mxu0 0.0
        %3007 = vmatpush2.msra.mxu0 0.0
        %3008 = vmatprep.subr.mxu0 0.0
        %3009 = vmatpush2.msra.mxu0 0.0
        %3010 = vmatprep.subr.mxu0 0.0
        %3011 = vmatpush2.msra.mxu0 0.0
        %3012 = vmatprep.mubr.f32.mxu0 0.0
        %3013 = vmatmul.mubr.f32.gmra.mxu0 %v2946
        %v3014 = vpop.f32.mrf.mxu0
        %v3015 = vadd.f32 %v2944, %v3014
        %v3016 = vpop.f32.mrf.mxu0
        %3017 = vdwg.mxu0
        %v3018 = vsel %vm731, %v3015, 0.0
        %3019 = vadd.xlane.f32.xlu0 %v3018
        %v3020 = vpop.xlane.xlu0 %3019
        %v3021 = vmul.f32 %v3020, 0.008333334
        %v3022 = vmul.f32 %v3015, %v3015
        %v3023 = vsel %vm731, %v3022, 0.0
        %3024 = vadd.xlane.f32.xlu0 %v3023
        %v3025 = vpop.xlane.xlu0 %3024
        %v3026 = vmul.f32 %v3025, 0.008333334
        %v3027 = vmul.f32 %v3021, %v3021
        %v3028 = vsub.f32 %v3026, %v3027
        %v3029 = vsub.f32 %v3015, %v3021
        %v3030 = vadd.f32 %v3028, 1e-05
        %v3031 = vrsqrt.pop %v3030
        %v3032 = vmul.f32 %v3029, %v3031
        %v3033 = vlaneseq
        %v3034 = vshrl.u32 %v3033, 7
        %v3035 = vsub.s32 1, %v3034
        %v3036 = vrot.slane %v2924, %v3035
        %v3037 = vmul.f32 %v3032, %v3036
        %v3038 = vlaneseq
        %v3039 = vshrl.u32 %v3038, 7
        %v3040 = vsub.s32 2, %v3039
        %v3041 = vrot.slane %v2924, %v3040
        %v3042 = vadd.f32 %v3037, %v3041
        %v3043 = vmul.f32 %v3042, 0.01
        %v3044 = vmax.f32 %v3042, %v3043
        %s3045 = scalar_lea.vmem [#allocation8], 1440
        %v3046 = vld [vmem:[%s3045] sm:$0xff]
        %v3047 = vld [vmem:[%s3045 + $0x8] sm:$0xff]
        %v3048 = vld [vmem:[%s3045 + $0x10] sm:$0xff]
        %v3049 = vld [vmem:[%s3045 + $0x18] sm:$0xff]
        %v3050 = vld [vmem:[%s3045 + $0x20] sm:$0xff]
        %v3051 = vld [vmem:[%s3045 + $0x28] sm:$0xff]
        %v3052 = vld [vmem:[%s3045 + $0x30] sm:$0xff]
        %v3053 = vld [vmem:[%s3045 + $0x38] sm:$0xff]
        %v3054 = vld [vmem:[%s3045 + $0x40] sm:$0xff]
        %v3055 = vld [vmem:[%s3045 + $0x48] sm:$0xff]
        %v3056 = vld [vmem:[%s3045 + $0x50] sm:$0xff]
        %v3057 = vld [vmem:[%s3045 + $0x58] sm:$0xff]
        %v3058 = vld [vmem:[%s3045 + $0x60] sm:$0xff]
        %v3059 = vld [vmem:[%s3045 + $0x68] sm:$0xff]
        %v3060 = vld [vmem:[%s3045 + $0x70] sm:$0xff]
        %v3061 = vld [vmem:[%s3045 + $0x78] sm:$0xff]
        %v3062 = vld [vmem:[%s3045 + $0x80] sm:$0xff]
        %v3063 = vld [vmem:[%s3045 + $0x88] sm:$0xff]
        %v3064 = vld [vmem:[%s3045 + $0x90] sm:$0xff]
        %v3065 = vld [vmem:[%s3045 + $0x98] sm:$0xff]
        %v3066 = vld [vmem:[%s3045 + $0xa0] sm:$0xff]
        %v3067 = vld [vmem:[%s3045 + $0xa8] sm:$0xff]
        %v3068 = vld [vmem:[%s3045 + $0xb0] sm:$0xff]
        %v3069 = vld [vmem:[%s3045 + $0xb8] sm:$0xff]
        %v3070 = vld [vmem:[%s3045 + $0xc0] sm:$0xff]
        %v3071 = vld [vmem:[%s3045 + $0xc8] sm:$0xff]
        %v3072 = vld [vmem:[%s3045 + $0xd0] sm:$0xff]
        %v3073 = vld [vmem:[%s3045 + $0xd8] sm:$0xff]
        %v3074 = vld [vmem:[%s3045 + $0xe0] sm:$0xff]
        %v3075 = vld [vmem:[%s3045 + $0xe8] sm:$0xff]
        %v3077 = vsel %vm731, %v3044, 0
        %3079 = vmatprep.subr.mxu0 0.0
        %3080 = vmatpush1.msra.mxu0 0.0
        %3081 = vmatprep.subr.mxu0 %v3075
        %3082 = vmatpush1.msra.mxu0 %v3074
        %3083 = vmatprep.subr.mxu0 %v3073
        %3084 = vmatpush1.msra.mxu0 %v3072
        %3085 = vmatprep.subr.mxu0 %v3071
        %3086 = vmatpush1.msra.mxu0 %v3070
        %3087 = vmatprep.subr.mxu0 %v3069
        %3088 = vmatpush1.msra.mxu0 %v3068
        %3089 = vmatprep.subr.mxu0 %v3067
        %3090 = vmatpush1.msra.mxu0 %v3066
        %3091 = vmatprep.subr.mxu0 %v3065
        %3092 = vmatpush1.msra.mxu0 %v3064
        %3093 = vmatprep.subr.mxu0 %v3063
        %3094 = vmatpush1.msra.mxu0 %v3062
        %3095 = vmatprep.subr.mxu0 %v3061
        %3096 = vmatpush1.msra.mxu0 %v3060
        %3097 = vmatprep.subr.mxu0 %v3059
        %3098 = vmatpush1.msra.mxu0 %v3058
        %3099 = vmatprep.subr.mxu0 %v3057
        %3100 = vmatpush1.msra.mxu0 %v3056
        %3101 = vmatprep.subr.mxu0 %v3055
        %3102 = vmatpush1.msra.mxu0 %v3054
        %3103 = vmatprep.subr.mxu0 %v3053
        %3104 = vmatpush1.msra.mxu0 %v3052
        %3105 = vmatprep.subr.mxu0 %v3051
        %3106 = vmatpush1.msra.mxu0 %v3050
        %3107 = vmatprep.subr.mxu0 %v3049
        %3108 = vmatpush1.msra.mxu0 %v3048
        %3109 = vmatprep.subr.mxu0 %v3047
        %3110 = vmatpush1.msra.mxu0 %v3046
        %3111 = vmatprep.subr.mxu0 0.0
        %3112 = vmatpush2.msra.mxu0 0.0
        %3113 = vmatprep.subr.mxu0 0.0
        %3114 = vmatpush2.msra.mxu0 0.0
        %3115 = vmatprep.subr.mxu0 0.0
        %3116 = vmatpush2.msra.mxu0 0.0
        %3117 = vmatprep.subr.mxu0 0.0
        %3118 = vmatpush2.msra.mxu0 0.0
        %3119 = vmatprep.subr.mxu0 0.0
        %3120 = vmatpush2.msra.mxu0 0.0
        %3121 = vmatprep.subr.mxu0 0.0
        %3122 = vmatpush2.msra.mxu0 0.0
        %3123 = vmatprep.subr.mxu0 0.0
        %3124 = vmatpush2.msra.mxu0 0.0
        %3125 = vmatprep.subr.mxu0 0.0
        %3126 = vmatpush2.msra.mxu0 0.0
        %3127 = vmatprep.subr.mxu0 0.0
        %3128 = vmatpush2.msra.mxu0 0.0
        %3129 = vmatprep.subr.mxu0 0.0
        %3130 = vmatpush2.msra.mxu0 0.0
        %3131 = vmatprep.subr.mxu0 0.0
        %3132 = vmatpush2.msra.mxu0 0.0
        %3133 = vmatprep.subr.mxu0 0.0
        %3134 = vmatpush2.msra.mxu0 0.0
        %3135 = vmatprep.subr.mxu0 0.0
        %3136 = vmatpush2.msra.mxu0 0.0
        %3137 = vmatprep.subr.mxu0 0.0
        %3138 = vmatpush2.msra.mxu0 0.0
        %3139 = vmatprep.subr.mxu0 0.0
        %3140 = vmatpush2.msra.mxu0 0.0
        %3141 = vmatprep.subr.mxu0 0.0
        %3142 = vmatpush2.msra.mxu0 0.0
        %3143 = vmatprep.mubr.f32.mxu0 0.0
        %3144 = vmatmul.mubr.f32.gmra.mxu0 %v3077
        %v3145 = vpop.f32.mrf.mxu0
        %v3146 = vadd.f32 0.0, %v3145
        %v3147 = vpop.f32.mrf.mxu0
        %v3148 = vadd.f32 0.0, %v3147
        %3149 = vdwg.mxu0
        %v3150 = vadd.f32 %v2801, %v3146
        %v3151 = vadd.f32 %v2802, %v3148
        %s3152 = scalar_lea.vmem %s553, 56 [#allocation2]
        %v3153 = vld [vmem:[%s3152] sm:$0xff]
        %s3154 = scalar_lea.vmem [#allocation3], 28
        %v3155 = vld [vmem:[%s3154] sm:$0x7]
        %s3156 = scalar_lea.vmem %s2, 448
        %v3157 = vld [vmem:[%s3156] sm:$0xff]
        %v3158 = vld [vmem:[%s3156 + $0x8] sm:$0xff]
        %v3159 = vld [vmem:[%s3156 + $0x10] sm:$0xff]
        %v3160 = vld [vmem:[%s3156 + $0x18] sm:$0xff]
        %v3161 = vld [vmem:[%s3156 + $0x20] sm:$0xff]
        %v3162 = vld [vmem:[%s3156 + $0x28] sm:$0xff]
        %v3163 = vld [vmem:[%s3156 + $0x30] sm:$0xff]
        %v3164 = vld [vmem:[%s3156 + $0x38] sm:$0xf]
        %v3165 = vlaneseq
        %v3166 = vshrl.u32 %v3165, 7
        %v3167 = vsub.s32 0, %v3166
        %v3168 = vrot.slane %v3155, %v3167
        %v3170 = vsel %vm653, %v3153, 0
        %v3173 = vsel %vm657, %v3164, 0
        %3175 = vmatprep.subr.mxu0 0.0
        %3176 = vmatpush1.msra.mxu0 0.0
        %3177 = vmatprep.subr.mxu0 0.0
        %3178 = vmatpush1.msra.mxu0 0.0
        %3179 = vmatprep.subr.mxu0 0.0
        %3180 = vmatpush1.msra.mxu0 0.0
        %3181 = vmatprep.subr.mxu0 0.0
        %3182 = vmatpush1.msra.mxu0 0.0
        %3183 = vmatprep.subr.mxu0 0.0
        %3184 = vmatpush1.msra.mxu0 0.0
        %3185 = vmatprep.subr.mxu0 0.0
        %3186 = vmatpush1.msra.mxu0 0.0
        %3187 = vmatprep.subr.mxu0 0.0
        %3188 = vmatpush1.msra.mxu0 0.0
        %3189 = vmatprep.subr.mxu0 0.0
        %3190 = vmatpush1.msra.mxu0 0.0
        %3191 = vmatprep.subr.mxu0 0.0
        %3192 = vmatpush1.msra.mxu0 %v3173
        %3193 = vmatprep.subr.mxu0 0.0
        %3194 = vmatpush1.msra.mxu0 %v3163
        %3195 = vmatprep.subr.mxu0 0.0
        %3196 = vmatpush1.msra.mxu0 %v3162
        %3197 = vmatprep.subr.mxu0 0.0
        %3198 = vmatpush1.msra.mxu0 %v3161
        %3199 = vmatprep.subr.mxu0 0.0
        %3200 = vmatpush1.msra.mxu0 %v3160
        %3201 = vmatprep.subr.mxu0 0.0
        %3202 = vmatpush1.msra.mxu0 %v3159
        %3203 = vmatprep.subr.mxu0 0.0
        %3204 = vmatpush1.msra.mxu0 %v3158
        %3205 = vmatprep.subr.mxu0 0.0
        %3206 = vmatpush1.msra.mxu0 %v3157
        %3207 = vmatprep.subr.mxu0 0.0
        %3208 = vmatpush2.msra.mxu0 0.0
        %3209 = vmatprep.subr.mxu0 0.0
        %3210 = vmatpush2.msra.mxu0 0.0
        %3211 = vmatprep.subr.mxu0 0.0
        %3212 = vmatpush2.msra.mxu0 0.0
        %3213 = vmatprep.subr.mxu0 0.0
        %3214 = vmatpush2.msra.mxu0 0.0
        %3215 = vmatprep.subr.mxu0 0.0
        %3216 = vmatpush2.msra.mxu0 0.0
        %3217 = vmatprep.subr.mxu0 0.0
        %3218 = vmatpush2.msra.mxu0 0.0
        %3219 = vmatprep.subr.mxu0 0.0
        %3220 = vmatpush2.msra.mxu0 0.0
        %3221 = vmatprep.subr.mxu0 0.0
        %3222 = vmatpush2.msra.mxu0 0.0
        %3223 = vmatprep.subr.mxu0 0.0
        %3224 = vmatpush2.msra.mxu0 0.0
        %3225 = vmatprep.subr.mxu0 0.0
        %3226 = vmatpush2.msra.mxu0 0.0
        %3227 = vmatprep.subr.mxu0 0.0
        %3228 = vmatpush2.msra.mxu0 0.0
        %3229 = vmatprep.subr.mxu0 0.0
        %3230 = vmatpush2.msra.mxu0 0.0
        %3231 = vmatprep.subr.mxu0 0.0
        %3232 = vmatpush2.msra.mxu0 0.0
        %3233 = vmatprep.subr.mxu0 0.0
        %3234 = vmatpush2.msra.mxu0 0.0
        %3235 = vmatprep.subr.mxu0 0.0
        %3236 = vmatpush2.msra.mxu0 0.0
        %3237 = vmatprep.subr.mxu0 0.0
        %3238 = vmatpush2.msra.mxu0 0.0
        %3239 = vmatprep.mubr.f32.mxu0 0.0
        %3240 = vmatmul.mubr.f32.gmra.mxu0 %v3170
        %v3241 = vpop.f32.mrf.mxu0
        %v3242 = vadd.f32 %v3168, %v3241
        %v3243 = vpop.f32.mrf.mxu0
        %3244 = vdwg.mxu0
        %v3245 = vsel %vm731, %v3242, 0.0
        %3246 = vadd.xlane.f32.xlu0 %v3245
        %v3247 = vpop.xlane.xlu0 %3246
        %v3248 = vmul.f32 %v3247, 0.008333334
        %v3249 = vmul.f32 %v3242, %v3242
        %v3250 = vsel %vm731, %v3249, 0.0
        %3251 = vadd.xlane.f32.xlu0 %v3250
        %v3252 = vpop.xlane.xlu0 %3251
        %v3253 = vmul.f32 %v3252, 0.008333334
        %v3254 = vmul.f32 %v3248, %v3248
        %v3255 = vsub.f32 %v3253, %v3254
        %v3256 = vsub.f32 %v3242, %v3248
        %v3257 = vadd.f32 %v3255, 1e-05
        %v3258 = vrsqrt.pop %v3257
        %v3259 = vmul.f32 %v3256, %v3258
        %v3260 = vlaneseq
        %v3261 = vshrl.u32 %v3260, 7
        %v3262 = vsub.s32 1, %v3261
        %v3263 = vrot.slane %v3155, %v3262
        %v3264 = vmul.f32 %v3259, %v3263
        %v3265 = vlaneseq
        %v3266 = vshrl.u32 %v3265, 7
        %v3267 = vsub.s32 2, %v3266
        %v3268 = vrot.slane %v3155, %v3267
        %v3269 = vadd.f32 %v3264, %v3268
        %v3270 = vmul.f32 %v3269, 0.01
        %v3271 = vmax.f32 %v3269, %v3270
        %s3272 = scalar_lea.vmem [#allocation6], 28
        %v3273 = vld [vmem:[%s3272] sm:$0x7]
        %s3274 = scalar_lea.vmem %s4, 840
        %v3275 = vld [vmem:[%s3274] sm:$0xff]
        %v3276 = vld [vmem:[%s3274 + $0x8] sm:$0xff]
        %v3277 = vld [vmem:[%s3274 + $0x10] sm:$0xff]
        %v3278 = vld [vmem:[%s3274 + $0x18] sm:$0xff]
        %v3279 = vld [vmem:[%s3274 + $0x20] sm:$0xff]
        %v3280 = vld [vmem:[%s3274 + $0x28] sm:$0xff]
        %v3281 = vld [vmem:[%s3274 + $0x30] sm:$0xff]
        %v3282 = vld [vmem:[%s3274 + $0x38] sm:$0xff]
        %v3283 = vld [vmem:[%s3274 + $0x40] sm:$0xff]
        %v3284 = vld [vmem:[%s3274 + $0x48] sm:$0xff]
        %v3285 = vld [vmem:[%s3274 + $0x50] sm:$0xff]
        %v3286 = vld [vmem:[%s3274 + $0x58] sm:$0xff]
        %v3287 = vld [vmem:[%s3274 + $0x60] sm:$0xff]
        %v3288 = vld [vmem:[%s3274 + $0x68] sm:$0xff]
        %v3289 = vld [vmem:[%s3274 + $0x70] sm:$0xff]
        %v3290 = vlaneseq
        %v3291 = vshrl.u32 %v3290, 7
        %v3292 = vsub.s32 0, %v3291
        %v3293 = vrot.slane %v3273, %v3292
        %v3295 = vsel %vm731, %v3271, 0
        %3297 = vmatprep.subr.mxu0 0.0
        %3298 = vmatpush1.msra.mxu0 0.0
        %3299 = vmatprep.subr.mxu0 0.0
        %3300 = vmatpush1.msra.mxu0 %v3289
        %3301 = vmatprep.subr.mxu0 0.0
        %3302 = vmatpush1.msra.mxu0 %v3288
        %3303 = vmatprep.subr.mxu0 0.0
        %3304 = vmatpush1.msra.mxu0 %v3287
        %3305 = vmatprep.subr.mxu0 0.0
        %3306 = vmatpush1.msra.mxu0 %v3286
        %3307 = vmatprep.subr.mxu0 0.0
        %3308 = vmatpush1.msra.mxu0 %v3285
        %3309 = vmatprep.subr.mxu0 0.0
        %3310 = vmatpush1.msra.mxu0 %v3284
        %3311 = vmatprep.subr.mxu0 0.0
        %3312 = vmatpush1.msra.mxu0 %v3283
        %3313 = vmatprep.subr.mxu0 0.0
        %3314 = vmatpush1.msra.mxu0 %v3282
        %3315 = vmatprep.subr.mxu0 0.0
        %3316 = vmatpush1.msra.mxu0 %v3281
        %3317 = vmatprep.subr.mxu0 0.0
        %3318 = vmatpush1.msra.mxu0 %v3280
        %3319 = vmatprep.subr.mxu0 0.0
        %3320 = vmatpush1.msra.mxu0 %v3279
        %3321 = vmatprep.subr.mxu0 0.0
        %3322 = vmatpush1.msra.mxu0 %v3278
        %3323 = vmatprep.subr.mxu0 0.0
        %3324 = vmatpush1.msra.mxu0 %v3277
        %3325 = vmatprep.subr.mxu0 0.0
        %3326 = vmatpush1.msra.mxu0 %v3276
        %3327 = vmatprep.subr.mxu0 0.0
        %3328 = vmatpush1.msra.mxu0 %v3275
        %3329 = vmatprep.subr.mxu0 0.0
        %3330 = vmatpush2.msra.mxu0 0.0
        %3331 = vmatprep.subr.mxu0 0.0
        %3332 = vmatpush2.msra.mxu0 0.0
        %3333 = vmatprep.subr.mxu0 0.0
        %3334 = vmatpush2.msra.mxu0 0.0
        %3335 = vmatprep.subr.mxu0 0.0
        %3336 = vmatpush2.msra.mxu0 0.0
        %3337 = vmatprep.subr.mxu0 0.0
        %3338 = vmatpush2.msra.mxu0 0.0
        %3339 = vmatprep.subr.mxu0 0.0
        %3340 = vmatpush2.msra.mxu0 0.0
        %3341 = vmatprep.subr.mxu0 0.0
        %3342 = vmatpush2.msra.mxu0 0.0
        %3343 = vmatprep.subr.mxu0 0.0
        %3344 = vmatpush2.msra.mxu0 0.0
        %3345 = vmatprep.subr.mxu0 0.0
        %3346 = vmatpush2.msra.mxu0 0.0
        %3347 = vmatprep.subr.mxu0 0.0
        %3348 = vmatpush2.msra.mxu0 0.0
        %3349 = vmatprep.subr.mxu0 0.0
        %3350 = vmatpush2.msra.mxu0 0.0
        %3351 = vmatprep.subr.mxu0 0.0
        %3352 = vmatpush2.msra.mxu0 0.0
        %3353 = vmatprep.subr.mxu0 0.0
        %3354 = vmatpush2.msra.mxu0 0.0
        %3355 = vmatprep.subr.mxu0 0.0
        %3356 = vmatpush2.msra.mxu0 0.0
        %3357 = vmatprep.subr.mxu0 0.0
        %3358 = vmatpush2.msra.mxu0 0.0
        %3359 = vmatprep.subr.mxu0 0.0
        %3360 = vmatpush2.msra.mxu0 0.0
        %3361 = vmatprep.mubr.f32.mxu0 0.0
        %3362 = vmatmul.mubr.f32.gmra.mxu0 %v3295
        %v3363 = vpop.f32.mrf.mxu0
        %v3364 = vadd.f32 %v3293, %v3363
        %v3365 = vpop.f32.mrf.mxu0
        %3366 = vdwg.mxu0
        %v3367 = vsel %vm731, %v3364, 0.0
        %3368 = vadd.xlane.f32.xlu0 %v3367
        %v3369 = vpop.xlane.xlu0 %3368
        %v3370 = vmul.f32 %v3369, 0.008333334
        %v3371 = vmul.f32 %v3364, %v3364
        %v3372 = vsel %vm731, %v3371, 0.0
        %3373 = vadd.xlane.f32.xlu0 %v3372
        %v3374 = vpop.xlane.xlu0 %3373
        %v3375 = vmul.f32 %v3374, 0.008333334
        %v3376 = vmul.f32 %v3370, %v3370
        %v3377 = vsub.f32 %v3375, %v3376
        %v3378 = vsub.f32 %v3364, %v3370
        %v3379 = vadd.f32 %v3377, 1e-05
        %v3380 = vrsqrt.pop %v3379
        %v3381 = vmul.f32 %v3378, %v3380
        %v3382 = vlaneseq
        %v3383 = vshrl.u32 %v3382, 7
        %v3384 = vsub.s32 1, %v3383
        %v3385 = vrot.slane %v3273, %v3384
        %v3386 = vmul.f32 %v3381, %v3385
        %v3387 = vlaneseq
        %v3388 = vshrl.u32 %v3387, 7
        %v3389 = vsub.s32 2, %v3388
        %v3390 = vrot.slane %v3273, %v3389
        %v3391 = vadd.f32 %v3386, %v3390
        %v3392 = vmul.f32 %v3391, 0.01
        %v3393 = vmax.f32 %v3391, %v3392
        %s3394 = scalar_lea.vmem [#allocation8], 1680
        %v3395 = vld [vmem:[%s3394] sm:$0xff]
        %v3396 = vld [vmem:[%s3394 + $0x8] sm:$0xff]
        %v3397 = vld [vmem:[%s3394 + $0x10] sm:$0xff]
        %v3398 = vld [vmem:[%s3394 + $0x18] sm:$0xff]
        %v3399 = vld [vmem:[%s3394 + $0x20] sm:$0xff]
        %v3400 = vld [vmem:[%s3394 + $0x28] sm:$0xff]
        %v3401 = vld [vmem:[%s3394 + $0x30] sm:$0xff]
        %v3402 = vld [vmem:[%s3394 + $0x38] sm:$0xff]
        %v3403 = vld [vmem:[%s3394 + $0x40] sm:$0xff]
        %v3404 = vld [vmem:[%s3394 + $0x48] sm:$0xff]
        %v3405 = vld [vmem:[%s3394 + $0x50] sm:$0xff]
        %v3406 = vld [vmem:[%s3394 + $0x58] sm:$0xff]
        %v3407 = vld [vmem:[%s3394 + $0x60] sm:$0xff]
        %v3408 = vld [vmem:[%s3394 + $0x68] sm:$0xff]
        %v3409 = vld [vmem:[%s3394 + $0x70] sm:$0xff]
        %v3410 = vld [vmem:[%s3394 + $0x78] sm:$0xff]
        %v3411 = vld [vmem:[%s3394 + $0x80] sm:$0xff]
        %v3412 = vld [vmem:[%s3394 + $0x88] sm:$0xff]
        %v3413 = vld [vmem:[%s3394 + $0x90] sm:$0xff]
        %v3414 = vld [vmem:[%s3394 + $0x98] sm:$0xff]
        %v3415 = vld [vmem:[%s3394 + $0xa0] sm:$0xff]
        %v3416 = vld [vmem:[%s3394 + $0xa8] sm:$0xff]
        %v3417 = vld [vmem:[%s3394 + $0xb0] sm:$0xff]
        %v3418 = vld [vmem:[%s3394 + $0xb8] sm:$0xff]
        %v3419 = vld [vmem:[%s3394 + $0xc0] sm:$0xff]
        %v3420 = vld [vmem:[%s3394 + $0xc8] sm:$0xff]
        %v3421 = vld [vmem:[%s3394 + $0xd0] sm:$0xff]
        %v3422 = vld [vmem:[%s3394 + $0xd8] sm:$0xff]
        %v3423 = vld [vmem:[%s3394 + $0xe0] sm:$0xff]
        %v3424 = vld [vmem:[%s3394 + $0xe8] sm:$0xff]
        %v3426 = vsel %vm731, %v3393, 0
        %3428 = vmatprep.subr.mxu0 0.0
        %3429 = vmatpush1.msra.mxu0 0.0
        %3430 = vmatprep.subr.mxu0 %v3424
        %3431 = vmatpush1.msra.mxu0 %v3423
        %3432 = vmatprep.subr.mxu0 %v3422
        %3433 = vmatpush1.msra.mxu0 %v3421
        %3434 = vmatprep.subr.mxu0 %v3420
        %3435 = vmatpush1.msra.mxu0 %v3419
        %3436 = vmatprep.subr.mxu0 %v3418
        %3437 = vmatpush1.msra.mxu0 %v3417
        %3438 = vmatprep.subr.mxu0 %v3416
        %3439 = vmatpush1.msra.mxu0 %v3415
        %3440 = vmatprep.subr.mxu0 %v3414
        %3441 = vmatpush1.msra.mxu0 %v3413
        %3442 = vmatprep.subr.mxu0 %v3412
        %3443 = vmatpush1.msra.mxu0 %v3411
        %3444 = vmatprep.subr.mxu0 %v3410
        %3445 = vmatpush1.msra.mxu0 %v3409
        %3446 = vmatprep.subr.mxu0 %v3408
        %3447 = vmatpush1.msra.mxu0 %v3407
        %3448 = vmatprep.subr.mxu0 %v3406
        %3449 = vmatpush1.msra.mxu0 %v3405
        %3450 = vmatprep.subr.mxu0 %v3404
        %3451 = vmatpush1.msra.mxu0 %v3403
        %3452 = vmatprep.subr.mxu0 %v3402
        %3453 = vmatpush1.msra.mxu0 %v3401
        %3454 = vmatprep.subr.mxu0 %v3400
        %3455 = vmatpush1.msra.mxu0 %v3399
        %3456 = vmatprep.subr.mxu0 %v3398
        %3457 = vmatpush1.msra.mxu0 %v3397
        %3458 = vmatprep.subr.mxu0 %v3396
        %3459 = vmatpush1.msra.mxu0 %v3395
        %3460 = vmatprep.subr.mxu0 0.0
        %3461 = vmatpush2.msra.mxu0 0.0
        %3462 = vmatprep.subr.mxu0 0.0
        %3463 = vmatpush2.msra.mxu0 0.0
        %3464 = vmatprep.subr.mxu0 0.0
        %3465 = vmatpush2.msra.mxu0 0.0
        %3466 = vmatprep.subr.mxu0 0.0
        %3467 = vmatpush2.msra.mxu0 0.0
        %3468 = vmatprep.subr.mxu0 0.0
        %3469 = vmatpush2.msra.mxu0 0.0
        %3470 = vmatprep.subr.mxu0 0.0
        %3471 = vmatpush2.msra.mxu0 0.0
        %3472 = vmatprep.subr.mxu0 0.0
        %3473 = vmatpush2.msra.mxu0 0.0
        %3474 = vmatprep.subr.mxu0 0.0
        %3475 = vmatpush2.msra.mxu0 0.0
        %3476 = vmatprep.subr.mxu0 0.0
        %3477 = vmatpush2.msra.mxu0 0.0
        %3478 = vmatprep.subr.mxu0 0.0
        %3479 = vmatpush2.msra.mxu0 0.0
        %3480 = vmatprep.subr.mxu0 0.0
        %3481 = vmatpush2.msra.mxu0 0.0
        %3482 = vmatprep.subr.mxu0 0.0
        %3483 = vmatpush2.msra.mxu0 0.0
        %3484 = vmatprep.subr.mxu0 0.0
        %3485 = vmatpush2.msra.mxu0 0.0
        %3486 = vmatprep.subr.mxu0 0.0
        %3487 = vmatpush2.msra.mxu0 0.0
        %3488 = vmatprep.subr.mxu0 0.0
        %3489 = vmatpush2.msra.mxu0 0.0
        %3490 = vmatprep.subr.mxu0 0.0
        %3491 = vmatpush2.msra.mxu0 0.0
        %3492 = vmatprep.mubr.f32.mxu0 0.0
        %3493 = vmatmul.mubr.f32.gmra.mxu0 %v3426
        %v3494 = vpop.f32.mrf.mxu0
        %v3495 = vadd.f32 0.0, %v3494
        %v3496 = vpop.f32.mrf.mxu0
        %v3497 = vadd.f32 0.0, %v3496
        %3498 = vdwg.mxu0
        %v3499 = vadd.f32 %v3150, %v3495
        %v3500 = vadd.f32 %v3151, %v3497
        %s3501 = scalar_lea.vmem %s553, 64 [#allocation2]
        %v3502 = vld [vmem:[%s3501] sm:$0xff]
        %s3503 = scalar_lea.vmem [#allocation3], 32
        %v3504 = vld [vmem:[%s3503] sm:$0x7]
        %s3505 = scalar_lea.vmem %s2, 512
        %v3506 = vld [vmem:[%s3505] sm:$0xff]
        %v3507 = vld [vmem:[%s3505 + $0x8] sm:$0xff]
        %v3508 = vld [vmem:[%s3505 + $0x10] sm:$0xff]
        %v3509 = vld [vmem:[%s3505 + $0x18] sm:$0xff]
        %v3510 = vld [vmem:[%s3505 + $0x20] sm:$0xff]
        %v3511 = vld [vmem:[%s3505 + $0x28] sm:$0xff]
        %v3512 = vld [vmem:[%s3505 + $0x30] sm:$0xff]
        %v3513 = vld [vmem:[%s3505 + $0x38] sm:$0xf]
        %v3514 = vlaneseq
        %v3515 = vshrl.u32 %v3514, 7
        %v3516 = vsub.s32 0, %v3515
        %v3517 = vrot.slane %v3504, %v3516
        %v3519 = vsel %vm653, %v3502, 0
        %v3522 = vsel %vm657, %v3513, 0
        %3524 = vmatprep.subr.mxu0 0.0
        %3525 = vmatpush1.msra.mxu0 0.0
        %3526 = vmatprep.subr.mxu0 0.0
        %3527 = vmatpush1.msra.mxu0 0.0
        %3528 = vmatprep.subr.mxu0 0.0
        %3529 = vmatpush1.msra.mxu0 0.0
        %3530 = vmatprep.subr.mxu0 0.0
        %3531 = vmatpush1.msra.mxu0 0.0
        %3532 = vmatprep.subr.mxu0 0.0
        %3533 = vmatpush1.msra.mxu0 0.0
        %3534 = vmatprep.subr.mxu0 0.0
        %3535 = vmatpush1.msra.mxu0 0.0
        %3536 = vmatprep.subr.mxu0 0.0
        %3537 = vmatpush1.msra.mxu0 0.0
        %3538 = vmatprep.subr.mxu0 0.0
        %3539 = vmatpush1.msra.mxu0 0.0
        %3540 = vmatprep.subr.mxu0 0.0
        %3541 = vmatpush1.msra.mxu0 %v3522
        %3542 = vmatprep.subr.mxu0 0.0
        %3543 = vmatpush1.msra.mxu0 %v3512
        %3544 = vmatprep.subr.mxu0 0.0
        %3545 = vmatpush1.msra.mxu0 %v3511
        %3546 = vmatprep.subr.mxu0 0.0
        %3547 = vmatpush1.msra.mxu0 %v3510
        %3548 = vmatprep.subr.mxu0 0.0
        %3549 = vmatpush1.msra.mxu0 %v3509
        %3550 = vmatprep.subr.mxu0 0.0
        %3551 = vmatpush1.msra.mxu0 %v3508
        %3552 = vmatprep.subr.mxu0 0.0
        %3553 = vmatpush1.msra.mxu0 %v3507
        %3554 = vmatprep.subr.mxu0 0.0
        %3555 = vmatpush1.msra.mxu0 %v3506
        %3556 = vmatprep.subr.mxu0 0.0
        %3557 = vmatpush2.msra.mxu0 0.0
        %3558 = vmatprep.subr.mxu0 0.0
        %3559 = vmatpush2.msra.mxu0 0.0
        %3560 = vmatprep.subr.mxu0 0.0
        %3561 = vmatpush2.msra.mxu0 0.0
        %3562 = vmatprep.subr.mxu0 0.0
        %3563 = vmatpush2.msra.mxu0 0.0
        %3564 = vmatprep.subr.mxu0 0.0
        %3565 = vmatpush2.msra.mxu0 0.0
        %3566 = vmatprep.subr.mxu0 0.0
        %3567 = vmatpush2.msra.mxu0 0.0
        %3568 = vmatprep.subr.mxu0 0.0
        %3569 = vmatpush2.msra.mxu0 0.0
        %3570 = vmatprep.subr.mxu0 0.0
        %3571 = vmatpush2.msra.mxu0 0.0
        %3572 = vmatprep.subr.mxu0 0.0
        %3573 = vmatpush2.msra.mxu0 0.0
        %3574 = vmatprep.subr.mxu0 0.0
        %3575 = vmatpush2.msra.mxu0 0.0
        %3576 = vmatprep.subr.mxu0 0.0
        %3577 = vmatpush2.msra.mxu0 0.0
        %3578 = vmatprep.subr.mxu0 0.0
        %3579 = vmatpush2.msra.mxu0 0.0
        %3580 = vmatprep.subr.mxu0 0.0
        %3581 = vmatpush2.msra.mxu0 0.0
        %3582 = vmatprep.subr.mxu0 0.0
        %3583 = vmatpush2.msra.mxu0 0.0
        %3584 = vmatprep.subr.mxu0 0.0
        %3585 = vmatpush2.msra.mxu0 0.0
        %3586 = vmatprep.subr.mxu0 0.0
        %3587 = vmatpush2.msra.mxu0 0.0
        %3588 = vmatprep.mubr.f32.mxu0 0.0
        %3589 = vmatmul.mubr.f32.gmra.mxu0 %v3519
        %v3590 = vpop.f32.mrf.mxu0
        %v3591 = vadd.f32 %v3517, %v3590
        %v3592 = vpop.f32.mrf.mxu0
        %3593 = vdwg.mxu0
        %v3594 = vsel %vm731, %v3591, 0.0
        %3595 = vadd.xlane.f32.xlu0 %v3594
        %v3596 = vpop.xlane.xlu0 %3595
        %v3597 = vmul.f32 %v3596, 0.008333334
        %v3598 = vmul.f32 %v3591, %v3591
        %v3599 = vsel %vm731, %v3598, 0.0
        %3600 = vadd.xlane.f32.xlu0 %v3599
        %v3601 = vpop.xlane.xlu0 %3600
        %v3602 = vmul.f32 %v3601, 0.008333334
        %v3603 = vmul.f32 %v3597, %v3597
        %v3604 = vsub.f32 %v3602, %v3603
        %v3605 = vsub.f32 %v3591, %v3597
        %v3606 = vadd.f32 %v3604, 1e-05
        %v3607 = vrsqrt.pop %v3606
        %v3608 = vmul.f32 %v3605, %v3607
        %v3609 = vlaneseq
        %v3610 = vshrl.u32 %v3609, 7
        %v3611 = vsub.s32 1, %v3610
        %v3612 = vrot.slane %v3504, %v3611
        %v3613 = vmul.f32 %v3608, %v3612
        %v3614 = vlaneseq
        %v3615 = vshrl.u32 %v3614, 7
        %v3616 = vsub.s32 2, %v3615
        %v3617 = vrot.slane %v3504, %v3616
        %v3618 = vadd.f32 %v3613, %v3617
        %v3619 = vmul.f32 %v3618, 0.01
        %v3620 = vmax.f32 %v3618, %v3619
        %s3621 = scalar_lea.vmem [#allocation6], 32
        %v3622 = vld [vmem:[%s3621] sm:$0x7]
        %s3623 = scalar_lea.vmem %s4, 960
        %v3624 = vld [vmem:[%s3623] sm:$0xff]
        %v3625 = vld [vmem:[%s3623 + $0x8] sm:$0xff]
        %v3626 = vld [vmem:[%s3623 + $0x10] sm:$0xff]
        %v3627 = vld [vmem:[%s3623 + $0x18] sm:$0xff]
        %v3628 = vld [vmem:[%s3623 + $0x20] sm:$0xff]
        %v3629 = vld [vmem:[%s3623 + $0x28] sm:$0xff]
        %v3630 = vld [vmem:[%s3623 + $0x30] sm:$0xff]
        %v3631 = vld [vmem:[%s3623 + $0x38] sm:$0xff]
        %v3632 = vld [vmem:[%s3623 + $0x40] sm:$0xff]
        %v3633 = vld [vmem:[%s3623 + $0x48] sm:$0xff]
        %v3634 = vld [vmem:[%s3623 + $0x50] sm:$0xff]
        %v3635 = vld [vmem:[%s3623 + $0x58] sm:$0xff]
        %v3636 = vld [vmem:[%s3623 + $0x60] sm:$0xff]
        %v3637 = vld [vmem:[%s3623 + $0x68] sm:$0xff]
        %v3638 = vld [vmem:[%s3623 + $0x70] sm:$0xff]
        %v3639 = vlaneseq
        %v3640 = vshrl.u32 %v3639, 7
        %v3641 = vsub.s32 0, %v3640
        %v3642 = vrot.slane %v3622, %v3641
        %v3644 = vsel %vm731, %v3620, 0
        %3646 = vmatprep.subr.mxu0 0.0
        %3647 = vmatpush1.msra.mxu0 0.0
        %3648 = vmatprep.subr.mxu0 0.0
        %3649 = vmatpush1.msra.mxu0 %v3638
        %3650 = vmatprep.subr.mxu0 0.0
        %3651 = vmatpush1.msra.mxu0 %v3637
        %3652 = vmatprep.subr.mxu0 0.0
        %3653 = vmatpush1.msra.mxu0 %v3636
        %3654 = vmatprep.subr.mxu0 0.0
        %3655 = vmatpush1.msra.mxu0 %v3635
        %3656 = vmatprep.subr.mxu0 0.0
        %3657 = vmatpush1.msra.mxu0 %v3634
        %3658 = vmatprep.subr.mxu0 0.0
        %3659 = vmatpush1.msra.mxu0 %v3633
        %3660 = vmatprep.subr.mxu0 0.0
        %3661 = vmatpush1.msra.mxu0 %v3632
        %3662 = vmatprep.subr.mxu0 0.0
        %3663 = vmatpush1.msra.mxu0 %v3631
        %3664 = vmatprep.subr.mxu0 0.0
        %3665 = vmatpush1.msra.mxu0 %v3630
        %3666 = vmatprep.subr.mxu0 0.0
        %3667 = vmatpush1.msra.mxu0 %v3629
        %3668 = vmatprep.subr.mxu0 0.0
        %3669 = vmatpush1.msra.mxu0 %v3628
        %3670 = vmatprep.subr.mxu0 0.0
        %3671 = vmatpush1.msra.mxu0 %v3627
        %3672 = vmatprep.subr.mxu0 0.0
        %3673 = vmatpush1.msra.mxu0 %v3626
        %3674 = vmatprep.subr.mxu0 0.0
        %3675 = vmatpush1.msra.mxu0 %v3625
        %3676 = vmatprep.subr.mxu0 0.0
        %3677 = vmatpush1.msra.mxu0 %v3624
        %3678 = vmatprep.subr.mxu0 0.0
        %3679 = vmatpush2.msra.mxu0 0.0
        %3680 = vmatprep.subr.mxu0 0.0
        %3681 = vmatpush2.msra.mxu0 0.0
        %3682 = vmatprep.subr.mxu0 0.0
        %3683 = vmatpush2.msra.mxu0 0.0
        %3684 = vmatprep.subr.mxu0 0.0
        %3685 = vmatpush2.msra.mxu0 0.0
        %3686 = vmatprep.subr.mxu0 0.0
        %3687 = vmatpush2.msra.mxu0 0.0
        %3688 = vmatprep.subr.mxu0 0.0
        %3689 = vmatpush2.msra.mxu0 0.0
        %3690 = vmatprep.subr.mxu0 0.0
        %3691 = vmatpush2.msra.mxu0 0.0
        %3692 = vmatprep.subr.mxu0 0.0
        %3693 = vmatpush2.msra.mxu0 0.0
        %3694 = vmatprep.subr.mxu0 0.0
        %3695 = vmatpush2.msra.mxu0 0.0
        %3696 = vmatprep.subr.mxu0 0.0
        %3697 = vmatpush2.msra.mxu0 0.0
        %3698 = vmatprep.subr.mxu0 0.0
        %3699 = vmatpush2.msra.mxu0 0.0
        %3700 = vmatprep.subr.mxu0 0.0
        %3701 = vmatpush2.msra.mxu0 0.0
        %3702 = vmatprep.subr.mxu0 0.0
        %3703 = vmatpush2.msra.mxu0 0.0
        %3704 = vmatprep.subr.mxu0 0.0
        %3705 = vmatpush2.msra.mxu0 0.0
        %3706 = vmatprep.subr.mxu0 0.0
        %3707 = vmatpush2.msra.mxu0 0.0
        %3708 = vmatprep.subr.mxu0 0.0
        %3709 = vmatpush2.msra.mxu0 0.0
        %3710 = vmatprep.mubr.f32.mxu0 0.0
        %3711 = vmatmul.mubr.f32.gmra.mxu0 %v3644
        %v3712 = vpop.f32.mrf.mxu0
        %v3713 = vadd.f32 %v3642, %v3712
        %v3714 = vpop.f32.mrf.mxu0
        %3715 = vdwg.mxu0
        %v3716 = vsel %vm731, %v3713, 0.0
        %3717 = vadd.xlane.f32.xlu0 %v3716
        %v3718 = vpop.xlane.xlu0 %3717
        %v3719 = vmul.f32 %v3718, 0.008333334
        %v3720 = vmul.f32 %v3713, %v3713
        %v3721 = vsel %vm731, %v3720, 0.0
        %3722 = vadd.xlane.f32.xlu0 %v3721
        %v3723 = vpop.xlane.xlu0 %3722
        %v3724 = vmul.f32 %v3723, 0.008333334
        %v3725 = vmul.f32 %v3719, %v3719
        %v3726 = vsub.f32 %v3724, %v3725
        %v3727 = vsub.f32 %v3713, %v3719
        %v3728 = vadd.f32 %v3726, 1e-05
        %v3729 = vrsqrt.pop %v3728
        %v3730 = vmul.f32 %v3727, %v3729
        %v3731 = vlaneseq
        %v3732 = vshrl.u32 %v3731, 7
        %v3733 = vsub.s32 1, %v3732
        %v3734 = vrot.slane %v3622, %v3733
        %v3735 = vmul.f32 %v3730, %v3734
        %v3736 = vlaneseq
        %v3737 = vshrl.u32 %v3736, 7
        %v3738 = vsub.s32 2, %v3737
        %v3739 = vrot.slane %v3622, %v3738
        %v3740 = vadd.f32 %v3735, %v3739
        %v3741 = vmul.f32 %v3740, 0.01
        %v3742 = vmax.f32 %v3740, %v3741
        %s3743 = scalar_lea.vmem [#allocation8], 1920
        %v3744 = vld [vmem:[%s3743] sm:$0xff]
        %v3745 = vld [vmem:[%s3743 + $0x8] sm:$0xff]
        %v3746 = vld [vmem:[%s3743 + $0x10] sm:$0xff]
        %v3747 = vld [vmem:[%s3743 + $0x18] sm:$0xff]
        %v3748 = vld [vmem:[%s3743 + $0x20] sm:$0xff]
        %v3749 = vld [vmem:[%s3743 + $0x28] sm:$0xff]
        %v3750 = vld [vmem:[%s3743 + $0x30] sm:$0xff]
        %v3751 = vld [vmem:[%s3743 + $0x38] sm:$0xff]
        %v3752 = vld [vmem:[%s3743 + $0x40] sm:$0xff]
        %v3753 = vld [vmem:[%s3743 + $0x48] sm:$0xff]
        %v3754 = vld [vmem:[%s3743 + $0x50] sm:$0xff]
        %v3755 = vld [vmem:[%s3743 + $0x58] sm:$0xff]
        %v3756 = vld [vmem:[%s3743 + $0x60] sm:$0xff]
        %v3757 = vld [vmem:[%s3743 + $0x68] sm:$0xff]
        %v3758 = vld [vmem:[%s3743 + $0x70] sm:$0xff]
        %v3759 = vld [vmem:[%s3743 + $0x78] sm:$0xff]
        %v3760 = vld [vmem:[%s3743 + $0x80] sm:$0xff]
        %v3761 = vld [vmem:[%s3743 + $0x88] sm:$0xff]
        %v3762 = vld [vmem:[%s3743 + $0x90] sm:$0xff]
        %v3763 = vld [vmem:[%s3743 + $0x98] sm:$0xff]
        %v3764 = vld [vmem:[%s3743 + $0xa0] sm:$0xff]
        %v3765 = vld [vmem:[%s3743 + $0xa8] sm:$0xff]
        %v3766 = vld [vmem:[%s3743 + $0xb0] sm:$0xff]
        %v3767 = vld [vmem:[%s3743 + $0xb8] sm:$0xff]
        %v3768 = vld [vmem:[%s3743 + $0xc0] sm:$0xff]
        %v3769 = vld [vmem:[%s3743 + $0xc8] sm:$0xff]
        %v3770 = vld [vmem:[%s3743 + $0xd0] sm:$0xff]
        %v3771 = vld [vmem:[%s3743 + $0xd8] sm:$0xff]
        %v3772 = vld [vmem:[%s3743 + $0xe0] sm:$0xff]
        %v3773 = vld [vmem:[%s3743 + $0xe8] sm:$0xff]
        %v3775 = vsel %vm731, %v3742, 0
        %3777 = vmatprep.subr.mxu0 0.0
        %3778 = vmatpush1.msra.mxu0 0.0
        %3779 = vmatprep.subr.mxu0 %v3773
        %3780 = vmatpush1.msra.mxu0 %v3772
        %3781 = vmatprep.subr.mxu0 %v3771
        %3782 = vmatpush1.msra.mxu0 %v3770
        %3783 = vmatprep.subr.mxu0 %v3769
        %3784 = vmatpush1.msra.mxu0 %v3768
        %3785 = vmatprep.subr.mxu0 %v3767
        %3786 = vmatpush1.msra.mxu0 %v3766
        %3787 = vmatprep.subr.mxu0 %v3765
        %3788 = vmatpush1.msra.mxu0 %v3764
        %3789 = vmatprep.subr.mxu0 %v3763
        %3790 = vmatpush1.msra.mxu0 %v3762
        %3791 = vmatprep.subr.mxu0 %v3761
        %3792 = vmatpush1.msra.mxu0 %v3760
        %3793 = vmatprep.subr.mxu0 %v3759
        %3794 = vmatpush1.msra.mxu0 %v3758
        %3795 = vmatprep.subr.mxu0 %v3757
        %3796 = vmatpush1.msra.mxu0 %v3756
        %3797 = vmatprep.subr.mxu0 %v3755
        %3798 = vmatpush1.msra.mxu0 %v3754
        %3799 = vmatprep.subr.mxu0 %v3753
        %3800 = vmatpush1.msra.mxu0 %v3752
        %3801 = vmatprep.subr.mxu0 %v3751
        %3802 = vmatpush1.msra.mxu0 %v3750
        %3803 = vmatprep.subr.mxu0 %v3749
        %3804 = vmatpush1.msra.mxu0 %v3748
        %3805 = vmatprep.subr.mxu0 %v3747
        %3806 = vmatpush1.msra.mxu0 %v3746
        %3807 = vmatprep.subr.mxu0 %v3745
        %3808 = vmatpush1.msra.mxu0 %v3744
        %3809 = vmatprep.subr.mxu0 0.0
        %3810 = vmatpush2.msra.mxu0 0.0
        %3811 = vmatprep.subr.mxu0 0.0
        %3812 = vmatpush2.msra.mxu0 0.0
        %3813 = vmatprep.subr.mxu0 0.0
        %3814 = vmatpush2.msra.mxu0 0.0
        %3815 = vmatprep.subr.mxu0 0.0
        %3816 = vmatpush2.msra.mxu0 0.0
        %3817 = vmatprep.subr.mxu0 0.0
        %3818 = vmatpush2.msra.mxu0 0.0
        %3819 = vmatprep.subr.mxu0 0.0
        %3820 = vmatpush2.msra.mxu0 0.0
        %3821 = vmatprep.subr.mxu0 0.0
        %3822 = vmatpush2.msra.mxu0 0.0
        %3823 = vmatprep.subr.mxu0 0.0
        %3824 = vmatpush2.msra.mxu0 0.0
        %3825 = vmatprep.subr.mxu0 0.0
        %3826 = vmatpush2.msra.mxu0 0.0
        %3827 = vmatprep.subr.mxu0 0.0
        %3828 = vmatpush2.msra.mxu0 0.0
        %3829 = vmatprep.subr.mxu0 0.0
        %3830 = vmatpush2.msra.mxu0 0.0
        %3831 = vmatprep.subr.mxu0 0.0
        %3832 = vmatpush2.msra.mxu0 0.0
        %3833 = vmatprep.subr.mxu0 0.0
        %3834 = vmatpush2.msra.mxu0 0.0
        %3835 = vmatprep.subr.mxu0 0.0
        %3836 = vmatpush2.msra.mxu0 0.0
        %3837 = vmatprep.subr.mxu0 0.0
        %3838 = vmatpush2.msra.mxu0 0.0
        %3839 = vmatprep.subr.mxu0 0.0
        %3840 = vmatpush2.msra.mxu0 0.0
        %3841 = vmatprep.mubr.f32.mxu0 0.0
        %3842 = vmatmul.mubr.f32.gmra.mxu0 %v3775
        %v3843 = vpop.f32.mrf.mxu0
        %v3844 = vadd.f32 0.0, %v3843
        %v3845 = vpop.f32.mrf.mxu0
        %v3846 = vadd.f32 0.0, %v3845
        %3847 = vdwg.mxu0
        %v3848 = vadd.f32 %v3499, %v3844
        %v3849 = vadd.f32 %v3500, %v3846
        %v3850 = vld [vmem:[#allocation11] sm:$0x77]
        %v3852 = vlaneseq
        %v3853 = vshrl.u32 %v3852, 7
        %v3854 = vsub.s32 0, %v3853
        %v3855 = vrot.slane %v3850, %v3854
        %v3856 = vlaneseq
        %v3857 = vshrl.u32 %v3856, 7
        %v3858 = vsub.s32 4, %v3857
        %v3859 = vrot.slane %v3850, %v3858
        %v3862 = vlaneseq
        %v3863 = vshrl.u32 %v3862, 7
        %v3864 = vsub.s32 0, %v3863
        %v3865 = vrot.slane %v3855, %v3864
        %v3866 = vlaneseq
        %v3867 = vshrl.u32 %v3866, 7
        %v3868 = vsub.s32 0, %v3867
        %v3869 = vrot.slane %v3859, %v3868
        %v3870 = vadd.f32 %v3848, %v3865
        %v3871 = vadd.f32 %v3849, %v3869
        %v3872 = vadd.f32 %v3870, %v3871
        %3873 = vadd.xlane.f32.xlu0 %v3872
        %v3874 = vpop.xlane.xlu0 %3873
        %v3875 = vmul.f32 %v3874, 0.00390625
        %v3876 = vmul.f32 %v3870, %v3870
        %v3877 = vmul.f32 %v3871, %v3871
        %v3878 = vadd.f32 %v3876, %v3877
        %3879 = vadd.xlane.f32.xlu0 %v3878
        %v3880 = vpop.xlane.xlu0 %3879
        %v3881 = vmul.f32 %v3880, 0.00390625
        %v3882 = vmul.f32 %v3875, %v3875
        %v3883 = vsub.f32 %v3881, %v3882
        %v3884 = vsub.f32 %v3870, %v3875
        %v3885 = vsub.f32 %v3871, %v3875
        %v3886 = vadd.f32 %v3883, 1e-05
        %v3887 = vrsqrt.pop %v3886
        %v3888 = vmul.f32 %v3884, %v3887
        %v3889 = vmul.f32 %v3885, %v3887
        %v3890 = vlaneseq
        %v3891 = vshrl.u32 %v3890, 7
        %v3892 = vsub.s32 1, %v3891
        %v3893 = vrot.slane %v3850, %v3892
        %v3894 = vlaneseq
        %v3895 = vshrl.u32 %v3894, 7
        %v3896 = vsub.s32 5, %v3895
        %v3897 = vrot.slane %v3850, %v3896
        %v3900 = vlaneseq
        %v3901 = vshrl.u32 %v3900, 7
        %v3902 = vsub.s32 1, %v3901
        %v3903 = vrot.slane %v3893, %v3902
        %v3904 = vlaneseq
        %v3905 = vshrl.u32 %v3904, 7
        %v3906 = vsub.s32 1, %v3905
        %v3907 = vrot.slane %v3897, %v3906
        %v3908 = vmul.f32 %v3888, %v3903
        %v3909 = vmul.f32 %v3889, %v3907
        %v3910 = vlaneseq
        %v3911 = vshrl.u32 %v3910, 7
        %v3912 = vsub.s32 2, %v3911
        %v3913 = vrot.slane %v3850, %v3912
        %v3914 = vlaneseq
        %v3915 = vshrl.u32 %v3914, 7
        %v3916 = vsub.s32 6, %v3915
        %v3917 = vrot.slane %v3850, %v3916
        %v3920 = vlaneseq
        %v3921 = vshrl.u32 %v3920, 7
        %v3922 = vsub.s32 2, %v3921
        %v3923 = vrot.slane %v3913, %v3922
        %v3924 = vlaneseq
        %v3925 = vshrl.u32 %v3924, 7
        %v3926 = vsub.s32 2, %v3925
        %v3927 = vrot.slane %v3917, %v3926
        %v3928 = vadd.f32 %v3908, %v3923
        %v3929 = vadd.f32 %v3909, %v3927
        %v3930 = vmul.f32 %v3928, 0.01
        %v3931 = vmul.f32 %v3929, 0.01
        %v3932 = vmax.f32 %v3928, %v3930
        %v3933 = vmax.f32 %v3929, %v3931
        %v3934 = vld [vmem:[#allocation14] sm:$0x77]
        %v3935 = vld [vmem:[#allocation12] sm:$0xff]
        %v3936 = vld [vmem:[#allocation12 + $0x8] sm:$0xff]
        %v3937 = vld [vmem:[#allocation12 + $0x10] sm:$0xff]
        %v3938 = vld [vmem:[#allocation12 + $0x18] sm:$0xff]
        %v3939 = vld [vmem:[#allocation12 + $0x20] sm:$0xff]
        %v3940 = vld [vmem:[#allocation12 + $0x28] sm:$0xff]
        %v3941 = vld [vmem:[#allocation12 + $0x30] sm:$0xff]
        %v3942 = vld [vmem:[#allocation12 + $0x38] sm:$0xff]
        %v3943 = vld [vmem:[#allocation12 + $0x40] sm:$0xff]
        %v3944 = vld [vmem:[#allocation12 + $0x48] sm:$0xff]
        %v3945 = vld [vmem:[#allocation12 + $0x50] sm:$0xff]
        %v3946 = vld [vmem:[#allocation12 + $0x58] sm:$0xff]
        %v3947 = vld [vmem:[#allocation12 + $0x60] sm:$0xff]
        %v3948 = vld [vmem:[#allocation12 + $0x68] sm:$0xff]
        %v3949 = vld [vmem:[#allocation12 + $0x70] sm:$0xff]
        %v3950 = vld [vmem:[#allocation12 + $0x78] sm:$0xff]
        %v3951 = vld [vmem:[#allocation12 + $0x80] sm:$0xff]
        %v3952 = vld [vmem:[#allocation12 + $0x88] sm:$0xff]
        %v3953 = vld [vmem:[#allocation12 + $0x90] sm:$0xff]
        %v3954 = vld [vmem:[#allocation12 + $0x98] sm:$0xff]
        %v3955 = vld [vmem:[#allocation12 + $0xa0] sm:$0xff]
        %v3956 = vld [vmem:[#allocation12 + $0xa8] sm:$0xff]
        %v3957 = vld [vmem:[#allocation12 + $0xb0] sm:$0xff]
        %v3958 = vld [vmem:[#allocation12 + $0xb8] sm:$0xff]
        %v3959 = vld [vmem:[#allocation12 + $0xc0] sm:$0xff]
        %v3960 = vld [vmem:[#allocation12 + $0xc8] sm:$0xff]
        %v3961 = vld [vmem:[#allocation12 + $0xd0] sm:$0xff]
        %v3962 = vld [vmem:[#allocation12 + $0xd8] sm:$0xff]
        %v3963 = vld [vmem:[#allocation12 + $0xe0] sm:$0xff]
        %v3964 = vld [vmem:[#allocation12 + $0xe8] sm:$0xff]
        %v3965 = vld [vmem:[#allocation12 + $0xf0] sm:$0xff]
        %v3966 = vld [vmem:[#allocation12 + $0xf8] sm:$0xff]
        %v3967 = vld [vmem:[#allocation12 + $0x100] sm:$0xff]
        %v3968 = vld [vmem:[#allocation12 + $0x108] sm:$0xff]
        %v3969 = vld [vmem:[#allocation12 + $0x110] sm:$0xff]
        %v3970 = vld [vmem:[#allocation12 + $0x118] sm:$0xff]
        %v3971 = vld [vmem:[#allocation12 + $0x120] sm:$0xff]
        %v3972 = vld [vmem:[#allocation12 + $0x128] sm:$0xff]
        %v3973 = vld [vmem:[#allocation12 + $0x130] sm:$0xff]
        %v3974 = vld [vmem:[#allocation12 + $0x138] sm:$0xff]
        %v3975 = vld [vmem:[#allocation12 + $0x140] sm:$0xff]
        %v3976 = vld [vmem:[#allocation12 + $0x148] sm:$0xff]
        %v3977 = vld [vmem:[#allocation12 + $0x150] sm:$0xff]
        %v3978 = vld [vmem:[#allocation12 + $0x158] sm:$0xff]
        %v3979 = vld [vmem:[#allocation12 + $0x160] sm:$0xff]
        %v3980 = vld [vmem:[#allocation12 + $0x168] sm:$0xff]
        %v3981 = vld [vmem:[#allocation12 + $0x170] sm:$0xff]
        %v3982 = vld [vmem:[#allocation12 + $0x178] sm:$0xff]
        %v3983 = vld [vmem:[#allocation12 + $0x180] sm:$0xff]
        %v3984 = vld [vmem:[#allocation12 + $0x188] sm:$0xff]
        %v3985 = vld [vmem:[#allocation12 + $0x190] sm:$0xff]
        %v3986 = vld [vmem:[#allocation12 + $0x198] sm:$0xff]
        %v3987 = vld [vmem:[#allocation12 + $0x1a0] sm:$0xff]
        %v3988 = vld [vmem:[#allocation12 + $0x1a8] sm:$0xff]
        %v3989 = vld [vmem:[#allocation12 + $0x1b0] sm:$0xff]
        %v3990 = vld [vmem:[#allocation12 + $0x1b8] sm:$0xff]
        %v3991 = vld [vmem:[#allocation12 + $0x1c0] sm:$0xff]
        %v3992 = vld [vmem:[#allocation12 + $0x1c8] sm:$0xff]
        %v3993 = vld [vmem:[#allocation12 + $0x1d0] sm:$0xff]
        %v3994 = vld [vmem:[#allocation12 + $0x1d8] sm:$0xff]
        %v3995 = vld [vmem:[#allocation12 + $0x1e0] sm:$0xff]
        %v3996 = vld [vmem:[#allocation12 + $0x1e8] sm:$0xff]
        %v3997 = vld [vmem:[#allocation12 + $0x1f0] sm:$0xff]
        %v3998 = vld [vmem:[#allocation12 + $0x1f8] sm:$0xff]
        %v4000 = vlaneseq
        %v4001 = vshrl.u32 %v4000, 7
        %v4002 = vsub.s32 0, %v4001
        %v4003 = vrot.slane %v3934, %v4002
        %v4004 = vlaneseq
        %v4005 = vshrl.u32 %v4004, 7
        %v4006 = vsub.s32 4, %v4005
        %v4007 = vrot.slane %v3934, %v4006
        %v4010 = vlaneseq
        %v4011 = vshrl.u32 %v4010, 7
        %v4012 = vsub.s32 0, %v4011
        %v4013 = vrot.slane %v4003, %v4012
        %v4014 = vlaneseq
        %v4015 = vshrl.u32 %v4014, 7
        %v4016 = vsub.s32 0, %v4015
        %v4017 = vrot.slane %v4007, %v4016
        %4018 = vmatprep.subr.mxu0 %v3966
        %4019 = vmatpush1.msra.mxu0 %v3965
        %4020 = vmatprep.subr.mxu0 %v3964
        %4021 = vmatpush1.msra.mxu0 %v3963
        %4022 = vmatprep.subr.mxu0 %v3962
        %4023 = vmatpush1.msra.mxu0 %v3961
        %4024 = vmatprep.subr.mxu0 %v3960
        %4025 = vmatpush1.msra.mxu0 %v3959
        %4026 = vmatprep.subr.mxu0 %v3958
        %4027 = vmatpush1.msra.mxu0 %v3957
        %4028 = vmatprep.subr.mxu0 %v3956
        %4029 = vmatpush1.msra.mxu0 %v3955
        %4030 = vmatprep.subr.mxu0 %v3954
        %4031 = vmatpush1.msra.mxu0 %v3953
        %4032 = vmatprep.subr.mxu0 %v3952
        %4033 = vmatpush1.msra.mxu0 %v3951
        %4034 = vmatprep.subr.mxu0 %v3950
        %4035 = vmatpush1.msra.mxu0 %v3949
        %4036 = vmatprep.subr.mxu0 %v3948
        %4037 = vmatpush1.msra.mxu0 %v3947
        %4038 = vmatprep.subr.mxu0 %v3946
        %4039 = vmatpush1.msra.mxu0 %v3945
        %4040 = vmatprep.subr.mxu0 %v3944
        %4041 = vmatpush1.msra.mxu0 %v3943
        %4042 = vmatprep.subr.mxu0 %v3942
        %4043 = vmatpush1.msra.mxu0 %v3941
        %4044 = vmatprep.subr.mxu0 %v3940
        %4045 = vmatpush1.msra.mxu0 %v3939
        %4046 = vmatprep.subr.mxu0 %v3938
        %4047 = vmatpush1.msra.mxu0 %v3937
        %4048 = vmatprep.subr.mxu0 %v3936
        %4049 = vmatpush1.msra.mxu0 %v3935
        %4050 = vmatprep.subr.mxu0 %v3998
        %4051 = vmatpush2.msra.mxu0 %v3997
        %4052 = vmatprep.subr.mxu0 %v3996
        %4053 = vmatpush2.msra.mxu0 %v3995
        %4054 = vmatprep.subr.mxu0 %v3994
        %4055 = vmatpush2.msra.mxu0 %v3993
        %4056 = vmatprep.subr.mxu0 %v3992
        %4057 = vmatpush2.msra.mxu0 %v3991
        %4058 = vmatprep.subr.mxu0 %v3990
        %4059 = vmatpush2.msra.mxu0 %v3989
        %4060 = vmatprep.subr.mxu0 %v3988
        %4061 = vmatpush2.msra.mxu0 %v3987
        %4062 = vmatprep.subr.mxu0 %v3986
        %4063 = vmatpush2.msra.mxu0 %v3985
        %4064 = vmatprep.subr.mxu0 %v3984
        %4065 = vmatpush2.msra.mxu0 %v3983
        %4066 = vmatprep.subr.mxu0 %v3982
        %4067 = vmatpush2.msra.mxu0 %v3981
        %4068 = vmatprep.subr.mxu0 %v3980
        %4069 = vmatpush2.msra.mxu0 %v3979
        %4070 = vmatprep.subr.mxu0 %v3978
        %4071 = vmatpush2.msra.mxu0 %v3977
        %4072 = vmatprep.subr.mxu0 %v3976
        %4073 = vmatpush2.msra.mxu0 %v3975
        %4074 = vmatprep.subr.mxu0 %v3974
        %4075 = vmatpush2.msra.mxu0 %v3973
        %4076 = vmatprep.subr.mxu0 %v3972
        %4077 = vmatpush2.msra.mxu0 %v3971
        %4078 = vmatprep.subr.mxu0 %v3970
        %4079 = vmatpush2.msra.mxu0 %v3969
        %4080 = vmatprep.subr.mxu0 %v3968
        %4081 = vmatpush2.msra.mxu0 %v3967
        %4082 = vmatprep.mubr.f32.mxu0 %v3933
        %4083 = vmatmul.mubr.f32.gmra.mxu0 %v3932
        %v4084 = vpop.f32.mrf.mxu0
        %v4085 = vadd.f32 %v4013, %v4084
        %v4086 = vpop.f32.mrf.mxu0
        %v4087 = vadd.f32 %v4017, %v4086
        %4088 = vdwg.mxu0
        %v4089 = vadd.f32 %v4085, %v4087
        %4090 = vadd.xlane.f32.xlu0 %v4089
        %v4091 = vpop.xlane.xlu0 %4090
        %v4092 = vmul.f32 %v4091, 0.00390625
        %v4093 = vmul.f32 %v4085, %v4085
        %v4094 = vmul.f32 %v4087, %v4087
        %v4095 = vadd.f32 %v4093, %v4094
        %4096 = vadd.xlane.f32.xlu0 %v4095
        %v4097 = vpop.xlane.xlu0 %4096
        %v4098 = vmul.f32 %v4097, 0.00390625
        %v4099 = vmul.f32 %v4092, %v4092
        %v4100 = vsub.f32 %v4098, %v4099
        %v4101 = vsub.f32 %v4085, %v4092
        %v4102 = vsub.f32 %v4087, %v4092
        %v4103 = vadd.f32 %v4100, 1e-05
        %v4104 = vrsqrt.pop %v4103
        %v4105 = vmul.f32 %v4101, %v4104
        %v4106 = vmul.f32 %v4102, %v4104
        %v4107 = vlaneseq
        %v4108 = vshrl.u32 %v4107, 7
        %v4109 = vsub.s32 1, %v4108
        %v4110 = vrot.slane %v3934, %v4109
        %v4111 = vlaneseq
        %v4112 = vshrl.u32 %v4111, 7
        %v4113 = vsub.s32 5, %v4112
        %v4114 = vrot.slane %v3934, %v4113
        %v4117 = vlaneseq
        %v4118 = vshrl.u32 %v4117, 7
        %v4119 = vsub.s32 1, %v4118
        %v4120 = vrot.slane %v4110, %v4119
        %v4121 = vlaneseq
        %v4122 = vshrl.u32 %v4121, 7
        %v4123 = vsub.s32 1, %v4122
        %v4124 = vrot.slane %v4114, %v4123
        %v4125 = vmul.f32 %v4105, %v4120
        %v4126 = vmul.f32 %v4106, %v4124
        %v4127 = vlaneseq
        %v4128 = vshrl.u32 %v4127, 7
        %v4129 = vsub.s32 2, %v4128
        %v4130 = vrot.slane %v3934, %v4129
        %v4131 = vlaneseq
        %v4132 = vshrl.u32 %v4131, 7
        %v4133 = vsub.s32 6, %v4132
        %v4134 = vrot.slane %v3934, %v4133
        %v4137 = vlaneseq
        %v4138 = vshrl.u32 %v4137, 7
        %v4139 = vsub.s32 2, %v4138
        %v4140 = vrot.slane %v4130, %v4139
        %v4141 = vlaneseq
        %v4142 = vshrl.u32 %v4141, 7
        %v4143 = vsub.s32 2, %v4142
        %v4144 = vrot.slane %v4134, %v4143
        %v4145 = vadd.f32 %v4125, %v4140
        %v4146 = vadd.f32 %v4126, %v4144
        %v4147 = vmul.f32 %v4145, 0.01
        %v4148 = vmul.f32 %v4146, 0.01
        %v4149 = vmax.f32 %v4145, %v4147
        %v4150 = vmax.f32 %v4146, %v4148
        %v4151 = vld [vmem:[%s11] sm:$0xff]
        %v4152 = vld [vmem:[%s11 + $0x8] sm:$0xff]
        %v4153 = vld [vmem:[%s11 + $0x10] sm:$0xff]
        %v4154 = vld [vmem:[%s11 + $0x18] sm:$0xff]
        %v4155 = vld [vmem:[%s11 + $0x20] sm:$0xff]
        %v4156 = vld [vmem:[%s11 + $0x28] sm:$0xff]
        %v4157 = vld [vmem:[%s11 + $0x30] sm:$0xff]
        %v4158 = vld [vmem:[%s11 + $0x38] sm:$0xff]
        %v4159 = vld [vmem:[%s11 + $0x40] sm:$0xff]
        %v4160 = vld [vmem:[%s11 + $0x48] sm:$0xff]
        %v4161 = vld [vmem:[%s11 + $0x50] sm:$0xff]
        %v4162 = vld [vmem:[%s11 + $0x58] sm:$0xff]
        %v4163 = vld [vmem:[%s11 + $0x60] sm:$0xff]
        %v4164 = vld [vmem:[%s11 + $0x68] sm:$0xff]
        %v4165 = vld [vmem:[%s11 + $0x70] sm:$0xff]
        %v4166 = vld [vmem:[%s11 + $0x78] sm:$0xff]
        %v4167 = vld [vmem:[%s11 + $0x80] sm:$0xff]
        %v4168 = vld [vmem:[%s11 + $0x88] sm:$0xff]
        %v4169 = vld [vmem:[%s11 + $0x90] sm:$0xff]
        %v4170 = vld [vmem:[%s11 + $0x98] sm:$0xff]
        %v4171 = vld [vmem:[%s11 + $0xa0] sm:$0xff]
        %v4172 = vld [vmem:[%s11 + $0xa8] sm:$0xff]
        %v4173 = vld [vmem:[%s11 + $0xb0] sm:$0xff]
        %v4174 = vld [vmem:[%s11 + $0xb8] sm:$0xff]
        %v4175 = vld [vmem:[%s11 + $0xc0] sm:$0xff]
        %v4176 = vld [vmem:[%s11 + $0xc8] sm:$0xff]
        %v4177 = vld [vmem:[%s11 + $0xd0] sm:$0xff]
        %v4178 = vld [vmem:[%s11 + $0xd8] sm:$0xff]
        %v4179 = vld [vmem:[%s11 + $0xe0] sm:$0xff]
        %v4180 = vld [vmem:[%s11 + $0xe8] sm:$0xff]
        %v4181 = vld [vmem:[%s11 + $0xf0] sm:$0xff]
        %v4182 = vld [vmem:[%s11 + $0xf8] sm:$0xff]
        %v4183 = vld [vmem:[%s11 + $0x100] sm:$0xff]
        %v4184 = vld [vmem:[%s11 + $0x108] sm:$0xff]
        %v4185 = vld [vmem:[%s11 + $0x110] sm:$0xff]
        %v4186 = vld [vmem:[%s11 + $0x118] sm:$0xff]
        %v4187 = vld [vmem:[%s11 + $0x120] sm:$0xff]
        %v4188 = vld [vmem:[%s11 + $0x128] sm:$0xff]
        %v4189 = vld [vmem:[%s11 + $0x130] sm:$0xff]
        %v4190 = vld [vmem:[%s11 + $0x138] sm:$0xff]
        %v4191 = vld [vmem:[%s11 + $0x140] sm:$0xff]
        %v4192 = vld [vmem:[%s11 + $0x148] sm:$0xff]
        %v4193 = vld [vmem:[%s11 + $0x150] sm:$0xff]
        %v4194 = vld [vmem:[%s11 + $0x158] sm:$0xff]
        %v4195 = vld [vmem:[%s11 + $0x160] sm:$0xff]
        %v4196 = vld [vmem:[%s11 + $0x168] sm:$0xff]
        %v4197 = vld [vmem:[%s11 + $0x170] sm:$0xff]
        %v4198 = vld [vmem:[%s11 + $0x178] sm:$0xff]
        %v4199 = vld [vmem:[%s11 + $0x180] sm:$0xff]
        %v4200 = vld [vmem:[%s11 + $0x188] sm:$0xff]
        %v4201 = vld [vmem:[%s11 + $0x190] sm:$0xff]
        %v4202 = vld [vmem:[%s11 + $0x198] sm:$0xff]
        %v4203 = vld [vmem:[%s11 + $0x1a0] sm:$0xff]
        %v4204 = vld [vmem:[%s11 + $0x1a8] sm:$0xff]
        %v4205 = vld [vmem:[%s11 + $0x1b0] sm:$0xff]
        %v4206 = vld [vmem:[%s11 + $0x1b8] sm:$0xff]
        %v4207 = vld [vmem:[%s11 + $0x1c0] sm:$0xff]
        %v4208 = vld [vmem:[%s11 + $0x1c8] sm:$0xff]
        %v4209 = vld [vmem:[%s11 + $0x1d0] sm:$0xff]
        %v4210 = vld [vmem:[%s11 + $0x1d8] sm:$0xff]
        %v4211 = vld [vmem:[%s11 + $0x1e0] sm:$0xff]
        %v4212 = vld [vmem:[%s11 + $0x1e8] sm:$0xff]
        %v4213 = vld [vmem:[%s11 + $0x1f0] sm:$0xff]
        %v4214 = vld [vmem:[%s11 + $0x1f8] sm:$0xff]
        %v4215 = vld [vmem:[%s11 + $0x200] sm:$0xff]
        %v4216 = vld [vmem:[%s11 + $0x208] sm:$0xff]
        %v4217 = vld [vmem:[%s11 + $0x210] sm:$0xff]
        %v4218 = vld [vmem:[%s11 + $0x218] sm:$0xff]
        %v4219 = vld [vmem:[%s11 + $0x220] sm:$0xff]
        %v4220 = vld [vmem:[%s11 + $0x228] sm:$0xff]
        %v4221 = vld [vmem:[%s11 + $0x230] sm:$0xff]
        %v4222 = vld [vmem:[%s11 + $0x238] sm:$0xff]
        %v4223 = vld [vmem:[%s11 + $0x240] sm:$0xff]
        %v4224 = vld [vmem:[%s11 + $0x248] sm:$0xff]
        %v4225 = vld [vmem:[%s11 + $0x250] sm:$0xff]
        %v4226 = vld [vmem:[%s11 + $0x258] sm:$0xff]
        %v4227 = vld [vmem:[%s11 + $0x260] sm:$0xff]
        %v4228 = vld [vmem:[%s11 + $0x268] sm:$0xff]
        %v4229 = vld [vmem:[%s11 + $0x270] sm:$0xff]
        %v4230 = vld [vmem:[%s11 + $0x278] sm:$0xff]
        %v4231 = vld [vmem:[%s11 + $0x280] sm:$0xff]
        %v4232 = vld [vmem:[%s11 + $0x288] sm:$0xff]
        %v4233 = vld [vmem:[%s11 + $0x290] sm:$0xff]
        %v4234 = vld [vmem:[%s11 + $0x298] sm:$0xff]
        %v4235 = vld [vmem:[%s11 + $0x2a0] sm:$0xff]
        %v4236 = vld [vmem:[%s11 + $0x2a8] sm:$0xff]
        %v4237 = vld [vmem:[%s11 + $0x2b0] sm:$0xff]
        %v4238 = vld [vmem:[%s11 + $0x2b8] sm:$0xff]
        %v4239 = vld [vmem:[%s11 + $0x2c0] sm:$0xff]
        %v4240 = vld [vmem:[%s11 + $0x2c8] sm:$0xff]
        %v4241 = vld [vmem:[%s11 + $0x2d0] sm:$0xff]
        %v4242 = vld [vmem:[%s11 + $0x2d8] sm:$0xff]
        %v4243 = vld [vmem:[%s11 + $0x2e0] sm:$0xff]
        %v4244 = vld [vmem:[%s11 + $0x2e8] sm:$0xff]
        %v4245 = vld [vmem:[%s11 + $0x2f0] sm:$0xff]
        %v4246 = vld [vmem:[%s11 + $0x2f8] sm:$0xff]
        %v4247 = vld [vmem:[#allocation15] sm:$0x7]
        %v4249 = vlaneseq
        %v4250 = vshrl.u32 %v4249, 7
        %v4251 = vsub.s32 0, %v4250
        %v4252 = vrot.slane %v4247, %v4251
        %v4253 = vlaneseq
        %v4254 = vshrl.u32 %v4253, 7
        %v4255 = vsub.s32 1, %v4254
        %v4256 = vrot.slane %v4247, %v4255
        %v4257 = vlaneseq
        %v4258 = vshrl.u32 %v4257, 7
        %v4259 = vsub.s32 2, %v4258
        %v4260 = vrot.slane %v4247, %v4259
        %4264 = vmatprep.subr.mxu0 %v4197
        %4265 = vmatpush1.msra.mxu0 %v4196
        %4266 = vmatprep.subr.mxu0 %v4194
        %4267 = vmatpush1.msra.mxu0 %v4193
        %4268 = vmatprep.subr.mxu0 %v4191
        %4269 = vmatpush1.msra.mxu0 %v4190
        %4270 = vmatprep.subr.mxu0 %v4188
        %4271 = vmatpush1.msra.mxu0 %v4187
        %4272 = vmatprep.subr.mxu0 %v4185
        %4273 = vmatpush1.msra.mxu0 %v4184
        %4274 = vmatprep.subr.mxu0 %v4182
        %4275 = vmatpush1.msra.mxu0 %v4181
        %4276 = vmatprep.subr.mxu0 %v4179
        %4277 = vmatpush1.msra.mxu0 %v4178
        %4278 = vmatprep.subr.mxu0 %v4176
        %4279 = vmatpush1.msra.mxu0 %v4175
        %4280 = vmatprep.subr.mxu0 %v4173
        %4281 = vmatpush1.msra.mxu0 %v4172
        %4282 = vmatprep.subr.mxu0 %v4170
        %4283 = vmatpush1.msra.mxu0 %v4169
        %4284 = vmatprep.subr.mxu0 %v4167
        %4285 = vmatpush1.msra.mxu0 %v4166
        %4286 = vmatprep.subr.mxu0 %v4164
        %4287 = vmatpush1.msra.mxu0 %v4163
        %4288 = vmatprep.subr.mxu0 %v4161
        %4289 = vmatpush1.msra.mxu0 %v4160
        %4290 = vmatprep.subr.mxu0 %v4158
        %4291 = vmatpush1.msra.mxu0 %v4157
        %4292 = vmatprep.subr.mxu0 %v4155
        %4293 = vmatpush1.msra.mxu0 %v4154
        %4294 = vmatprep.subr.mxu0 %v4152
        %4295 = vmatpush1.msra.mxu0 %v4151
        %4296 = vmatprep.subr.mxu0 %v4245
        %4297 = vmatpush2.msra.mxu0 %v4244
        %4298 = vmatprep.subr.mxu0 %v4242
        %4299 = vmatpush2.msra.mxu0 %v4241
        %4300 = vmatprep.subr.mxu0 %v4239
        %4301 = vmatpush2.msra.mxu0 %v4238
        %4302 = vmatprep.subr.mxu0 %v4236
        %4303 = vmatpush2.msra.mxu0 %v4235
        %4304 = vmatprep.subr.mxu0 %v4233
        %4305 = vmatpush2.msra.mxu0 %v4232
        %4306 = vmatprep.subr.mxu0 %v4230
        %4307 = vmatpush2.msra.mxu0 %v4229
        %4308 = vmatprep.subr.mxu0 %v4227
        %4309 = vmatpush2.msra.mxu0 %v4226
        %4310 = vmatprep.subr.mxu0 %v4224
        %4311 = vmatpush2.msra.mxu0 %v4223
        %4312 = vmatprep.subr.mxu0 %v4221
        %4313 = vmatpush2.msra.mxu0 %v4220
        %4314 = vmatprep.subr.mxu0 %v4218
        %4315 = vmatpush2.msra.mxu0 %v4217
        %4316 = vmatprep.subr.mxu0 %v4215
        %4317 = vmatpush2.msra.mxu0 %v4214
        %4318 = vmatprep.subr.mxu0 %v4212
        %4319 = vmatpush2.msra.mxu0 %v4211
        %4320 = vmatprep.subr.mxu0 %v4209
        %4321 = vmatpush2.msra.mxu0 %v4208
        %4322 = vmatprep.subr.mxu0 %v4206
        %4323 = vmatpush2.msra.mxu0 %v4205
        %4324 = vmatprep.subr.mxu0 %v4203
        %4325 = vmatpush2.msra.mxu0 %v4202
        %4326 = vmatprep.subr.mxu0 %v4200
        %4327 = vmatpush2.msra.mxu0 %v4199
        %4328 = vmatprep.mubr.f32.mxu0 %v4150
        %4329 = vmatmul.mubr.f32.gmra.mxu0 %v4149
        %v4330 = vpop.f32.mrf.mxu0
        %v4331 = vadd.f32 %v4252, %v4330
        %v4332 = vpop.f32.mrf.mxu0
        %v4333 = vadd.f32 %v4256, %v4332
        %4334 = vdwg.mxu0
        %4335 = vmatprep.subr.mxu0 0.0
        %4336 = vmatpush1.msra.mxu0 %v4198
        %4337 = vmatprep.subr.mxu0 0.0
        %4338 = vmatpush1.msra.mxu0 %v4195
        %4339 = vmatprep.subr.mxu0 0.0
        %4340 = vmatpush1.msra.mxu0 %v4192
        %4341 = vmatprep.subr.mxu0 0.0
        %4342 = vmatpush1.msra.mxu0 %v4189
        %4343 = vmatprep.subr.mxu0 0.0
        %4344 = vmatpush1.msra.mxu0 %v4186
        %4345 = vmatprep.subr.mxu0 0.0
        %4346 = vmatpush1.msra.mxu0 %v4183
        %4347 = vmatprep.subr.mxu0 0.0
        %4348 = vmatpush1.msra.mxu0 %v4180
        %4349 = vmatprep.subr.mxu0 0.0
        %4350 = vmatpush1.msra.mxu0 %v4177
        %4351 = vmatprep.subr.mxu0 0.0
        %4352 = vmatpush1.msra.mxu0 %v4174
        %4353 = vmatprep.subr.mxu0 0.0
        %4354 = vmatpush1.msra.mxu0 %v4171
        %4355 = vmatprep.subr.mxu0 0.0
        %4356 = vmatpush1.msra.mxu0 %v4168
        %4357 = vmatprep.subr.mxu0 0.0
        %4358 = vmatpush1.msra.mxu0 %v4165
        %4359 = vmatprep.subr.mxu0 0.0
        %4360 = vmatpush1.msra.mxu0 %v4162
        %4361 = vmatprep.subr.mxu0 0.0
        %4362 = vmatpush1.msra.mxu0 %v4159
        %4363 = vmatprep.subr.mxu0 0.0
        %4364 = vmatpush1.msra.mxu0 %v4156
        %4365 = vmatprep.subr.mxu0 0.0
        %4366 = vmatpush1.msra.mxu0 %v4153
        %4367 = vmatprep.subr.mxu0 0.0
        %4368 = vmatpush2.msra.mxu0 %v4246
        %4369 = vmatprep.subr.mxu0 0.0
        %4370 = vmatpush2.msra.mxu0 %v4243
        %4371 = vmatprep.subr.mxu0 0.0
        %4372 = vmatpush2.msra.mxu0 %v4240
        %4373 = vmatprep.subr.mxu0 0.0
        %4374 = vmatpush2.msra.mxu0 %v4237
        %4375 = vmatprep.subr.mxu0 0.0
        %4376 = vmatpush2.msra.mxu0 %v4234
        %4377 = vmatprep.subr.mxu0 0.0
        %4378 = vmatpush2.msra.mxu0 %v4231
        %4379 = vmatprep.subr.mxu0 0.0
        %4380 = vmatpush2.msra.mxu0 %v4228
        %4381 = vmatprep.subr.mxu0 0.0
        %4382 = vmatpush2.msra.mxu0 %v4225
        %4383 = vmatprep.subr.mxu0 0.0
        %4384 = vmatpush2.msra.mxu0 %v4222
        %4385 = vmatprep.subr.mxu0 0.0
        %4386 = vmatpush2.msra.mxu0 %v4219
        %4387 = vmatprep.subr.mxu0 0.0
        %4388 = vmatpush2.msra.mxu0 %v4216
        %4389 = vmatprep.subr.mxu0 0.0
        %4390 = vmatpush2.msra.mxu0 %v4213
        %4391 = vmatprep.subr.mxu0 0.0
        %4392 = vmatpush2.msra.mxu0 %v4210
        %4393 = vmatprep.subr.mxu0 0.0
        %4394 = vmatpush2.msra.mxu0 %v4207
        %4395 = vmatprep.subr.mxu0 0.0
        %4396 = vmatpush2.msra.mxu0 %v4204
        %4397 = vmatprep.subr.mxu0 0.0
        %4398 = vmatpush2.msra.mxu0 %v4201
        %4399 = vmatprep.mubr.f32.mxu0 %v4150
        %4400 = vmatmul.mubr.f32.gmra.mxu0 %v4149
        %v4401 = vpop.f32.mrf.mxu0
        %v4402 = vadd.f32 %v4260, %v4401
        %v4403 = vpop.f32.mrf.mxu0
        %4404 = vdwg.mxu0
        %4405 = vst [vmem:[%s629] sm:$0xff] %v4331
        %4406 = vst [vmem:[%s629 + $0x8] sm:$0xff] %v4333
        %vm4407 = vcmask 916480
        %4408 = vst.msk [vmem:[%s629 + $0x10] sm:$0xff] %vm4407, %v4402
        %s4409 = sand.u32 %s323, 1
        %s4410 = scalar_lea.sflag [#allocation5], %s4409
        %s4411 = sand.u32 %s323, 1
        %s4412 = smul.addr %s4411, 24
        %s4413 = scalar_lea.vmem [#allocation17], %s4412
        // Predicated region
        $region143: #{leap_model_forward.1} parent=105 // pred_check
          %p4414 = pneg %p333
        $region144: #{leap_model_forward.1} parent=105 // pred_check_branch
          %4416 = sbr.rel (%p4414) target = $region146
        $region145: #{leap_model_forward.1} parent=105 // pred_region
          %s4418 = ssub.s32 384, 384
          %4419 = vsyncadd %s4410, %s4418
          %s4420 = smul.addr %s32, 3
          %s4421 = smul.addr %s4420, 128
          %s4422 = scalar_lea.hbm %s13, %s4421
          %s4424 = sshll.u32 %s4413, 4
          %s4425 = int_to_ptr.vmem [resolvable:$true] %s4424
          %4427 = dma.vmem_to_hbm [thread:$0]  %s4425, 384, %s4422, %s4410
        $region146: #{leap_model_forward.1} parent=105 // pred_fallthru
          _
      $region106: #{leap_model_forward.1} parent=5 // pred_fallthru
        _
      %p4428 = scmp.le.s32.totalorder 2, %s27
      // Predicated region
      $region147: #{leap_model_forward.1} parent=5 // pred_check
        %p4429 = pneg %p4428
      $region148: #{leap_model_forward.1} parent=5 // pred_check_branch
        %4431 = sbr.rel (%p4429) target = $region150
      $region149: #{leap_model_forward.1} parent=5 // pred_region
        %s4432 = ssub.s32 %s27, 2
        // Predicated region
        $region151: #{leap_model_forward.1} parent=149 // pred_check
          %p4433 = pneg %p339
        $region152: #{leap_model_forward.1} parent=149 // pred_check_branch
          %4435 = sbr.rel (%p4433) target = $region154
        $region153: #{leap_model_forward.1} parent=149 // pred_region
          %s4436 = sand.u32 %s324, 1
          %s4437 = scalar_lea.sflag [#allocation5], %s4436
          %s4438 = sand.u32 %s324, 1
          %s4439 = smul.addr %s4438, 24
          %s4440 = scalar_lea.vmem [#allocation17], %s4439
          %4441 = dma.done %s4437, 384
        $region154: #{leap_model_forward.1} parent=149 // pred_fallthru
          _
      $region150: #{leap_model_forward.1} parent=5 // pred_fallthru
        _
    $region6: #{leap_model_forward.1} parent=1 // loop_footer
      %s31 = sadd.s32 1, %s27
    $region7: #{leap_model_forward.1} parent=1 // loop_footer_branch
      %26 = sbr.rel target = $region3
    $region8: #{leap_model_forward.1} parent=1 // loop_exit
      _
    %4442 = vsyncpa [#allocation4], 1
    %s4443 = scalar_lea.sflag [#allocation4], 1
    %4444 = vsyncpa %s4443, 1
    %4445 = vsyncpa [#allocation7], 1
    %4446 = vsyncpa [#allocation10], 1
    %4447 = vsyncpa [#allocation13], 1
    %4448 = vsyncpa [#allocation16], 1
    %4449 = vsyncpa [#allocation5], 1
    %s4450 = scalar_lea.sflag [#allocation5], 1
    %4451 = vsyncpa %s4450, 1

</llo_original>
